<compile_context>
chip_gen: v7x
topology: tpu7x:2x2x1
jax: 0.10.0
libtpu: 0.0.40
codegen_flags: <defaults>
</compile_context>

<pallas_src>
import math
import jax
import jax.numpy as jnp
from jax import lax
from jax.experimental import pallas as pl
from jax.experimental.pallas import tpu as pltpu

_MASK_VALUE = -1e30   # finite -> no inf-inf NaNs inside the online softmax


def mqa_flash_kernel(xq_ref, xkv_ref, wq_ref, bq_ref, wk_ref, bk_ref,
                     wv_ref, bv_ref, wo_ref, bo_ref, o_ref,
                     q_sc, m_sc, l_sc, acc_sc):
    """Grid step (b, qi, ki): fused Q/K/V projections + causal online-softmax MQA +
    output projection for one (q tile, kv tile) pair of one batch row.

    Shapes (H = n_head, D = head_dim):
      xq_ref (1, tq, E)   xkv_ref (1, tk, E)
      wq_ref (H, E, D)    bq_ref (H, 1, D)    (1/sqrt(D) pre-folded)
      wk/wv  (E, D)       bk/bv  (1, D)
      wo_ref (H, D, E)    bo_ref (1, E)       o_ref (1, tq, E)
      scratch: q_sc (H,tq,D) bf16 | m_sc,l_sc (H,tq,1) f32 | acc_sc (H,tq,D) f32
    """
    H, tq, D = q_sc.shape
    tk = xkv_ref.shape[1]
    E = xq_ref.shape[2]

    qi = pl.program_id(1)
    ki = pl.program_id(2)

    # ---- once per q tile (ki == 0): head-batched Q projection + accumulator init ----
    @pl.when(ki == 0)
    def _():
        xq = xq_ref[0].astype(jnp.bfloat16)                        # (tq, E)
        xqh = jnp.broadcast_to(xq[None], (H, tq, E))               # cheap leading-dim bcast
        q = jnp.einsum("hqe,hed->hqd", xqh, wq_ref[...],
                       preferred_element_type=jnp.float32) + bq_ref[...]
        q_sc[...] = q.astype(jnp.bfloat16)                         # persists across kv axis
        m_sc[...] = jnp.full_like(m_sc, -jnp.inf)
        l_sc[...] = jnp.zeros_like(l_sc)
        acc_sc[...] = jnp.zeros_like(acc_sc)

    # ---- per kv tile; tiles strictly above the causal diagonal are skipped ----
    @pl.when(ki * tk <= qi * tq + (tq - 1))
    def _():
        xkv = xkv_ref[0].astype(jnp.bfloat16)                      # (tk, E)
        k = (jnp.dot(xkv, wk_ref[...], preferred_element_type=jnp.float32)
             + bk_ref[...]).astype(jnp.bfloat16)                   # (tk, D) shared by heads
        v = (jnp.dot(xkv, wv_ref[...], preferred_element_type=jnp.float32)
             + bv_ref[...]).astype(jnp.bfloat16)                   # (tk, D) shared by heads
        kh = jnp.broadcast_to(k[None], (H, tk, D))
        vh = jnp.broadcast_to(v[None], (H, tk, D))

        # scores for ALL heads in one batched MXU op (shared K stays resident).
        s = jnp.einsum("hqd,hkd->hqk", q_sc[...], kh,
                       preferred_element_type=jnp.float32)         # (H, tq, tk) fp32

        # causal mask: a single select on the scores (no materialized additive mask).
        rowg = qi * tq + lax.broadcasted_iota(jnp.int32, (tq, tk), 0)
        colg = ki * tk + lax.broadcasted_iota(jnp.int32, (tq, tk), 1)
        s = jnp.where(jnp.broadcast_to((rowg >= colg)[None], s.shape), s, _MASK_VALUE)

        # online softmax update, fp32 throughout.
        m_new = jnp.maximum(m_sc[...], s.max(axis=-1, keepdims=True))
        alpha = jnp.exp(m_sc[...] - m_new)
        p = jnp.exp(s - m_new)                                     # (H, tq, tk) fp32
        l_sc[...] = alpha * l_sc[...] + p.sum(axis=-1, keepdims=True)
        acc_sc[...] = alpha * acc_sc[...] + jnp.einsum(
            "hqk,hkd->hqd", p.astype(jnp.bfloat16), vh,
            preferred_element_type=jnp.float32)                    # (H, tq, D)
        m_sc[...] = m_new

    # ---- finalize: normalize AFTER PV, per-head slice of W_o, sum over heads ----
    @pl.when(ki == pl.num_programs(2) - 1)
    def _():
        # TODO(synk): if an attention_mask / padding path is added, guard fully-masked
        #             rows (l == 0) before the reciprocal.
        o = acc_sc[...] * pl.reciprocal(l_sc[...], approx=True)    # (H, tq, D) fp32
        oh = jnp.einsum("hqd,hde->hqe", o.astype(jnp.bfloat16), wo_ref[...],
                        preferred_element_type=jnp.float32)        # (H, tq, E)
        out = jnp.sum(oh, axis=0) + bo_ref[...]                    # (tq, E) fp32
        # NOTE: E=32 < 128 lanes -> stores are lane-padded; at production E present a
        #       lane-dense (>=128) output block or pack several rows per grid step.
        o_ref[0] = out.astype(o_ref.dtype)


def _const_weight_spec(arr, single_buffer):
    zeros = (0,) * arr.ndim
    if single_buffer:
        # Grid-invariant block: single-buffer it so it does not cost 2x VMEM.
        return pl.BlockSpec(arr.shape, lambda b, qi, ki: zeros,
                            pipeline_mode=pl.Buffered(1))
    return pl.BlockSpec(arr.shape, lambda b, qi, ki: zeros)


def _vmem_limit_bytes(E, H, D, tq, tk):
    """Rough per-step VMEM footprint (double-buffered tiles + weights + scratch +
    in-kernel temporaries) with margin, clamped to stay inside v7x's 64 MiB/TC."""
    f32, bf16 = 4, 2
    tiles = 2 * (2 * tq * E + tk * E) * f32                       # x_q, out, x_kv tiles
    weights = 2 * ((H * E * D + 2 * E * D + H * D * E) * bf16
                   + (H * D + 2 * D + E) * f32)
    scratch = H * tq * D * (bf16 + f32) + 2 * H * tq * f32
    temps = 4 * H * tq * tk * f32 + 2 * H * (tq + tk) * max(E, D) * bf16
    est = tiles + weights + scratch + temps
    return int(min(max(2 * est + (8 << 20), 32 << 20), 56 << 20))


def _mqa_pallas_call(x, params, n_head, head_dim, tq, tk, single_buffer_weights):
    B, S, E = x.shape
    H, D = n_head, head_dim
    nq, nk = S // tq, S // tk

    weights = (params["wq"], params["bq"], params["wk"], params["bk"],
               params["wv"], params["bv"], params["wo"], params["bo"])

    in_specs = [
        pl.BlockSpec((1, tq, E), lambda b, qi, ki: (b, qi, 0)),   # x windowed by q tile
        pl.BlockSpec((1, tk, E), lambda b, qi, ki: (b, ki, 0)),   # x windowed by kv tile
    ] + [_const_weight_spec(a, single_buffer_weights) for a in weights]

    return pl.pallas_call(
        mqa_flash_kernel,
        out_shape=jax.ShapeDtypeStruct((B, S, E), x.dtype),
        grid_spec=pltpu.PrefetchScalarGridSpec(
            num_scalar_prefetch=0,
            grid=(B, nq, nk),                                     # kv (reduction) axis innermost
            in_specs=in_specs,
            out_specs=pl.BlockSpec((1, tq, E), lambda b, qi, ki: (b, qi, 0)),
            scratch_shapes=[
                pltpu.VMEM((H, tq, D), jnp.bfloat16),             # q tile (persists over kv axis)
                pltpu.VMEM((H, tq, 1), jnp.float32),              # running max m
                pltpu.VMEM((H, tq, 1), jnp.float32),              # running denom l
                pltpu.VMEM((H, tq, D), jnp.float32),              # running PV accumulator
            ],
        ),
        compiler_params=pltpu.CompilerParams(
            dimension_semantics=("parallel", "parallel", "arbitrary"),
            vmem_limit_bytes=_vmem_limit_bytes(E, H, D, tq, tk),
        ),
    )(x, x, *weights)


def multi_query_attention(x, params, n_head, head_dim, tq=None, tk=None):
    """x: (B, S, E) fp32.  params: kernel-ready dict from prepare_params().
    Matches the PyTorch forward with attention_mask=None, layer_past=None."""
    B, S, E = x.shape
    tq = min(S, 128) if tq is None else tq
    tk = min(S, 128) if tk is None else tk
    assert S % tq == 0 and S % tk == 0, "seq_len must be divisible by the tile sizes"
    try:
        return jax.block_until_ready(
            _mqa_pallas_call(x, params, n_head, head_dim, tq, tk, True))
    except Exception:
        # Fallback if this JAX build's pipeline rejects pl.Buffered(1) single-buffering
        # of the grid-invariant weight blocks.
        return jax.block_until_ready(
            _mqa_pallas_call(x, params, n_head, head_dim, tq, tk, False))


def prepare_params(raw, n_head, head_dim):
    """Host-side one-time transform (fp32 master weights stay in `raw`):
       - fold 1/sqrt(head_dim) into wq / bq,
       - reshape per-head weights so heads are a leading batch dim (no in-kernel
         lane slicing or transposes),
       - store matmul weights bf16 (fp32 accumulation happens in-kernel), biases fp32."""
    H, D = n_head, head_dim
    E = raw["wq"].shape[0]
    Eo = raw["wo"].shape[-1]
    scale = jnp.float32(1.0 / math.sqrt(D))
    wq = (raw["wq"] * scale).reshape(E, H, D).transpose(1, 0, 2)    # (H, E, D)
    bq = (raw["bq"] * scale).reshape(H, D)[:, None, :]              # (H, 1, D)
    return dict(
        wq=wq.astype(jnp.bfloat16),
        bq=bq.astype(jnp.float32),
        wk=raw["wk"].astype(jnp.bfloat16),                          # (E, D)
        bk=raw["bk"].astype(jnp.float32),                           # (1, D)
        wv=raw["wv"].astype(jnp.bfloat16),
        bv=raw["bv"].astype(jnp.float32),
        wo=raw["wo"].reshape(H, D, Eo).astype(jnp.bfloat16),        # (H, D, E)
        bo=raw["bo"].astype(jnp.float32),                           # (1, E)
    )


def reference_mqa(x, params, n_head, head_dim):
    """Pure-JAX fp32 reference mirroring the PyTorch forward (layer_past=None)."""
    B, S, E = x.shape
    q = x @ params["wq"] + params["bq"][0]                          # (B,S,H*D)
    k = x @ params["wk"] + params["bk"][0]                          # (B,S,D)
    v = x @ params["wv"] + params["bv"][0]                          # (B,S,D)
    q = q.reshape(B, S, n_head, head_dim).transpose(0, 2, 1, 3)     # (B,H,S,D)
    q = q * (1.0 / math.sqrt(head_dim))
    scores = jnp.einsum("bhsd,btd->bhst", q, k)
    mask = jnp.tril(jnp.ones((S, S), dtype=x.dtype))[None, None]
    scores = jnp.where(mask == 0, -jnp.inf, scores)
    attn = jax.nn.softmax(scores, axis=-1)
    out = jnp.einsum("bhst,btd->bhsd", attn, v)                     # (B,H,S,D)
    out = out.transpose(0, 2, 1, 3).reshape(B, S, n_head * head_dim)
    return out @ params["wo"] + params["bo"][0]


if __name__ == "__main__":
    # Module-consistent small shapes: batch=2, seq=8, n_embd=32, n_head=4.
    B, S, E = 2, 8, 32
    n_head = 4
    head_dim = E // n_head          # 8
    HD = n_head * head_dim

    key = jax.random.PRNGKey(0)
    ks = jax.random.split(key, 10)

    def init_linear(kw, kb, fan_in, fan_out):
        bound = 1.0 / math.sqrt(fan_in)
        w = jax.random.uniform(kw, (fan_in, fan_out), jnp.float32, -bound, bound)
        b = jax.random.uniform(kb, (1, fan_out), jnp.float32, -bound, bound)
        return w, b

    wq, bq = init_linear(ks[0], ks[1], E, HD)
    wk, bk = init_linear(ks[2], ks[3], E, head_dim)
    wv, bv = init_linear(ks[4], ks[5], E, head_dim)
    wo, bo = init_linear(ks[6], ks[7], HD, E)
    raw_params = dict(wq=wq, bq=bq, wk=wk, bk=bk, wv=wv, bv=bv, wo=wo, bo=bo)
    kernel_params = prepare_params(raw_params, n_head, head_dim)

    # 1) single-tile case at the module's toy shape.
    x = jax.random.normal(ks[8], (B, S, E), jnp.float32)
    out = multi_query_attention(x, kernel_params, n_head, head_dim)
    out = jax.block_until_ready(out)
    ref = reference_mqa(x, raw_params, n_head, head_dim)
    assert out.shape == (B, S, E)
    assert jnp.allclose(out, ref, atol=5e-2, rtol=5e-2), "mismatch vs fp32 reference (single tile)"

    # 2) longer sequence with forced 8x8 tiles: exercises the multi-step online softmax
    #    and the causal kv-tile skipping of the flash-tiled path.
    S2 = 32
    x2 = jax.random.normal(ks[9], (B, S2, E), jnp.float32)
    out2 = multi_query_attention(x2, kernel_params, n_head, head_dim, tq=8, tk=8)
    out2 = jax.block_until_ready(out2)
    ref2 = reference_mqa(x2, raw_params, n_head, head_dim)
    assert out2.shape == (B, S2, E)
    assert jnp.allclose(out2, ref2, atol=5e-2, rtol=5e-2), "mismatch vs fp32 reference (tiled)"

    print("KERNEL_OK")
</pallas_src>

<mosaic_0001>
module attributes {stable_mosaic.version = 11 : i64} {
  func.func @mqa_flash_kernel(%arg0: i32, %arg1: i32, %arg2: i32, %arg3: memref<1x8x32xf32, #tpu.memory_space<vmem>>, %arg4: memref<1x8x32xf32, #tpu.memory_space<vmem>>, %arg5: memref<4x32x8xbf16, #tpu.memory_space<vmem>>, %arg6: memref<4x1x8xf32, #tpu.memory_space<vmem>>, %arg7: memref<32x8xbf16, #tpu.memory_space<vmem>>, %arg8: memref<1x8xf32, #tpu.memory_space<vmem>>, %arg9: memref<32x8xbf16, #tpu.memory_space<vmem>>, %arg10: memref<1x8xf32, #tpu.memory_space<vmem>>, %arg11: memref<4x8x32xbf16, #tpu.memory_space<vmem>>, %arg12: memref<1x32xf32, #tpu.memory_space<vmem>>, %arg13: memref<1x8x32xf32, #tpu.memory_space<vmem>>, %arg14: memref<4x8x8xbf16, #tpu.memory_space<vmem>>, %arg15: memref<4x8x1xf32, #tpu.memory_space<vmem>>, %arg16: memref<4x8x1xf32, #tpu.memory_space<vmem>>, %arg17: memref<4x8x8xf32, #tpu.memory_space<vmem>>) attributes {dimension_semantics = [#tpu.dimension_semantics<parallel>, #tpu.dimension_semantics<parallel>, #tpu.dimension_semantics<arbitrary>], iteration_bounds = array<i64: 2, 1, 1>, scalar_prefetch = 0 : i64, scratch_operands = 4 : i64, tpu.core_type = #tpu.core_type<tc>, window_params = [{transform_indices = @transform_0, window_bounds = array<i64: 1, 8, 32>}, {transform_indices = @transform_1, window_bounds = array<i64: 1, 8, 32>}, {pipeline_mode = #tpu.pipeline_mode<synchronous>, transform_indices = @transform_2, window_bounds = array<i64: 4, 32, 8>}, {pipeline_mode = #tpu.pipeline_mode<synchronous>, transform_indices = @transform_3, window_bounds = array<i64: 4, 1, 8>}, {pipeline_mode = #tpu.pipeline_mode<synchronous>, transform_indices = @transform_4, window_bounds = array<i64: 32, 8>}, {pipeline_mode = #tpu.pipeline_mode<synchronous>, transform_indices = @transform_5, window_bounds = array<i64: 1, 8>}, {pipeline_mode = #tpu.pipeline_mode<synchronous>, transform_indices = @transform_6, window_bounds = array<i64: 32, 8>}, {pipeline_mode = #tpu.pipeline_mode<synchronous>, transform_indices = @transform_7, window_bounds = array<i64: 1, 8>}, {pipeline_mode = #tpu.pipeline_mode<synchronous>, transform_indices = @transform_8, window_bounds = array<i64: 4, 8, 32>}, {pipeline_mode = #tpu.pipeline_mode<synchronous>, transform_indices = @transform_9, window_bounds = array<i64: 1, 32>}, {transform_indices = @transform_10, window_bounds = array<i64: 1, 8, 32>}]} {
    %c0_i32 = arith.constant 0 : i32
    %0 = arith.cmpi eq, %arg2, %c0_i32 : i32
    %1 = arith.extui %0 : i1 to i32
    %c0_i32_0 = arith.constant 0 : i32
    %2 = arith.cmpi ne, %1, %c0_i32_0 : i32
    scf.if %2 {
      %c0 = arith.constant 0 : index
      %c0_5 = arith.constant 0 : index
      %c0_6 = arith.constant 0 : index
      %12 = vector.load %arg3[%c0, %c0_5, %c0_6] : memref<1x8x32xf32, #tpu.memory_space<vmem>>, vector<1x8x32xf32>
      %13 = vector.shape_cast %12 : vector<1x8x32xf32> to vector<8x32xf32>
      %14 = arith.truncf %13 : vector<8x32xf32> to vector<8x32xbf16>
      %15 = vector.shape_cast %14 : vector<8x32xbf16> to vector<1x8x32xbf16>
      %16 = vector.shape_cast %15 : vector<1x8x32xbf16> to vector<1x8x32xbf16>
      %17 = vector.broadcast %16 : vector<1x8x32xbf16> to vector<4x8x32xbf16>
      %c0_7 = arith.constant 0 : index
      %c0_8 = arith.constant 0 : index
      %c0_9 = arith.constant 0 : index
      %18 = vector.load %arg5[%c0_7, %c0_8, %c0_9] : memref<4x32x8xbf16, #tpu.memory_space<vmem>>, vector<4x32x8xbf16>
      "tpu.trace_start"() <{level = 10 : i32, message = "hqe,hed->hqd"}> : () -> ()
      %cst = arith.constant dense<0.000000e+00> : vector<4x8x8xf32>
      %19 = tpu.matmul %17, %18, %cst {dimension_numbers = #tpu.dot_dimension_numbers<[2], [1], [1], [2], [0, 0, 0, 1, 1, 2], [0], [0]>} : vector<4x8x32xbf16>, vector<4x32x8xbf16>, vector<4x8x8xf32> -> vector<4x8x8xf32>
      "tpu.trace_stop"() : () -> ()
      %c0_10 = arith.constant 0 : index
      %c0_11 = arith.constant 0 : index
      %c0_12 = arith.constant 0 : index
      %20 = vector.load %arg6[%c0_10, %c0_11, %c0_12] : memref<4x1x8xf32, #tpu.memory_space<vmem>>, vector<4x1x8xf32>
      %21 = vector.broadcast %20 : vector<4x1x8xf32> to vector<4x8x8xf32>
      %22 = arith.addf %19, %21 : vector<4x8x8xf32>
      %23 = arith.truncf %22 : vector<4x8x8xf32> to vector<4x8x8xbf16>
      %c0_13 = arith.constant 0 : index
      %c0_14 = arith.constant 0 : index
      %c0_15 = arith.constant 0 : index
      %24 = vector.load %arg14[%c0_13, %c0_14, %c0_15] : memref<4x8x8xbf16, #tpu.memory_space<vmem>>, vector<4x8x8xbf16>
      tpu.vector_store %arg14[%c0_13, %c0_14, %c0_15], %23 {strides = array<i32>} : memref<4x8x8xbf16, #tpu.memory_space<vmem>>, vector<4x8x8xbf16>,
      %cst_16 = arith.constant 0xFF800000 : f32
      %25 = vector.broadcast %cst_16 : f32 to vector<4x8x1xf32>
      %c0_17 = arith.constant 0 : index
      %c0_18 = arith.constant 0 : index
      %c0_19 = arith.constant 0 : index
      %26 = vector.load %arg15[%c0_17, %c0_18, %c0_19] : memref<4x8x1xf32, #tpu.memory_space<vmem>>, vector<4x8x1xf32>
      tpu.vector_store %arg15[%c0_17, %c0_18, %c0_19], %25 {strides = array<i32>} : memref<4x8x1xf32, #tpu.memory_space<vmem>>, vector<4x8x1xf32>,
      %cst_20 = arith.constant 0.000000e+00 : f32
      %27 = vector.broadcast %cst_20 : f32 to vector<4x8x1xf32>
      %c0_21 = arith.constant 0 : index
      %c0_22 = arith.constant 0 : index
      %c0_23 = arith.constant 0 : index
      %28 = vector.load %arg16[%c0_21, %c0_22, %c0_23] : memref<4x8x1xf32, #tpu.memory_space<vmem>>, vector<4x8x1xf32>
      tpu.vector_store %arg16[%c0_21, %c0_22, %c0_23], %27 {strides = array<i32>} : memref<4x8x1xf32, #tpu.memory_space<vmem>>, vector<4x8x1xf32>,
      %cst_24 = arith.constant 0.000000e+00 : f32
      %29 = vector.broadcast %cst_24 : f32 to vector<4x8x8xf32>
      %c0_25 = arith.constant 0 : index
      %c0_26 = arith.constant 0 : index
      %c0_27 = arith.constant 0 : index
      %30 = vector.load %arg17[%c0_25, %c0_26, %c0_27] : memref<4x8x8xf32, #tpu.memory_space<vmem>>, vector<4x8x8xf32>
      tpu.vector_store %arg17[%c0_25, %c0_26, %c0_27], %29 {strides = array<i32>} : memref<4x8x8xf32, #tpu.memory_space<vmem>>, vector<4x8x8xf32>,
    } else {
    }
    %c8_i32 = arith.constant 8 : i32
    %3 = arith.muli %arg2, %c8_i32 : i32
    %c8_i32_1 = arith.constant 8 : i32
    %4 = arith.muli %arg1, %c8_i32_1 : i32
    %c7_i32 = arith.constant 7 : i32
    %5 = arith.addi %4, %c7_i32 : i32
    %6 = arith.cmpi sle, %3, %5 : i32
    %7 = arith.extui %6 : i1 to i32
    %c0_i32_2 = arith.constant 0 : i32
    %8 = arith.cmpi ne, %7, %c0_i32_2 : i32
    scf.if %8 {
      %c0 = arith.constant 0 : index
      %c0_5 = arith.constant 0 : index
      %c0_6 = arith.constant 0 : index
      %12 = vector.load %arg4[%c0, %c0_5, %c0_6] : memref<1x8x32xf32, #tpu.memory_space<vmem>>, vector<1x8x32xf32>
      %13 = vector.shape_cast %12 : vector<1x8x32xf32> to vector<8x32xf32>
      %14 = arith.truncf %13 : vector<8x32xf32> to vector<8x32xbf16>
      %c0_7 = arith.constant 0 : index
      %c0_8 = arith.constant 0 : index
      %15 = vector.load %arg7[%c0_7, %c0_8] : memref<32x8xbf16, #tpu.memory_space<vmem>>, vector<32x8xbf16>
      %cst = arith.constant dense<0.000000e+00> : vector<8x8xf32>
      %16 = tpu.matmul %14, %15, %cst {dimension_numbers = #tpu.dot_dimension_numbers<[1], [0], [0], [1], [0, 0, 1, 1], [], []>} : vector<8x32xbf16>, vector<32x8xbf16>, vector<8x8xf32> -> vector<8x8xf32>
      %c0_9 = arith.constant 0 : index
      %c0_10 = arith.constant 0 : index
      %17 = vector.load %arg8[%c0_9, %c0_10] : memref<1x8xf32, #tpu.memory_space<vmem>>, vector<1x8xf32>
      %18 = vector.broadcast %17 : vector<1x8xf32> to vector<8x8xf32>
      %19 = arith.addf %16, %18 : vector<8x8xf32>
      %20 = arith.truncf %19 : vector<8x8xf32> to vector<8x8xbf16>
      %c0_11 = arith.constant 0 : index
      %c0_12 = arith.constant 0 : index
      %21 = vector.load %arg9[%c0_11, %c0_12] : memref<32x8xbf16, #tpu.memory_space<vmem>>, vector<32x8xbf16>
      %cst_13 = arith.constant dense<0.000000e+00> : vector<8x8xf32>
      %22 = tpu.matmul %14, %21, %cst_13 {dimension_numbers = #tpu.dot_dimension_numbers<[1], [0], [0], [1], [0, 0, 1, 1], [], []>} : vector<8x32xbf16>, vector<32x8xbf16>, vector<8x8xf32> -> vector<8x8xf32>
      %c0_14 = arith.constant 0 : index
      %c0_15 = arith.constant 0 : index
      %23 = vector.load %arg10[%c0_14, %c0_15] : memref<1x8xf32, #tpu.memory_space<vmem>>, vector<1x8xf32>
      %24 = vector.broadcast %23 : vector<1x8xf32> to vector<8x8xf32>
      %25 = arith.addf %22, %24 : vector<8x8xf32>
      %26 = arith.truncf %25 : vector<8x8xf32> to vector<8x8xbf16>
      %27 = vector.shape_cast %20 : vector<8x8xbf16> to vector<1x8x8xbf16>
      %28 = vector.shape_cast %27 : vector<1x8x8xbf16> to vector<1x8x8xbf16>
      %29 = vector.broadcast %28 : vector<1x8x8xbf16> to vector<4x8x8xbf16>
      %30 = vector.shape_cast %26 : vector<8x8xbf16> to vector<1x8x8xbf16>
      %31 = vector.shape_cast %30 : vector<1x8x8xbf16> to vector<1x8x8xbf16>
      %32 = vector.broadcast %31 : vector<1x8x8xbf16> to vector<4x8x8xbf16>
      %c0_16 = arith.constant 0 : index
      %c0_17 = arith.constant 0 : index
      %c0_18 = arith.constant 0 : index
      %33 = vector.load %arg14[%c0_16, %c0_17, %c0_18] : memref<4x8x8xbf16, #tpu.memory_space<vmem>>, vector<4x8x8xbf16>
      "tpu.trace_start"() <{level = 10 : i32, message = "hqd,hkd->hqk"}> : () -> ()
      %cst_19 = arith.constant dense<0.000000e+00> : vector<4x8x8xf32>
      %34 = tpu.matmul %33, %29, %cst_19 {dimension_numbers = #tpu.dot_dimension_numbers<[2], [2], [1], [1], [0, 0, 0, 1, 1, 1], [0], [0]>} : vector<4x8x8xbf16>, vector<4x8x8xbf16>, vector<4x8x8xf32> -> vector<4x8x8xf32>
      "tpu.trace_stop"() : () -> ()
      %c8_i32_20 = arith.constant 8 : i32
      %35 = arith.muli %arg1, %c8_i32_20 : i32
      %36 = tpu.iota {dimensions = array<i32: 0>} : vector<8x8xi32>
      %37 = vector.broadcast %35 : i32 to vector<8x8xi32>
      %38 = arith.addi %37, %36 : vector<8x8xi32>
      %c8_i32_21 = arith.constant 8 : i32
      %39 = arith.muli %arg2, %c8_i32_21 : i32
      %40 = tpu.iota {dimensions = array<i32: 1>} : vector<8x8xi32>
      %41 = vector.broadcast %39 : i32 to vector<8x8xi32>
      %42 = arith.addi %41, %40 : vector<8x8xi32>
      %43 = arith.cmpi sge, %38, %42 : vector<8x8xi32>
      %44 = vector.shape_cast %43 : vector<8x8xi1> to vector<1x8x8xi1>
      %45 = vector.shape_cast %44 : vector<1x8x8xi1> to vector<1x8x8xi1>
      %46 = vector.broadcast %45 : vector<1x8x8xi1> to vector<4x8x8xi1>
      %cst_22 = arith.constant -1.000000e+30 : f32
      %47 = vector.broadcast %cst_22 : f32 to vector<4x8x8xf32>
      %48 = arith.select %46, %34, %47 : vector<4x8x8xi1>, vector<4x8x8xf32>
      %c0_23 = arith.constant 0 : index
      %c0_24 = arith.constant 0 : index
      %c0_25 = arith.constant 0 : index
      %49 = vector.load %arg15[%c0_23, %c0_24, %c0_25] : memref<4x8x1xf32, #tpu.memory_space<vmem>>, vector<4x8x1xf32>
      %cst_26 = arith.constant dense<0xFF800000> : vector<4x8xf32>
      %50 = vector.multi_reduction <maximumf>, %48, %cst_26 [2] : vector<4x8x8xf32> to vector<4x8xf32>
      %51 = vector.shape_cast %50 : vector<4x8xf32> to vector<4x8x1xf32>
      %52 = arith.maximumf %49, %51 : vector<4x8x1xf32>
      %c0_27 = arith.constant 0 : index
      %c0_28 = arith.constant 0 : index
      %c0_29 = arith.constant 0 : index
      %53 = vector.load %arg15[%c0_27, %c0_28, %c0_29] : memref<4x8x1xf32, #tpu.memory_space<vmem>>, vector<4x8x1xf32>
      %54 = arith.subf %53, %52 : vector<4x8x1xf32>
      %55 = math.exp %54 : vector<4x8x1xf32>
      %56 = vector.broadcast %52 : vector<4x8x1xf32> to vector<4x8x8xf32>
      %57 = arith.subf %48, %56 : vector<4x8x8xf32>
      %58 = math.exp %57 : vector<4x8x8xf32>
      %c0_30 = arith.constant 0 : index
      %c0_31 = arith.constant 0 : index
      %c0_32 = arith.constant 0 : index
      %59 = vector.load %arg16[%c0_30, %c0_31, %c0_32] : memref<4x8x1xf32, #tpu.memory_space<vmem>>, vector<4x8x1xf32>
      %60 = arith.mulf %55, %59 : vector<4x8x1xf32>
      %cst_33 = arith.constant dense<0.000000e+00> : vector<4x8xf32>
      %61 = vector.multi_reduction <add>, %58, %cst_33 [2] : vector<4x8x8xf32> to vector<4x8xf32>
      %62 = vector.shape_cast %61 : vector<4x8xf32> to vector<4x8x1xf32>
      %63 = arith.addf %60, %62 : vector<4x8x1xf32>
      %c0_34 = arith.constant 0 : index
      %c0_35 = arith.constant 0 : index
      %c0_36 = arith.constant 0 : index
      %64 = vector.load %arg16[%c0_34, %c0_35, %c0_36] : memref<4x8x1xf32, #tpu.memory_space<vmem>>, vector<4x8x1xf32>
      tpu.vector_store %arg16[%c0_34, %c0_35, %c0_36], %63 {strides = array<i32>} : memref<4x8x1xf32, #tpu.memory_space<vmem>>, vector<4x8x1xf32>,
      %c0_37 = arith.constant 0 : index
      %c0_38 = arith.constant 0 : index
      %c0_39 = arith.constant 0 : index
      %65 = vector.load %arg17[%c0_37, %c0_38, %c0_39] : memref<4x8x8xf32, #tpu.memory_space<vmem>>, vector<4x8x8xf32>
      %66 = vector.broadcast %55 : vector<4x8x1xf32> to vector<4x8x8xf32>
      %67 = arith.mulf %66, %65 : vector<4x8x8xf32>
      %68 = arith.truncf %58 : vector<4x8x8xf32> to vector<4x8x8xbf16>
      "tpu.trace_start"() <{level = 10 : i32, message = "hqk,hkd->hqd"}> : () -> ()
      %cst_40 = arith.constant dense<0.000000e+00> : vector<4x8x8xf32>
      %69 = tpu.matmul %68, %32, %cst_40 {dimension_numbers = #tpu.dot_dimension_numbers<[2], [1], [1], [2], [0, 0, 0, 1, 1, 2], [0], [0]>} : vector<4x8x8xbf16>, vector<4x8x8xbf16>, vector<4x8x8xf32> -> vector<4x8x8xf32>
      "tpu.trace_stop"() : () -> ()
      %70 = arith.addf %67, %69 : vector<4x8x8xf32>
      %c0_41 = arith.constant 0 : index
      %c0_42 = arith.constant 0 : index
      %c0_43 = arith.constant 0 : index
      %71 = vector.load %arg17[%c0_41, %c0_42, %c0_43] : memref<4x8x8xf32, #tpu.memory_space<vmem>>, vector<4x8x8xf32>
      tpu.vector_store %arg17[%c0_41, %c0_42, %c0_43], %70 {strides = array<i32>} : memref<4x8x8xf32, #tpu.memory_space<vmem>>, vector<4x8x8xf32>,
      %c0_44 = arith.constant 0 : index
      %c0_45 = arith.constant 0 : index
      %c0_46 = arith.constant 0 : index
      %72 = vector.load %arg15[%c0_44, %c0_45, %c0_46] : memref<4x8x1xf32, #tpu.memory_space<vmem>>, vector<4x8x1xf32>
      tpu.vector_store %arg15[%c0_44, %c0_45, %c0_46], %52 {strides = array<i32>} : memref<4x8x1xf32, #tpu.memory_space<vmem>>, vector<4x8x1xf32>,
    } else {
    }
    %c0_i32_3 = arith.constant 0 : i32
    %9 = arith.cmpi eq, %arg2, %c0_i32_3 : i32
    %10 = arith.extui %9 : i1 to i32
    %c0_i32_4 = arith.constant 0 : i32
    %11 = arith.cmpi ne, %10, %c0_i32_4 : i32
    scf.if %11 {
      %c0 = arith.constant 0 : index
      %c0_5 = arith.constant 0 : index
      %c0_6 = arith.constant 0 : index
      %12 = vector.load %arg17[%c0, %c0_5, %c0_6] : memref<4x8x8xf32, #tpu.memory_space<vmem>>, vector<4x8x8xf32>
      %c0_7 = arith.constant 0 : index
      %c0_8 = arith.constant 0 : index
      %c0_9 = arith.constant 0 : index
      %13 = vector.load %arg16[%c0_7, %c0_8, %c0_9] : memref<4x8x1xf32, #tpu.memory_space<vmem>>, vector<4x8x1xf32>
      %14 = tpu.reciprocal %13 {approx = true} : vector<4x8x1xf32> -> vector<4x8x1xf32>
      %15 = vector.broadcast %14 : vector<4x8x1xf32> to vector<4x8x8xf32>
      %16 = arith.mulf %12, %15 : vector<4x8x8xf32>
      %17 = arith.truncf %16 : vector<4x8x8xf32> to vector<4x8x8xbf16>
      %c0_10 = arith.constant 0 : index
      %c0_11 = arith.constant 0 : index
      %c0_12 = arith.constant 0 : index
      %18 = vector.load %arg11[%c0_10, %c0_11, %c0_12] : memref<4x8x32xbf16, #tpu.memory_space<vmem>>, vector<4x8x32xbf16>
      "tpu.trace_start"() <{level = 10 : i32, message = "hqd,hde->hqe"}> : () -> ()
      %cst = arith.constant dense<0.000000e+00> : vector<4x8x32xf32>
      %19 = tpu.matmul %17, %18, %cst {dimension_numbers = #tpu.dot_dimension_numbers<[2], [1], [1], [2], [0, 0, 0, 1, 1, 2], [0], [0]>} : vector<4x8x8xbf16>, vector<4x8x32xbf16>, vector<4x8x32xf32> -> vector<4x8x32xf32>
      "tpu.trace_stop"() : () -> ()
      %cst_13 = arith.constant dense<0.000000e+00> : vector<8x32xf32>
      %20 = vector.multi_reduction <add>, %19, %cst_13 [0] : vector<4x8x32xf32> to vector<8x32xf32>
      %c0_14 = arith.constant 0 : index
      %c0_15 = arith.constant 0 : index
      %21 = vector.load %arg12[%c0_14, %c0_15] : memref<1x32xf32, #tpu.memory_space<vmem>>, vector<1x32xf32>
      %22 = vector.broadcast %21 : vector<1x32xf32> to vector<8x32xf32>
      %23 = arith.addf %20, %22 : vector<8x32xf32>
      %c0_16 = arith.constant 0 : index
      %c0_17 = arith.constant 0 : index
      %c0_18 = arith.constant 0 : index
      %24 = vector.load %arg13[%c0_16, %c0_17, %c0_18] : memref<1x8x32xf32, #tpu.memory_space<vmem>>, vector<1x8x32xf32>
      %25 = vector.shape_cast %24 : vector<1x8x32xf32> to vector<8x32xf32>
      %26 = vector.shape_cast %23 : vector<8x32xf32> to vector<1x8x32xf32>
      tpu.vector_store %arg13[%c0_16, %c0_17, %c0_18], %26 {strides = array<i32>} : memref<1x8x32xf32, #tpu.memory_space<vmem>>, vector<1x8x32xf32>,
    } else {
    }
    return
  }
  func.func @transform_0(%arg0: i32, %arg1: i32, %arg2: i32) -> (i32, i32, i32) {
    %c0_i32 = arith.constant 0 : i32
    %c0_i32_0 = arith.constant 0 : i32
    return %arg0, %arg1, %c0_i32 : i32, i32, i32
  }
  func.func @transform_1(%arg0: i32, %arg1: i32, %arg2: i32) -> (i32, i32, i32) {
    %c0_i32 = arith.constant 0 : i32
    %c0_i32_0 = arith.constant 0 : i32
    return %arg0, %arg2, %c0_i32 : i32, i32, i32
  }
  func.func @transform_2(%arg0: i32, %arg1: i32, %arg2: i32) -> (i32, i32, i32) {
    %c0_i32 = arith.constant 0 : i32
    %c0_i32_0 = arith.constant 0 : i32
    %c0_i32_1 = arith.constant 0 : i32
    %c0_i32_2 = arith.constant 0 : i32
    return %c0_i32, %c0_i32_0, %c0_i32_1 : i32, i32, i32
  }
  func.func @transform_3(%arg0: i32, %arg1: i32, %arg2: i32) -> (i32, i32, i32) {
    %c0_i32 = arith.constant 0 : i32
    %c0_i32_0 = arith.constant 0 : i32
    %c0_i32_1 = arith.constant 0 : i32
    %c0_i32_2 = arith.constant 0 : i32
    return %c0_i32, %c0_i32_0, %c0_i32_1 : i32, i32, i32
  }
  func.func @transform_4(%arg0: i32, %arg1: i32, %arg2: i32) -> (i32, i32) {
    %c0_i32 = arith.constant 0 : i32
    %c0_i32_0 = arith.constant 0 : i32
    %c0_i32_1 = arith.constant 0 : i32
    return %c0_i32, %c0_i32_0 : i32, i32
  }
  func.func @transform_5(%arg0: i32, %arg1: i32, %arg2: i32) -> (i32, i32) {
    %c0_i32 = arith.constant 0 : i32
    %c0_i32_0 = arith.constant 0 : i32
    %c0_i32_1 = arith.constant 0 : i32
    return %c0_i32, %c0_i32_0 : i32, i32
  }
  func.func @transform_6(%arg0: i32, %arg1: i32, %arg2: i32) -> (i32, i32) {
    %c0_i32 = arith.constant 0 : i32
    %c0_i32_0 = arith.constant 0 : i32
    %c0_i32_1 = arith.constant 0 : i32
    return %c0_i32, %c0_i32_0 : i32, i32
  }
  func.func @transform_7(%arg0: i32, %arg1: i32, %arg2: i32) -> (i32, i32) {
    %c0_i32 = arith.constant 0 : i32
    %c0_i32_0 = arith.constant 0 : i32
    %c0_i32_1 = arith.constant 0 : i32
    return %c0_i32, %c0_i32_0 : i32, i32
  }
  func.func @transform_8(%arg0: i32, %arg1: i32, %arg2: i32) -> (i32, i32, i32) {
    %c0_i32 = arith.constant 0 : i32
    %c0_i32_0 = arith.constant 0 : i32
    %c0_i32_1 = arith.constant 0 : i32
    %c0_i32_2 = arith.constant 0 : i32
    return %c0_i32, %c0_i32_0, %c0_i32_1 : i32, i32, i32
  }
  func.func @transform_9(%arg0: i32, %arg1: i32, %arg2: i32) -> (i32, i32) {
    %c0_i32 = arith.constant 0 : i32
    %c0_i32_0 = arith.constant 0 : i32
    %c0_i32_1 = arith.constant 0 : i32
    return %c0_i32, %c0_i32_0 : i32, i32
  }
  func.func @transform_10(%arg0: i32, %arg1: i32, %arg2: i32) -> (i32, i32, i32) {
    %c0_i32 = arith.constant 0 : i32
    %c0_i32_0 = arith.constant 0 : i32
    return %arg0, %arg1, %c0_i32 : i32, i32, i32
  }
}

module attributes {stable_mosaic.version = 11 : i64} {
  func.func @mqa_flash_kernel(%arg0: i32, %arg1: i32, %arg2: i32, %arg3: memref<1x8x32xf32, #tpu.memory_space<vmem>>, %arg4: memref<1x8x32xf32, #tpu.memory_space<vmem>>, %arg5: memref<4x32x8xbf16, #tpu.memory_space<vmem>>, %arg6: memref<4x1x8xf32, #tpu.memory_space<vmem>>, %arg7: memref<32x8xbf16, #tpu.memory_space<vmem>>, %arg8: memref<1x8xf32, #tpu.memory_space<vmem>>, %arg9: memref<32x8xbf16, #tpu.memory_space<vmem>>, %arg10: memref<1x8xf32, #tpu.memory_space<vmem>>, %arg11: memref<4x8x32xbf16, #tpu.memory_space<vmem>>, %arg12: memref<1x32xf32, #tpu.memory_space<vmem>>, %arg13: memref<1x8x32xf32, #tpu.memory_space<vmem>>, %arg14: memref<4x8x8xbf16, #tpu.memory_space<vmem>>, %arg15: memref<4x8x1xf32, #tpu.memory_space<vmem>>, %arg16: memref<4x8x1xf32, #tpu.memory_space<vmem>>, %arg17: memref<4x8x8xf32, #tpu.memory_space<vmem>>) attributes {dimension_semantics = [#tpu.dimension_semantics<parallel>, #tpu.dimension_semantics<parallel>, #tpu.dimension_semantics<arbitrary>], iteration_bounds = array<i64: 2, 1, 1>, scalar_prefetch = 0 : i64, scratch_operands = 4 : i64, tpu.core_type = #tpu.core_type<tc>, window_params = [{transform_indices = @transform_0, window_bounds = array<i64: 1, 8, 32>}, {transform_indices = @transform_1, window_bounds = array<i64: 1, 8, 32>}, {pipeline_mode = #tpu.pipeline_mode<synchronous>, transform_indices = @transform_2, window_bounds = array<i64: 4, 32, 8>}, {pipeline_mode = #tpu.pipeline_mode<synchronous>, transform_indices = @transform_3, window_bounds = array<i64: 4, 1, 8>}, {pipeline_mode = #tpu.pipeline_mode<synchronous>, transform_indices = @transform_4, window_bounds = array<i64: 32, 8>}, {pipeline_mode = #tpu.pipeline_mode<synchronous>, transform_indices = @transform_5, window_bounds = array<i64: 1, 8>}, {pipeline_mode = #tpu.pipeline_mode<synchronous>, transform_indices = @transform_6, window_bounds = array<i64: 32, 8>}, {pipeline_mode = #tpu.pipeline_mode<synchronous>, transform_indices = @transform_7, window_bounds = array<i64: 1, 8>}, {pipeline_mode = #tpu.pipeline_mode<synchronous>, transform_indices = @transform_8, window_bounds = array<i64: 4, 8, 32>}, {pipeline_mode = #tpu.pipeline_mode<synchronous>, transform_indices = @transform_9, window_bounds = array<i64: 1, 32>}, {transform_indices = @transform_10, window_bounds = array<i64: 1, 8, 32>}]} {
    %c0_i32 = arith.constant 0 : i32
    %0 = arith.cmpi eq, %arg2, %c0_i32 : i32
    %1 = arith.extui %0 : i1 to i32
    %c0_i32_0 = arith.constant 0 : i32
    %2 = arith.cmpi ne, %1, %c0_i32_0 : i32
    scf.if %2 {
      %c0 = arith.constant 0 : index
      %c0_5 = arith.constant 0 : index
      %c0_6 = arith.constant 0 : index
      %12 = vector.load %arg3[%c0, %c0_5, %c0_6] : memref<1x8x32xf32, #tpu.memory_space<vmem>>, vector<1x8x32xf32>
      %13 = vector.shape_cast %12 : vector<1x8x32xf32> to vector<8x32xf32>
      %14 = arith.truncf %13 : vector<8x32xf32> to vector<8x32xbf16>
      %15 = vector.shape_cast %14 : vector<8x32xbf16> to vector<1x8x32xbf16>
      %16 = vector.shape_cast %15 : vector<1x8x32xbf16> to vector<1x8x32xbf16>
      %17 = vector.broadcast %16 : vector<1x8x32xbf16> to vector<4x8x32xbf16>
      %c0_7 = arith.constant 0 : index
      %c0_8 = arith.constant 0 : index
      %c0_9 = arith.constant 0 : index
      %18 = vector.load %arg5[%c0_7, %c0_8, %c0_9] : memref<4x32x8xbf16, #tpu.memory_space<vmem>>, vector<4x32x8xbf16>
      "tpu.trace_start"() <{level = 10 : i32, message = "hqe,hed->hqd"}> : () -> ()
      %cst = arith.constant dense<0.000000e+00> : vector<4x8x8xf32>
      %19 = tpu.matmul %17, %18, %cst {dimension_numbers = #tpu.dot_dimension_numbers<[2], [1], [1], [2], [0, 0, 0, 1, 1, 2], [0], [0]>} : vector<4x8x32xbf16>, vector<4x32x8xbf16>, vector<4x8x8xf32> -> vector<4x8x8xf32>
      "tpu.trace_stop"() : () -> ()
      %c0_10 = arith.constant 0 : index
      %c0_11 = arith.constant 0 : index
      %c0_12 = arith.constant 0 : index
      %20 = vector.load %arg6[%c0_10, %c0_11, %c0_12] : memref<4x1x8xf32, #tpu.memory_space<vmem>>, vector<4x1x8xf32>
      %21 = vector.broadcast %20 : vector<4x1x8xf32> to vector<4x8x8xf32>
      %22 = arith.addf %19, %21 : vector<4x8x8xf32>
      %23 = arith.truncf %22 : vector<4x8x8xf32> to vector<4x8x8xbf16>
      %c0_13 = arith.constant 0 : index
      %c0_14 = arith.constant 0 : index
      %c0_15 = arith.constant 0 : index
      %24 = vector.load %arg14[%c0_13, %c0_14, %c0_15] : memref<4x8x8xbf16, #tpu.memory_space<vmem>>, vector<4x8x8xbf16>
      tpu.vector_store %arg14[%c0_13, %c0_14, %c0_15], %23 {strides = array<i32>} : memref<4x8x8xbf16, #tpu.memory_space<vmem>>, vector<4x8x8xbf16>,
      %cst_16 = arith.constant 0xFF800000 : f32
      %25 = vector.broadcast %cst_16 : f32 to vector<4x8x1xf32>
      %c0_17 = arith.constant 0 : index
      %c0_18 = arith.constant 0 : index
      %c0_19 = arith.constant 0 : index
      %26 = vector.load %arg15[%c0_17, %c0_18, %c0_19] : memref<4x8x1xf32, #tpu.memory_space<vmem>>, vector<4x8x1xf32>
      tpu.vector_store %arg15[%c0_17, %c0_18, %c0_19], %25 {strides = array<i32>} : memref<4x8x1xf32, #tpu.memory_space<vmem>>, vector<4x8x1xf32>,
      %cst_20 = arith.constant 0.000000e+00 : f32
      %27 = vector.broadcast %cst_20 : f32 to vector<4x8x1xf32>
      %c0_21 = arith.constant 0 : index
      %c0_22 = arith.constant 0 : index
      %c0_23 = arith.constant 0 : index
      %28 = vector.load %arg16[%c0_21, %c0_22, %c0_23] : memref<4x8x1xf32, #tpu.memory_space<vmem>>, vector<4x8x1xf32>
      tpu.vector_store %arg16[%c0_21, %c0_22, %c0_23], %27 {strides = array<i32>} : memref<4x8x1xf32, #tpu.memory_space<vmem>>, vector<4x8x1xf32>,
      %cst_24 = arith.constant 0.000000e+00 : f32
      %29 = vector.broadcast %cst_24 : f32 to vector<4x8x8xf32>
      %c0_25 = arith.constant 0 : index
      %c0_26 = arith.constant 0 : index
      %c0_27 = arith.constant 0 : index
      %30 = vector.load %arg17[%c0_25, %c0_26, %c0_27] : memref<4x8x8xf32, #tpu.memory_space<vmem>>, vector<4x8x8xf32>
      tpu.vector_store %arg17[%c0_25, %c0_26, %c0_27], %29 {strides = array<i32>} : memref<4x8x8xf32, #tpu.memory_space<vmem>>, vector<4x8x8xf32>,
    } else {
    }
    %c8_i32 = arith.constant 8 : i32
    %3 = arith.muli %arg2, %c8_i32 : i32
    %c8_i32_1 = arith.constant 8 : i32
    %4 = arith.muli %arg1, %c8_i32_1 : i32
    %c7_i32 = arith.constant 7 : i32
    %5 = arith.addi %4, %c7_i32 : i32
    %6 = arith.cmpi sle, %3, %5 : i32
    %7 = arith.extui %6 : i1 to i32
    %c0_i32_2 = arith.constant 0 : i32
    %8 = arith.cmpi ne, %7, %c0_i32_2 : i32
    scf.if %8 {
      %c0 = arith.constant 0 : index
      %c0_5 = arith.constant 0 : index
      %c0_6 = arith.constant 0 : index
      %12 = vector.load %arg4[%c0, %c0_5, %c0_6] : memref<1x8x32xf32, #tpu.memory_space<vmem>>, vector<1x8x32xf32>
      %13 = vector.shape_cast %12 : vector<1x8x32xf32> to vector<8x32xf32>
      %14 = arith.truncf %13 : vector<8x32xf32> to vector<8x32xbf16>
      %c0_7 = arith.constant 0 : index
      %c0_8 = arith.constant 0 : index
      %15 = vector.load %arg7[%c0_7, %c0_8] : memref<32x8xbf16, #tpu.memory_space<vmem>>, vector<32x8xbf16>
      %cst = arith.constant dense<0.000000e+00> : vector<8x8xf32>
      %16 = tpu.matmul %14, %15, %cst {dimension_numbers = #tpu.dot_dimension_numbers<[1], [0], [0], [1], [0, 0, 1, 1], [], []>} : vector<8x32xbf16>, vector<32x8xbf16>, vector<8x8xf32> -> vector<8x8xf32>
      %c0_9 = arith.constant 0 : index
      %c0_10 = arith.constant 0 : index
      %17 = vector.load %arg8[%c0_9, %c0_10] : memref<1x8xf32, #tpu.memory_space<vmem>>, vector<1x8xf32>
      %18 = vector.broadcast %17 : vector<1x8xf32> to vector<8x8xf32>
      %19 = arith.addf %16, %18 : vector<8x8xf32>
      %20 = arith.truncf %19 : vector<8x8xf32> to vector<8x8xbf16>
      %c0_11 = arith.constant 0 : index
      %c0_12 = arith.constant 0 : index
      %21 = vector.load %arg9[%c0_11, %c0_12] : memref<32x8xbf16, #tpu.memory_space<vmem>>, vector<32x8xbf16>
      %cst_13 = arith.constant dense<0.000000e+00> : vector<8x8xf32>
      %22 = tpu.matmul %14, %21, %cst_13 {dimension_numbers = #tpu.dot_dimension_numbers<[1], [0], [0], [1], [0, 0, 1, 1], [], []>} : vector<8x32xbf16>, vector<32x8xbf16>, vector<8x8xf32> -> vector<8x8xf32>
      %c0_14 = arith.constant 0 : index
      %c0_15 = arith.constant 0 : index
      %23 = vector.load %arg10[%c0_14, %c0_15] : memref<1x8xf32, #tpu.memory_space<vmem>>, vector<1x8xf32>
      %24 = vector.broadcast %23 : vector<1x8xf32> to vector<8x8xf32>
      %25 = arith.addf %22, %24 : vector<8x8xf32>
      %26 = arith.truncf %25 : vector<8x8xf32> to vector<8x8xbf16>
      %27 = vector.shape_cast %20 : vector<8x8xbf16> to vector<1x8x8xbf16>
      %28 = vector.shape_cast %27 : vector<1x8x8xbf16> to vector<1x8x8xbf16>
      %29 = vector.broadcast %28 : vector<1x8x8xbf16> to vector<4x8x8xbf16>
      %30 = vector.shape_cast %26 : vector<8x8xbf16> to vector<1x8x8xbf16>
      %31 = vector.shape_cast %30 : vector<1x8x8xbf16> to vector<1x8x8xbf16>
      %32 = vector.broadcast %31 : vector<1x8x8xbf16> to vector<4x8x8xbf16>
      %c0_16 = arith.constant 0 : index
      %c0_17 = arith.constant 0 : index
      %c0_18 = arith.constant 0 : index
      %33 = vector.load %arg14[%c0_16, %c0_17, %c0_18] : memref<4x8x8xbf16, #tpu.memory_space<vmem>>, vector<4x8x8xbf16>
      "tpu.trace_start"() <{level = 10 : i32, message = "hqd,hkd->hqk"}> : () -> ()
      %cst_19 = arith.constant dense<0.000000e+00> : vector<4x8x8xf32>
      %34 = tpu.matmul %33, %29, %cst_19 {dimension_numbers = #tpu.dot_dimension_numbers<[2], [2], [1], [1], [0, 0, 0, 1, 1, 1], [0], [0]>} : vector<4x8x8xbf16>, vector<4x8x8xbf16>, vector<4x8x8xf32> -> vector<4x8x8xf32>
      "tpu.trace_stop"() : () -> ()
      %c8_i32_20 = arith.constant 8 : i32
      %35 = arith.muli %arg1, %c8_i32_20 : i32
      %36 = tpu.iota {dimensions = array<i32: 0>} : vector<8x8xi32>
      %37 = vector.broadcast %35 : i32 to vector<8x8xi32>
      %38 = arith.addi %37, %36 : vector<8x8xi32>
      %c8_i32_21 = arith.constant 8 : i32
      %39 = arith.muli %arg2, %c8_i32_21 : i32
      %40 = tpu.iota {dimensions = array<i32: 1>} : vector<8x8xi32>
      %41 = vector.broadcast %39 : i32 to vector<8x8xi32>
      %42 = arith.addi %41, %40 : vector<8x8xi32>
      %43 = arith.cmpi sge, %38, %42 : vector<8x8xi32>
      %44 = vector.shape_cast %43 : vector<8x8xi1> to vector<1x8x8xi1>
      %45 = vector.shape_cast %44 : vector<1x8x8xi1> to vector<1x8x8xi1>
      %46 = vector.broadcast %45 : vector<1x8x8xi1> to vector<4x8x8xi1>
      %cst_22 = arith.constant -1.000000e+30 : f32
      %47 = vector.broadcast %cst_22 : f32 to vector<4x8x8xf32>
      %48 = arith.select %46, %34, %47 : vector<4x8x8xi1>, vector<4x8x8xf32>
      %c0_23 = arith.constant 0 : index
      %c0_24 = arith.constant 0 : index
      %c0_25 = arith.constant 0 : index
      %49 = vector.load %arg15[%c0_23, %c0_24, %c0_25] : memref<4x8x1xf32, #tpu.memory_space<vmem>>, vector<4x8x1xf32>
      %cst_26 = arith.constant dense<0xFF800000> : vector<4x8xf32>
      %50 = vector.multi_reduction <maximumf>, %48, %cst_26 [2] : vector<4x8x8xf32> to vector<4x8xf32>
      %51 = vector.shape_cast %50 : vector<4x8xf32> to vector<4x8x1xf32>
      %52 = arith.maximumf %49, %51 : vector<4x8x1xf32>
      %c0_27 = arith.constant 0 : index
      %c0_28 = arith.constant 0 : index
      %c0_29 = arith.constant 0 : index
      %53 = vector.load %arg15[%c0_27, %c0_28, %c0_29] : memref<4x8x1xf32, #tpu.memory_space<vmem>>, vector<4x8x1xf32>
      %54 = arith.subf %53, %52 : vector<4x8x1xf32>
      %55 = math.exp %54 : vector<4x8x1xf32>
      %56 = vector.broadcast %52 : vector<4x8x1xf32> to vector<4x8x8xf32>
      %57 = arith.subf %48, %56 : vector<4x8x8xf32>
      %58 = math.exp %57 : vector<4x8x8xf32>
      %c0_30 = arith.constant 0 : index
      %c0_31 = arith.constant 0 : index
      %c0_32 = arith.constant 0 : index
      %59 = vector.load %arg16[%c0_30, %c0_31, %c0_32] : memref<4x8x1xf32, #tpu.memory_space<vmem>>, vector<4x8x1xf32>
      %60 = arith.mulf %55, %59 : vector<4x8x1xf32>
      %cst_33 = arith.constant dense<0.000000e+00> : vector<4x8xf32>
      %61 = vector.multi_reduction <add>, %58, %cst_33 [2] : vector<4x8x8xf32> to vector<4x8xf32>
      %62 = vector.shape_cast %61 : vector<4x8xf32> to vector<4x8x1xf32>
      %63 = arith.addf %60, %62 : vector<4x8x1xf32>
      %c0_34 = arith.constant 0 : index
      %c0_35 = arith.constant 0 : index
      %c0_36 = arith.constant 0 : index
      %64 = vector.load %arg16[%c0_34, %c0_35, %c0_36] : memref<4x8x1xf32, #tpu.memory_space<vmem>>, vector<4x8x1xf32>
      tpu.vector_store %arg16[%c0_34, %c0_35, %c0_36], %63 {strides = array<i32>} : memref<4x8x1xf32, #tpu.memory_space<vmem>>, vector<4x8x1xf32>,
      %c0_37 = arith.constant 0 : index
      %c0_38 = arith.constant 0 : index
      %c0_39 = arith.constant 0 : index
      %65 = vector.load %arg17[%c0_37, %c0_38, %c0_39] : memref<4x8x8xf32, #tpu.memory_space<vmem>>, vector<4x8x8xf32>
      %66 = vector.broadcast %55 : vector<4x8x1xf32> to vector<4x8x8xf32>
      %67 = arith.mulf %66, %65 : vector<4x8x8xf32>
      %68 = arith.truncf %58 : vector<4x8x8xf32> to vector<4x8x8xbf16>
      "tpu.trace_start"() <{level = 10 : i32, message = "hqk,hkd->hqd"}> : () -> ()
      %cst_40 = arith.constant dense<0.000000e+00> : vector<4x8x8xf32>
      %69 = tpu.matmul %68, %32, %cst_40 {dimension_numbers = #tpu.dot_dimension_numbers<[2], [1], [1], [2], [0, 0, 0, 1, 1, 2], [0], [0]>} : vector<4x8x8xbf16>, vector<4x8x8xbf16>, vector<4x8x8xf32> -> vector<4x8x8xf32>
      "tpu.trace_stop"() : () -> ()
      %70 = arith.addf %67, %69 : vector<4x8x8xf32>
      %c0_41 = arith.constant 0 : index
      %c0_42 = arith.constant 0 : index
      %c0_43 = arith.constant 0 : index
      %71 = vector.load %arg17[%c0_41, %c0_42, %c0_43] : memref<4x8x8xf32, #tpu.memory_space<vmem>>, vector<4x8x8xf32>
      tpu.vector_store %arg17[%c0_41, %c0_42, %c0_43], %70 {strides = array<i32>} : memref<4x8x8xf32, #tpu.memory_space<vmem>>, vector<4x8x8xf32>,
      %c0_44 = arith.constant 0 : index
      %c0_45 = arith.constant 0 : index
      %c0_46 = arith.constant 0 : index
      %72 = vector.load %arg15[%c0_44, %c0_45, %c0_46] : memref<4x8x1xf32, #tpu.memory_space<vmem>>, vector<4x8x1xf32>
      tpu.vector_store %arg15[%c0_44, %c0_45, %c0_46], %52 {strides = array<i32>} : memref<4x8x1xf32, #tpu.memory_space<vmem>>, vector<4x8x1xf32>,
    } else {
    }
    %c0_i32_3 = arith.constant 0 : i32
    %9 = arith.cmpi eq, %arg2, %c0_i32_3 : i32
    %10 = arith.extui %9 : i1 to i32
    %c0_i32_4 = arith.constant 0 : i32
    %11 = arith.cmpi ne, %10, %c0_i32_4 : i32
    scf.if %11 {
      %c0 = arith.constant 0 : index
      %c0_5 = arith.constant 0 : index
      %c0_6 = arith.constant 0 : index
      %12 = vector.load %arg17[%c0, %c0_5, %c0_6] : memref<4x8x8xf32, #tpu.memory_space<vmem>>, vector<4x8x8xf32>
      %c0_7 = arith.constant 0 : index
      %c0_8 = arith.constant 0 : index
      %c0_9 = arith.constant 0 : index
      %13 = vector.load %arg16[%c0_7, %c0_8, %c0_9] : memref<4x8x1xf32, #tpu.memory_space<vmem>>, vector<4x8x1xf32>
      %14 = tpu.reciprocal %13 {approx = true} : vector<4x8x1xf32> -> vector<4x8x1xf32>
      %15 = vector.broadcast %14 : vector<4x8x1xf32> to vector<4x8x8xf32>
      %16 = arith.mulf %12, %15 : vector<4x8x8xf32>
      %17 = arith.truncf %16 : vector<4x8x8xf32> to vector<4x8x8xbf16>
      %c0_10 = arith.constant 0 : index
      %c0_11 = arith.constant 0 : index
      %c0_12 = arith.constant 0 : index
      %18 = vector.load %arg11[%c0_10, %c0_11, %c0_12] : memref<4x8x32xbf16, #tpu.memory_space<vmem>>, vector<4x8x32xbf16>
      "tpu.trace_start"() <{level = 10 : i32, message = "hqd,hde->hqe"}> : () -> ()
      %cst = arith.constant dense<0.000000e+00> : vector<4x8x32xf32>
      %19 = tpu.matmul %17, %18, %cst {dimension_numbers = #tpu.dot_dimension_numbers<[2], [1], [1], [2], [0, 0, 0, 1, 1, 2], [0], [0]>} : vector<4x8x8xbf16>, vector<4x8x32xbf16>, vector<4x8x32xf32> -> vector<4x8x32xf32>
      "tpu.trace_stop"() : () -> ()
      %cst_13 = arith.constant dense<0.000000e+00> : vector<8x32xf32>
      %20 = vector.multi_reduction <add>, %19, %cst_13 [0] : vector<4x8x32xf32> to vector<8x32xf32>
      %c0_14 = arith.constant 0 : index
      %c0_15 = arith.constant 0 : index
      %21 = vector.load %arg12[%c0_14, %c0_15] : memref<1x32xf32, #tpu.memory_space<vmem>>, vector<1x32xf32>
      %22 = vector.broadcast %21 : vector<1x32xf32> to vector<8x32xf32>
      %23 = arith.addf %20, %22 : vector<8x32xf32>
      %c0_16 = arith.constant 0 : index
      %c0_17 = arith.constant 0 : index
      %c0_18 = arith.constant 0 : index
      %24 = vector.load %arg13[%c0_16, %c0_17, %c0_18] : memref<1x8x32xf32, #tpu.memory_space<vmem>>, vector<1x8x32xf32>
      %25 = vector.shape_cast %24 : vector<1x8x32xf32> to vector<8x32xf32>
      %26 = vector.shape_cast %23 : vector<8x32xf32> to vector<1x8x32xf32>
      tpu.vector_store %arg13[%c0_16, %c0_17, %c0_18], %26 {strides = array<i32>} : memref<1x8x32xf32, #tpu.memory_space<vmem>>, vector<1x8x32xf32>,
    } else {
    }
    return
  }
  func.func @transform_0(%arg0: i32, %arg1: i32, %arg2: i32) -> (i32, i32, i32) {
    %c0_i32 = arith.constant 0 : i32
    %c0_i32_0 = arith.constant 0 : i32
    return %arg0, %arg1, %c0_i32 : i32, i32, i32
  }
  func.func @transform_1(%arg0: i32, %arg1: i32, %arg2: i32) -> (i32, i32, i32) {
    %c0_i32 = arith.constant 0 : i32
    %c0_i32_0 = arith.constant 0 : i32
    return %arg0, %arg2, %c0_i32 : i32, i32, i32
  }
  func.func @transform_2(%arg0: i32, %arg1: i32, %arg2: i32) -> (i32, i32, i32) {
    %c0_i32 = arith.constant 0 : i32
    %c0_i32_0 = arith.constant 0 : i32
    %c0_i32_1 = arith.constant 0 : i32
    %c0_i32_2 = arith.constant 0 : i32
    return %c0_i32, %c0_i32_0, %c0_i32_1 : i32, i32, i32
  }
  func.func @transform_3(%arg0: i32, %arg1: i32, %arg2: i32) -> (i32, i32, i32) {
    %c0_i32 = arith.constant 0 : i32
    %c0_i32_0 = arith.constant 0 : i32
    %c0_i32_1 = arith.constant 0 : i32
    %c0_i32_2 = arith.constant 0 : i32
    return %c0_i32, %c0_i32_0, %c0_i32_1 : i32, i32, i32
  }
  func.func @transform_4(%arg0: i32, %arg1: i32, %arg2: i32) -> (i32, i32) {
    %c0_i32 = arith.constant 0 : i32
    %c0_i32_0 = arith.constant 0 : i32
    %c0_i32_1 = arith.constant 0 : i32
    return %c0_i32, %c0_i32_0 : i32, i32
  }
  func.func @transform_5(%arg0: i32, %arg1: i32, %arg2: i32) -> (i32, i32) {
    %c0_i32 = arith.constant 0 : i32
    %c0_i32_0 = arith.constant 0 : i32
    %c0_i32_1 = arith.constant 0 : i32
    return %c0_i32, %c0_i32_0 : i32, i32
  }
  func.func @transform_6(%arg0: i32, %arg1: i32, %arg2: i32) -> (i32, i32) {
    %c0_i32 = arith.constant 0 : i32
    %c0_i32_0 = arith.constant 0 : i32
    %c0_i32_1 = arith.constant 0 : i32
    return %c0_i32, %c0_i32_0 : i32, i32
  }
  func.func @transform_7(%arg0: i32, %arg1: i32, %arg2: i32) -> (i32, i32) {
    %c0_i32 = arith.constant 0 : i32
    %c0_i32_0 = arith.constant 0 : i32
    %c0_i32_1 = arith.constant 0 : i32
    return %c0_i32, %c0_i32_0 : i32, i32
  }
  func.func @transform_8(%arg0: i32, %arg1: i32, %arg2: i32) -> (i32, i32, i32) {
    %c0_i32 = arith.constant 0 : i32
    %c0_i32_0 = arith.constant 0 : i32
    %c0_i32_1 = arith.constant 0 : i32
    %c0_i32_2 = arith.constant 0 : i32
    return %c0_i32, %c0_i32_0, %c0_i32_1 : i32, i32, i32
  }
  func.func @transform_9(%arg0: i32, %arg1: i32, %arg2: i32) -> (i32, i32) {
    %c0_i32 = arith.constant 0 : i32
    %c0_i32_0 = arith.constant 0 : i32
    %c0_i32_1 = arith.constant 0 : i32
    return %c0_i32, %c0_i32_0 : i32, i32
  }
  func.func @transform_10(%arg0: i32, %arg1: i32, %arg2: i32) -> (i32, i32, i32) {
    %c0_i32 = arith.constant 0 : i32
    %c0_i32_0 = arith.constant 0 : i32
    return %arg0, %arg1, %c0_i32 : i32, i32, i32
  }
}

</mosaic_0001>

<llo_original>
// kernel: tpu_custom_call.1
$region0: #{tpu_custom_call.1}
  #allocation0 [shape = 'u32[]', space=smem, size = 0x4, offset = 0x4, fixed_abs, tag = 'smem constant byte address 0x4 - core index']
  #allocation1 [shape = 'u32[144,128]{1,0:T(1,128)}', space=vmem, size = 0x12000, scoped, tag = 'internal scratch']
  #allocation2 [shape = 'bf16[4,8,8]{2,1,0:T(8,128)(2,1)}', space=vmem, size = 0x2000, scoped, tag = 'scratch operand']
  #allocation3 [shape = 'f32[4,8,1]{2,1,0:T(8,128)}', space=vmem, size = 0x4000, scoped, tag = 'scratch operand']
  #allocation4 [shape = 'f32[4,8,1]{2,1,0:T(8,128)}', space=vmem, size = 0x4000, scoped, tag = 'scratch operand']
  #allocation5 [shape = 'f32[4,8,8]{2,1,0:T(8,128)}', space=vmem, size = 0x4000, scoped, tag = 'scratch operand']
  %s0 = inlined_call_operand.vmem [shape: f32[2,8,32], index: 0, kind: input, shape index: {}]
  %s1 = inlined_call_operand.vmem [shape: f32[2,8,32], index: 1, kind: input, shape index: {}]
  %s2 = inlined_call_operand.vmem [shape: bf16[4,32,8], index: 2, kind: input, shape index: {}]
  %s3 = inlined_call_operand.vmem [shape: f32[4,1,8], index: 3, kind: input, shape index: {}]
  %s4 = inlined_call_operand.vmem [shape: bf16[32,8], index: 4, kind: input, shape index: {}]
  %s5 = inlined_call_operand.vmem [shape: f32[1,8], index: 5, kind: input, shape index: {}]
  %s6 = inlined_call_operand.vmem [shape: bf16[32,8], index: 6, kind: input, shape index: {}]
  %s7 = inlined_call_operand.vmem [shape: f32[1,8], index: 7, kind: input, shape index: {}]
  %s8 = inlined_call_operand.vmem [shape: bf16[4,8,32], index: 8, kind: input, shape index: {}]
  %s9 = inlined_call_operand.vmem [shape: f32[1,32], index: 9, kind: input, shape index: {}]
  %s10 = inlined_call_operand.hbm [shape: f32[2,8,32], index: 10, kind: output, shape index: {}]
  %s11 = sld [smem:[#allocation0]]
  $region85: #{tpu_custom_call.1} parent=0
    _
  %s13 = ssub.s32 1, %s11
  %s14 = scalar_select 0, %s13, %s11
  $region1: #{tpu_custom_call.1} parent=0
    #allocation6 [shape = 'u8[8192]{0}', space=vmem, size = 0x2000, scoped, tag = 'output window, operand 0']
    #allocation7 [shape = 's32[2]{0}', space=sflag, size = 0x8, scoped, tag = 'scoped memory for tpu_custom_call.1']
    %15 = vsyncpa [#allocation7], 0
    %s16 = scalar_lea.sflag [#allocation7], 1
    %17 = vsyncpa %s16, 0
    loop: start=0, step=1, limit=4
    $region2: #{tpu_custom_call.1} parent=1 // loop_pre_header
      _
    $region3: #{tpu_custom_call.1} parent=1 // loop_header
      %s19 = sphi 0, %s23
      %p20 = scmp.ge.s32.totalorder %s19, 4
      %s26 = sphi 0, %s45
      %s27 = sphi 0, %s41
      %s28 = sphi 0, %s37
      %s29 = sphi 0, %s26
      %s30 = sphi 0, %s27
      %s31 = sphi 0, %s28
      %s32 = sphi 0, %s29
      %s33 = sphi 0, %s30
      %s34 = sphi 0, %s31
      %s50 = sphi 0, %s52
      %s53 = sphi 0, %s50
      %s54 = sphi 0, %s53
      %s70 = sphi 0, %s54
      %s78 = sphi 0, %s80
      %s81 = sphi 0, %s78
      %s82 = sphi 0, %s81
      %s98 = sphi 0, %s82
      %s102 = sphi 0, %s102
      %s104 = sphi 0, %s102
      %s105 = sphi 0, %s104
      %s119 = sphi 0, %s105
      %s123 = sphi 0, %s123
      %s125 = sphi 0, %s123
      %s126 = sphi 0, %s125
      %s140 = sphi 0, %s126
      %s144 = sphi 0, %s144
      %s146 = sphi 0, %s144
      %s147 = sphi 0, %s146
      %s161 = sphi 0, %s147
      %s165 = sphi 0, %s165
      %s167 = sphi 0, %s165
      %s168 = sphi 0, %s167
      %s182 = sphi 0, %s168
      %s186 = sphi 0, %s186
      %s188 = sphi 0, %s186
      %s189 = sphi 0, %s188
      %s203 = sphi 0, %s189
      %s207 = sphi 0, %s207
      %s209 = sphi 0, %s207
      %s210 = sphi 0, %s209
      %s224 = sphi 0, %s210
      %s228 = sphi 0, %s228
      %s230 = sphi 0, %s228
      %s231 = sphi 0, %s230
      %s245 = sphi 0, %s231
      %s249 = sphi 0, %s249
      %s251 = sphi 0, %s249
      %s252 = sphi 0, %s251
      %s266 = sphi 0, %s252
      %s274 = sphi 0, %s276
      %s277 = sphi 0, %s274
      %s278 = sphi 0, %s277
      %s294 = sphi 0, %s278
    $region4: #{tpu_custom_call.1} parent=1 // loop_header_branch
      %22 = sbr.rel (%p20) target = $region8
    $region5: #{tpu_custom_call.1} parent=1 // loop_body
      %s24 = ssub.s32 %s19, 1
      %s25 = ssub.s32 %s19, 2
      %s35 = sadd.s32 1, %s28
      %p36 = scmp.ge.s32.totalorder %s35, 1
      %s37 = scalar_select %p36, 0, %s35
      %s38 = sadd.s32 1, %s27
      %s39 = scalar_select %p36, %s38, %s27
      %p40 = scmp.ge.s32.totalorder %s39, 1
      %s41 = scalar_select %p40, 0, %s39
      %s42 = sadd.s32 1, %s26
      %s43 = scalar_select %p40, %s42, %s26
      %p44 = scmp.ge.s32.totalorder %s43, 2
      %s45 = scalar_select %p44, 0, %s43
      %s46 = ssub.s32 %s26, %s45
      %s47 = ssub.s32 %s27, %s41
      %s48 = sor.u32 %s46, %s47
      %p49 = scmp.eq.s32.totalorder %s48, 0
      %s51 = sadd.s32 %s50, 1
      %s52 = scalar_select %p49, %s50, %s51
      %p55 = pneg %p49
      %p56 = scmp.eq.s32.totalorder %s19, 1
      %p57 = por %p55, %p56
      %p58 = scmp.ne.s32.totalorder %s50, %s53
      %p59 = scmp.eq.s32.totalorder %s19, 0
      %p60 = por %p58, %p59
      %p61 = scmp.ne.s32.totalorder %s50, %s53
      %p62 = scmp.eq.s32.totalorder %s24, 1
      %p63 = por %p61, %p62
      %p64 = scmp.ne.s32.totalorder %s53, %s54
      %p65 = scmp.eq.s32.totalorder %s24, 0
      %p66 = por %p64, %p65
      %p67 = scmp.ne.s32.totalorder %s53, %s54
      %p68 = scmp.eq.s32.totalorder %s25, 1
      %p69 = por %p67, %p68
      %p71 = scmp.ne.s32.totalorder %s54, %s70
      %p72 = scmp.eq.s32.totalorder %s25, 0
      %p73 = por %p71, %p72
      %s74 = ssub.s32 %s26, %s45
      %s75 = ssub.s32 %s28, %s37
      %s76 = sor.u32 %s74, %s75
      %p77 = scmp.eq.s32.totalorder %s76, 0
      %s79 = sadd.s32 %s78, 1
      %s80 = scalar_select %p77, %s78, %s79
      %p83 = pneg %p77
      %p84 = scmp.eq.s32.totalorder %s19, 1
      %p85 = por %p83, %p84
      %p86 = scmp.ne.s32.totalorder %s78, %s81
      %p87 = scmp.eq.s32.totalorder %s19, 0
      %p88 = por %p86, %p87
      %p89 = scmp.ne.s32.totalorder %s78, %s81
      %p90 = scmp.eq.s32.totalorder %s24, 1
      %p91 = por %p89, %p90
      %p92 = scmp.ne.s32.totalorder %s81, %s82
      %p93 = scmp.eq.s32.totalorder %s24, 0
      %p94 = por %p92, %p93
      %p95 = scmp.ne.s32.totalorder %s81, %s82
      %p96 = scmp.eq.s32.totalorder %s25, 1
      %p97 = por %p95, %p96
      %p99 = scmp.ne.s32.totalorder %s82, %s98
      %p100 = scmp.eq.s32.totalorder %s25, 0
      %p101 = por %p99, %p100
      %s103 = sadd.s32 %s102, 1
      %p106 = scmp.eq.s32.totalorder %s19, 1
      %p107 = scmp.ne.s32.totalorder %s102, %s104
      %p108 = scmp.eq.s32.totalorder %s19, 0
      %p109 = por %p107, %p108
      %p110 = scmp.ne.s32.totalorder %s102, %s104
      %p111 = scmp.eq.s32.totalorder %s24, 1
      %p112 = por %p110, %p111
      %p113 = scmp.ne.s32.totalorder %s104, %s105
      %p114 = scmp.eq.s32.totalorder %s24, 0
      %p115 = por %p113, %p114
      %p116 = scmp.ne.s32.totalorder %s104, %s105
      %p117 = scmp.eq.s32.totalorder %s25, 1
      %p118 = por %p116, %p117
      %p120 = scmp.ne.s32.totalorder %s105, %s119
      %p121 = scmp.eq.s32.totalorder %s25, 0
      %p122 = por %p120, %p121
      %s124 = sadd.s32 %s123, 1
      %p127 = scmp.eq.s32.totalorder %s19, 1
      %p128 = scmp.ne.s32.totalorder %s123, %s125
      %p129 = scmp.eq.s32.totalorder %s19, 0
      %p130 = por %p128, %p129
      %p131 = scmp.ne.s32.totalorder %s123, %s125
      %p132 = scmp.eq.s32.totalorder %s24, 1
      %p133 = por %p131, %p132
      %p134 = scmp.ne.s32.totalorder %s125, %s126
      %p135 = scmp.eq.s32.totalorder %s24, 0
      %p136 = por %p134, %p135
      %p137 = scmp.ne.s32.totalorder %s125, %s126
      %p138 = scmp.eq.s32.totalorder %s25, 1
      %p139 = por %p137, %p138
      %p141 = scmp.ne.s32.totalorder %s126, %s140
      %p142 = scmp.eq.s32.totalorder %s25, 0
      %p143 = por %p141, %p142
      %s145 = sadd.s32 %s144, 1
      %p148 = scmp.eq.s32.totalorder %s19, 1
      %p149 = scmp.ne.s32.totalorder %s144, %s146
      %p150 = scmp.eq.s32.totalorder %s19, 0
      %p151 = por %p149, %p150
      %p152 = scmp.ne.s32.totalorder %s144, %s146
      %p153 = scmp.eq.s32.totalorder %s24, 1
      %p154 = por %p152, %p153
      %p155 = scmp.ne.s32.totalorder %s146, %s147
      %p156 = scmp.eq.s32.totalorder %s24, 0
      %p157 = por %p155, %p156
      %p158 = scmp.ne.s32.totalorder %s146, %s147
      %p159 = scmp.eq.s32.totalorder %s25, 1
      %p160 = por %p158, %p159
      %p162 = scmp.ne.s32.totalorder %s147, %s161
      %p163 = scmp.eq.s32.totalorder %s25, 0
      %p164 = por %p162, %p163
      %s166 = sadd.s32 %s165, 1
      %p169 = scmp.eq.s32.totalorder %s19, 1
      %p170 = scmp.ne.s32.totalorder %s165, %s167
      %p171 = scmp.eq.s32.totalorder %s19, 0
      %p172 = por %p170, %p171
      %p173 = scmp.ne.s32.totalorder %s165, %s167
      %p174 = scmp.eq.s32.totalorder %s24, 1
      %p175 = por %p173, %p174
      %p176 = scmp.ne.s32.totalorder %s167, %s168
      %p177 = scmp.eq.s32.totalorder %s24, 0
      %p178 = por %p176, %p177
      %p179 = scmp.ne.s32.totalorder %s167, %s168
      %p180 = scmp.eq.s32.totalorder %s25, 1
      %p181 = por %p179, %p180
      %p183 = scmp.ne.s32.totalorder %s168, %s182
      %p184 = scmp.eq.s32.totalorder %s25, 0
      %p185 = por %p183, %p184
      %s187 = sadd.s32 %s186, 1
      %p190 = scmp.eq.s32.totalorder %s19, 1
      %p191 = scmp.ne.s32.totalorder %s186, %s188
      %p192 = scmp.eq.s32.totalorder %s19, 0
      %p193 = por %p191, %p192
      %p194 = scmp.ne.s32.totalorder %s186, %s188
      %p195 = scmp.eq.s32.totalorder %s24, 1
      %p196 = por %p194, %p195
      %p197 = scmp.ne.s32.totalorder %s188, %s189
      %p198 = scmp.eq.s32.totalorder %s24, 0
      %p199 = por %p197, %p198
      %p200 = scmp.ne.s32.totalorder %s188, %s189
      %p201 = scmp.eq.s32.totalorder %s25, 1
      %p202 = por %p200, %p201
      %p204 = scmp.ne.s32.totalorder %s189, %s203
      %p205 = scmp.eq.s32.totalorder %s25, 0
      %p206 = por %p204, %p205
      %s208 = sadd.s32 %s207, 1
      %p211 = scmp.eq.s32.totalorder %s19, 1
      %p212 = scmp.ne.s32.totalorder %s207, %s209
      %p213 = scmp.eq.s32.totalorder %s19, 0
      %p214 = por %p212, %p213
      %p215 = scmp.ne.s32.totalorder %s207, %s209
      %p216 = scmp.eq.s32.totalorder %s24, 1
      %p217 = por %p215, %p216
      %p218 = scmp.ne.s32.totalorder %s209, %s210
      %p219 = scmp.eq.s32.totalorder %s24, 0
      %p220 = por %p218, %p219
      %p221 = scmp.ne.s32.totalorder %s209, %s210
      %p222 = scmp.eq.s32.totalorder %s25, 1
      %p223 = por %p221, %p222
      %p225 = scmp.ne.s32.totalorder %s210, %s224
      %p226 = scmp.eq.s32.totalorder %s25, 0
      %p227 = por %p225, %p226
      %s229 = sadd.s32 %s228, 1
      %p232 = scmp.eq.s32.totalorder %s19, 1
      %p233 = scmp.ne.s32.totalorder %s228, %s230
      %p234 = scmp.eq.s32.totalorder %s19, 0
      %p235 = por %p233, %p234
      %p236 = scmp.ne.s32.totalorder %s228, %s230
      %p237 = scmp.eq.s32.totalorder %s24, 1
      %p238 = por %p236, %p237
      %p239 = scmp.ne.s32.totalorder %s230, %s231
      %p240 = scmp.eq.s32.totalorder %s24, 0
      %p241 = por %p239, %p240
      %p242 = scmp.ne.s32.totalorder %s230, %s231
      %p243 = scmp.eq.s32.totalorder %s25, 1
      %p244 = por %p242, %p243
      %p246 = scmp.ne.s32.totalorder %s231, %s245
      %p247 = scmp.eq.s32.totalorder %s25, 0
      %p248 = por %p246, %p247
      %s250 = sadd.s32 %s249, 1
      %p253 = scmp.eq.s32.totalorder %s19, 1
      %p254 = scmp.ne.s32.totalorder %s249, %s251
      %p255 = scmp.eq.s32.totalorder %s19, 0
      %p256 = por %p254, %p255
      %p257 = scmp.ne.s32.totalorder %s249, %s251
      %p258 = scmp.eq.s32.totalorder %s24, 1
      %p259 = por %p257, %p258
      %p260 = scmp.ne.s32.totalorder %s251, %s252
      %p261 = scmp.eq.s32.totalorder %s24, 0
      %p262 = por %p260, %p261
      %p263 = scmp.ne.s32.totalorder %s251, %s252
      %p264 = scmp.eq.s32.totalorder %s25, 1
      %p265 = por %p263, %p264
      %p267 = scmp.ne.s32.totalorder %s252, %s266
      %p268 = scmp.eq.s32.totalorder %s25, 0
      %p269 = por %p267, %p268
      %s270 = ssub.s32 %s26, %s45
      %s271 = ssub.s32 %s27, %s41
      %s272 = sor.u32 %s270, %s271
      %p273 = scmp.eq.s32.totalorder %s272, 0
      %s275 = sadd.s32 %s274, 1
      %s276 = scalar_select %p273, %s274, %s275
      %p279 = pneg %p273
      %p280 = scmp.eq.s32.totalorder %s19, 1
      %p281 = por %p279, %p280
      %p282 = scmp.ne.s32.totalorder %s274, %s277
      %p283 = scmp.eq.s32.totalorder %s19, 0
      %p284 = por %p282, %p283
      %p285 = scmp.ne.s32.totalorder %s274, %s277
      %p286 = scmp.eq.s32.totalorder %s24, 1
      %p287 = por %p285, %p286
      %p288 = scmp.ne.s32.totalorder %s277, %s278
      %p289 = scmp.eq.s32.totalorder %s24, 0
      %p290 = por %p288, %p289
      %p291 = scmp.ne.s32.totalorder %s277, %s278
      %p292 = scmp.eq.s32.totalorder %s25, 1
      %p293 = por %p291, %p292
      %p295 = scmp.ne.s32.totalorder %s278, %s294
      %p296 = scmp.eq.s32.totalorder %s25, 0
      %p297 = por %p295, %p296
      %p298 = scmp.le.s32.totalorder 1, %s19
      %p299 = scmp.lt.s32.totalorder %s19, 3
      %p300 = pnand %p298, %p299
      %p301 = pneg %p300
      // Predicated region
      $region9: #{tpu_custom_call.1} parent=5 // pred_check
        _
      $region10: #{tpu_custom_call.1} parent=5 // pred_check_branch
        %303 = sbr.rel (%p300) target = $region12
      $region11: #{tpu_custom_call.1} parent=5 // pred_region
        %s304 = ssub.s32 %s19, 1
        // Predicated region
        $region13: #{tpu_custom_call.1} parent=11 // pred_check
          %p305 = pneg %p115
        $region14: #{tpu_custom_call.1} parent=11 // pred_check_branch
          %307 = sbr.rel (%p305) target = $region16
        $region15: #{tpu_custom_call.1} parent=11 // pred_region
          _
        $region16: #{tpu_custom_call.1} parent=11 // pred_fallthru
          _
        // Predicated region
        $region17: #{tpu_custom_call.1} parent=11 // pred_check
          %p308 = pneg %p136
        $region18: #{tpu_custom_call.1} parent=11 // pred_check_branch
          %310 = sbr.rel (%p308) target = $region20
        $region19: #{tpu_custom_call.1} parent=11 // pred_region
          _
        $region20: #{tpu_custom_call.1} parent=11 // pred_fallthru
          _
        // Predicated region
        $region21: #{tpu_custom_call.1} parent=11 // pred_check
          %p311 = pneg %p157
        $region22: #{tpu_custom_call.1} parent=11 // pred_check_branch
          %313 = sbr.rel (%p311) target = $region24
        $region23: #{tpu_custom_call.1} parent=11 // pred_region
          _
        $region24: #{tpu_custom_call.1} parent=11 // pred_fallthru
          _
        // Predicated region
        $region25: #{tpu_custom_call.1} parent=11 // pred_check
          %p314 = pneg %p178
        $region26: #{tpu_custom_call.1} parent=11 // pred_check_branch
          %316 = sbr.rel (%p314) target = $region28
        $region27: #{tpu_custom_call.1} parent=11 // pred_region
          _
        $region28: #{tpu_custom_call.1} parent=11 // pred_fallthru
          _
        // Predicated region
        $region29: #{tpu_custom_call.1} parent=11 // pred_check
          %p317 = pneg %p199
        $region30: #{tpu_custom_call.1} parent=11 // pred_check_branch
          %319 = sbr.rel (%p317) target = $region32
        $region31: #{tpu_custom_call.1} parent=11 // pred_region
          _
        $region32: #{tpu_custom_call.1} parent=11 // pred_fallthru
          _
        // Predicated region
        $region33: #{tpu_custom_call.1} parent=11 // pred_check
          %p320 = pneg %p220
        $region34: #{tpu_custom_call.1} parent=11 // pred_check_branch
          %322 = sbr.rel (%p320) target = $region36
        $region35: #{tpu_custom_call.1} parent=11 // pred_region
          _
        $region36: #{tpu_custom_call.1} parent=11 // pred_fallthru
          _
        // Predicated region
        $region37: #{tpu_custom_call.1} parent=11 // pred_check
          %p323 = pneg %p241
        $region38: #{tpu_custom_call.1} parent=11 // pred_check_branch
          %325 = sbr.rel (%p323) target = $region40
        $region39: #{tpu_custom_call.1} parent=11 // pred_region
          _
        $region40: #{tpu_custom_call.1} parent=11 // pred_fallthru
          _
        // Predicated region
        $region41: #{tpu_custom_call.1} parent=11 // pred_check
          %p326 = pneg %p262
        $region42: #{tpu_custom_call.1} parent=11 // pred_check_branch
          %328 = sbr.rel (%p326) target = $region44
        $region43: #{tpu_custom_call.1} parent=11 // pred_region
          _
        $region44: #{tpu_custom_call.1} parent=11 // pred_fallthru
          _
      $region12: #{tpu_custom_call.1} parent=5 // pred_fallthru
        _
      %p329 = scmp.lt.s32.totalorder %s19, 2
      // Predicated region
      $region45: #{tpu_custom_call.1} parent=5 // pred_check
        %p330 = pneg %p329
      $region46: #{tpu_custom_call.1} parent=5 // pred_check_branch
        %332 = sbr.rel (%p330) target = $region48
      $region47: #{tpu_custom_call.1} parent=5 // pred_region
        // Predicated region
        $region49: #{tpu_custom_call.1} parent=47 // pred_check
          %p333 = pneg %p60
        $region50: #{tpu_custom_call.1} parent=47 // pred_check_branch
          %335 = sbr.rel (%p333) target = $region52
        $region51: #{tpu_custom_call.1} parent=47 // pred_region
          %p336 = scmp.lt.s32.totalorder %s26, 1
          %s337 = scalar_select %p336, %s26, 1
          %p338 = scmp.lt.s32.totalorder %s27, 0
          %s339 = scalar_select %p338, %s27, 0
          %s340 = sadd.s32 %s339, %s337
          %s341 = smul.addr %s340, 8
          %s342 = scalar_lea.vmem %s0, %s341
        $region52: #{tpu_custom_call.1} parent=47 // pred_fallthru
          _
        // Predicated region
        $region53: #{tpu_custom_call.1} parent=47 // pred_check
          %p343 = pneg %p88
        $region54: #{tpu_custom_call.1} parent=47 // pred_check_branch
          %345 = sbr.rel (%p343) target = $region56
        $region55: #{tpu_custom_call.1} parent=47 // pred_region
          %p346 = scmp.lt.s32.totalorder %s26, 1
          %s347 = scalar_select %p346, %s26, 1
          %p348 = scmp.lt.s32.totalorder %s28, 0
          %s349 = scalar_select %p348, %s28, 0
          %s350 = sadd.s32 %s349, %s347
          %s351 = smul.addr %s350, 8
          %s352 = scalar_lea.vmem %s1, %s351
        $region56: #{tpu_custom_call.1} parent=47 // pred_fallthru
          _
      $region48: #{tpu_custom_call.1} parent=5 // pred_fallthru
        _
      %p353 = scmp.le.s32.totalorder 1, %s19
      %p354 = scmp.lt.s32.totalorder %s19, 3
      %p355 = pnand %p353, %p354
      %p356 = pneg %p355
      // Predicated region
      $region57: #{tpu_custom_call.1} parent=5 // pred_check
        _
      $region58: #{tpu_custom_call.1} parent=5 // pred_check_branch
        %358 = sbr.rel (%p355) target = $region60
      $region59: #{tpu_custom_call.1} parent=5 // pred_region
        %s359 = ssub.s32 %s19, 1
        %p360 = scmp.lt.s32.totalorder %s29, 1
        %s361 = scalar_select %p360, %s29, 1
        %p362 = scmp.lt.s32.totalorder %s30, 0
        %s363 = scalar_select %p362, %s30, 0
        %s364 = sadd.s32 %s363, %s361
        %s365 = smul.addr %s364, 8
        %s366 = scalar_lea.vmem %s0, %s365
        %p367 = pneg %p66
        %p368 = pneg %p63
        %p369 = scmp.lt.s32.totalorder %s29, 1
        %s370 = scalar_select %p369, %s29, 1
        %p371 = scmp.lt.s32.totalorder %s31, 0
        %s372 = scalar_select %p371, %s31, 0
        %s373 = sadd.s32 %s372, %s370
        %s374 = smul.addr %s373, 8
        %s375 = scalar_lea.vmem %s1, %s374
        %p376 = pneg %p94
        %p377 = pneg %p91
        %p378 = pneg %p115
        %p379 = pneg %p112
        %p380 = pneg %p136
        %p381 = pneg %p133
        %p382 = pneg %p157
        %p383 = pneg %p154
        %p384 = pneg %p178
        %p385 = pneg %p175
        %p386 = pneg %p199
        %p387 = pneg %p196
        %p388 = pneg %p220
        %p389 = pneg %p217
        %p390 = pneg %p241
        %p391 = pneg %p238
        %p392 = pneg %p262
        %p393 = pneg %p259
        %p394 = pneg %p290
        %p395 = pneg %p287
        %s396 = sand.u32 %s277, 1
        %s397 = scalar_lea.sflag [#allocation7], %s396
        %s398 = sand.u32 %s277, 1
        %s399 = smul.addr %s398, 8
        %s400 = scalar_lea.vmem [#allocation6], %s399
        %p401 = scmp.lt.s32.totalorder %s29, 1
        %s402 = scalar_select %p401, %s29, 1
        %p403 = scmp.lt.s32.totalorder %s30, 0
        %s404 = scalar_select %p403, %s30, 0
        %s405 = sadd.s32 %s404, %s402
        %s406 = smul.addr %s405, 8
        %s407 = scalar_lea.vmem %s0, %s406
        %p408 = scmp.lt.s32.totalorder %s29, 1
        %s409 = scalar_select %p408, %s29, 1
        %p410 = scmp.lt.s32.totalorder %s31, 0
        %s411 = scalar_select %p410, %s31, 0
        %s412 = sadd.s32 %s411, %s409
        %s413 = smul.addr %s412, 8
        %s414 = scalar_lea.vmem %s1, %s413
        %p416 = scmp.eq.s32.totalorder %s31, 0
        // Predicated region
        $region61: #{tpu_custom_call.1} parent=59 // pred_check
          %p417 = pneg %p416
        $region62: #{tpu_custom_call.1} parent=59 // pred_check_branch
          %419 = sbr.rel (%p417) target = $region64
        $region63: #{tpu_custom_call.1} parent=59 // pred_region
          %v420 = vld [vmem:[%s407] sm:$0xff]
          %v421 = vpack.c.bf16 %v420, %v420
          %v422 = vld [vmem:[%s2] sm:$0xf]
          %v423 = vld [vmem:[%s2 + $0x4] sm:$0xf]
          %v424 = vld [vmem:[%s2 + $0x8] sm:$0xf]
          %v425 = vld [vmem:[%s2 + $0xc] sm:$0xf]
          %v426 = vld [vmem:[%s2 + $0x10] sm:$0xf]
          %v427 = vld [vmem:[%s2 + $0x14] sm:$0xf]
          %v428 = vld [vmem:[%s2 + $0x18] sm:$0xf]
          %v429 = vld [vmem:[%s2 + $0x1c] sm:$0xf]
          %v430 = vld [vmem:[%s2 + $0x20] sm:$0xf]
          %v431 = vld [vmem:[%s2 + $0x24] sm:$0xf]
          %v432 = vld [vmem:[%s2 + $0x28] sm:$0xf]
          %v433 = vld [vmem:[%s2 + $0x2c] sm:$0xf]
          %v434 = vld [vmem:[%s2 + $0x30] sm:$0xf]
          %v435 = vld [vmem:[%s2 + $0x34] sm:$0xf]
          %v436 = vld [vmem:[%s2 + $0x38] sm:$0xf]
          %v437 = vld [vmem:[%s2 + $0x3c] sm:$0xf]
          %v438 = vld [vmem:[%s3] sm:$0x1]
          %v439 = vld [vmem:[%s3 + $0x1] sm:$0x1]
          %v440 = vld [vmem:[%s3 + $0x2] sm:$0x1]
          %v441 = vld [vmem:[%s3 + $0x3] sm:$0x1]
          %v446 = vlaneseq
          %v447 = vshrl.u32 %v446, 7
          %v448 = vsub.s32 0, %v447
          %v449 = vrot.slane %v438, %v448
          %v450 = vlaneseq
          %v451 = vshrl.u32 %v450, 7
          %v452 = vsub.s32 0, %v451
          %v453 = vrot.slane %v439, %v452
          %v454 = vlaneseq
          %v455 = vshrl.u32 %v454, 7
          %v456 = vsub.s32 0, %v455
          %v457 = vrot.slane %v440, %v456
          %v458 = vlaneseq
          %v459 = vshrl.u32 %v458, 7
          %v460 = vsub.s32 0, %v459
          %v461 = vrot.slane %v441, %v460
          %v470 = vunpack.c.l.b16 %v422
          %v471 = vunpack.c.l.b16 %v423
          %v472 = vunpack.c.l.b16 %v424
          %v473 = vunpack.c.l.b16 %v425
          %v474 = vpack.c.b16 %v471, %v470
          %v475 = vpack.c.b16 %v473, %v472
          %vm478 = vcmask 261120
          %v480 = vsel %vm478, %v421, 0
          %482 = vmatprep.subr.bf16.mxu0 0
          %483 = vmatpush1.bf16.msra.mxu0 %v474
          %484 = vmatprep.subr.bf16.mxu0 0
          %485 = vmatpush1.bf16.msra.mxu0 %v475
          %486 = vmatprep.subr.bf16.mxu0 0
          %487 = vmatpush1.bf16.msra.mxu0 0
          %488 = vmatprep.subr.bf16.mxu0 0
          %489 = vmatpush1.bf16.msra.mxu0 0
          %490 = vmatprep.subr.bf16.mxu0 0
          %491 = vmatpush1.bf16.msra.mxu0 0
          %492 = vmatprep.subr.bf16.mxu0 0
          %493 = vmatpush1.bf16.msra.mxu0 0
          %494 = vmatprep.subr.bf16.mxu0 0
          %495 = vmatpush1.bf16.msra.mxu0 0
          %496 = vmatprep.subr.bf16.mxu0 0
          %497 = vmatpush1.bf16.msra.mxu0 0
          %498 = vmatprep.subr.bf16.mxu0 0
          %499 = vmatpush1.bf16.msra.mxu0 0
          %500 = vmatprep.subr.bf16.mxu0 0
          %501 = vmatpush1.bf16.msra.mxu0 0
          %502 = vmatprep.subr.bf16.mxu0 0
          %503 = vmatpush1.bf16.msra.mxu0 0
          %504 = vmatprep.subr.bf16.mxu0 0
          %505 = vmatpush1.bf16.msra.mxu0 0
          %506 = vmatprep.subr.bf16.mxu0 0
          %507 = vmatpush1.bf16.msra.mxu0 0
          %508 = vmatprep.subr.bf16.mxu0 0
          %509 = vmatpush1.bf16.msra.mxu0 0
          %510 = vmatprep.subr.bf16.mxu0 0
          %511 = vmatpush1.bf16.msra.mxu0 0
          %512 = vmatprep.subr.bf16.mxu0 0
          %513 = vmatpush1.bf16.msra.mxu0 0
          %514 = vmatprep.mubr.bf16.mxu0 0
          %515 = vmatmul.mubr.bf16.gmra.mrb[0].mxu0 %v480
          %v516 = vpop.f32.mrb[0].mxu0
          %v517 = vadd.f32 %v449, %v516
          %v518 = vpop.f32.mrb[0].mxu0
          %v519 = vpop.f32.mrb[0].mxu0
          %v520 = vpop.f32.mrb[0].mxu0
          %521 = vdwg.mxu0
          %v526 = vunpack.c.l.b16 %v426
          %v527 = vunpack.c.l.b16 %v427
          %v528 = vunpack.c.l.b16 %v428
          %v529 = vunpack.c.l.b16 %v429
          %v530 = vpack.c.b16 %v527, %v526
          %v531 = vpack.c.b16 %v529, %v528
          %534 = vmatprep.subr.bf16.mxu0 0
          %535 = vmatpush1.bf16.msra.mxu0 %v530
          %536 = vmatprep.subr.bf16.mxu0 0
          %537 = vmatpush1.bf16.msra.mxu0 %v531
          %538 = vmatprep.subr.bf16.mxu0 0
          %539 = vmatpush1.bf16.msra.mxu0 0
          %540 = vmatprep.subr.bf16.mxu0 0
          %541 = vmatpush1.bf16.msra.mxu0 0
          %542 = vmatprep.subr.bf16.mxu0 0
          %543 = vmatpush1.bf16.msra.mxu0 0
          %544 = vmatprep.subr.bf16.mxu0 0
          %545 = vmatpush1.bf16.msra.mxu0 0
          %546 = vmatprep.subr.bf16.mxu0 0
          %547 = vmatpush1.bf16.msra.mxu0 0
          %548 = vmatprep.subr.bf16.mxu0 0
          %549 = vmatpush1.bf16.msra.mxu0 0
          %550 = vmatprep.subr.bf16.mxu0 0
          %551 = vmatpush1.bf16.msra.mxu0 0
          %552 = vmatprep.subr.bf16.mxu0 0
          %553 = vmatpush1.bf16.msra.mxu0 0
          %554 = vmatprep.subr.bf16.mxu0 0
          %555 = vmatpush1.bf16.msra.mxu0 0
          %556 = vmatprep.subr.bf16.mxu0 0
          %557 = vmatpush1.bf16.msra.mxu0 0
          %558 = vmatprep.subr.bf16.mxu0 0
          %559 = vmatpush1.bf16.msra.mxu0 0
          %560 = vmatprep.subr.bf16.mxu0 0
          %561 = vmatpush1.bf16.msra.mxu0 0
          %562 = vmatprep.subr.bf16.mxu0 0
          %563 = vmatpush1.bf16.msra.mxu0 0
          %564 = vmatprep.subr.bf16.mxu0 0
          %565 = vmatpush1.bf16.msra.mxu0 0
          %566 = vmatprep.mubr.bf16.mxu0 0
          %567 = vmatmul.mubr.bf16.gmra.mrb[0].mxu0 %v480
          %v568 = vpop.f32.mrb[0].mxu0
          %v569 = vadd.f32 %v453, %v568
          %v570 = vpop.f32.mrb[0].mxu0
          %v571 = vpop.f32.mrb[0].mxu0
          %v572 = vpop.f32.mrb[0].mxu0
          %573 = vdwg.mxu0
          %v578 = vunpack.c.l.b16 %v430
          %v579 = vunpack.c.l.b16 %v431
          %v580 = vunpack.c.l.b16 %v432
          %v581 = vunpack.c.l.b16 %v433
          %v582 = vpack.c.b16 %v579, %v578
          %v583 = vpack.c.b16 %v581, %v580
          %586 = vmatprep.subr.bf16.mxu0 0
          %587 = vmatpush1.bf16.msra.mxu0 %v582
          %588 = vmatprep.subr.bf16.mxu0 0
          %589 = vmatpush1.bf16.msra.mxu0 %v583
          %590 = vmatprep.subr.bf16.mxu0 0
          %591 = vmatpush1.bf16.msra.mxu0 0
          %592 = vmatprep.subr.bf16.mxu0 0
          %593 = vmatpush1.bf16.msra.mxu0 0
          %594 = vmatprep.subr.bf16.mxu0 0
          %595 = vmatpush1.bf16.msra.mxu0 0
          %596 = vmatprep.subr.bf16.mxu0 0
          %597 = vmatpush1.bf16.msra.mxu0 0
          %598 = vmatprep.subr.bf16.mxu0 0
          %599 = vmatpush1.bf16.msra.mxu0 0
          %600 = vmatprep.subr.bf16.mxu0 0
          %601 = vmatpush1.bf16.msra.mxu0 0
          %602 = vmatprep.subr.bf16.mxu0 0
          %603 = vmatpush1.bf16.msra.mxu0 0
          %604 = vmatprep.subr.bf16.mxu0 0
          %605 = vmatpush1.bf16.msra.mxu0 0
          %606 = vmatprep.subr.bf16.mxu0 0
          %607 = vmatpush1.bf16.msra.mxu0 0
          %608 = vmatprep.subr.bf16.mxu0 0
          %609 = vmatpush1.bf16.msra.mxu0 0
          %610 = vmatprep.subr.bf16.mxu0 0
          %611 = vmatpush1.bf16.msra.mxu0 0
          %612 = vmatprep.subr.bf16.mxu0 0
          %613 = vmatpush1.bf16.msra.mxu0 0
          %614 = vmatprep.subr.bf16.mxu0 0
          %615 = vmatpush1.bf16.msra.mxu0 0
          %616 = vmatprep.subr.bf16.mxu0 0
          %617 = vmatpush1.bf16.msra.mxu0 0
          %618 = vmatprep.mubr.bf16.mxu0 0
          %619 = vmatmul.mubr.bf16.gmra.mrb[0].mxu0 %v480
          %v620 = vpop.f32.mrb[0].mxu0
          %v621 = vadd.f32 %v457, %v620
          %v622 = vpop.f32.mrb[0].mxu0
          %v623 = vpop.f32.mrb[0].mxu0
          %v624 = vpop.f32.mrb[0].mxu0
          %625 = vdwg.mxu0
          %v630 = vunpack.c.l.b16 %v434
          %v631 = vunpack.c.l.b16 %v435
          %v632 = vunpack.c.l.b16 %v436
          %v633 = vunpack.c.l.b16 %v437
          %v634 = vpack.c.b16 %v631, %v630
          %v635 = vpack.c.b16 %v633, %v632
          %638 = vmatprep.subr.bf16.mxu0 0
          %639 = vmatpush1.bf16.msra.mxu0 %v634
          %640 = vmatprep.subr.bf16.mxu0 0
          %641 = vmatpush1.bf16.msra.mxu0 %v635
          %642 = vmatprep.subr.bf16.mxu0 0
          %643 = vmatpush1.bf16.msra.mxu0 0
          %644 = vmatprep.subr.bf16.mxu0 0
          %645 = vmatpush1.bf16.msra.mxu0 0
          %646 = vmatprep.subr.bf16.mxu0 0
          %647 = vmatpush1.bf16.msra.mxu0 0
          %648 = vmatprep.subr.bf16.mxu0 0
          %649 = vmatpush1.bf16.msra.mxu0 0
          %650 = vmatprep.subr.bf16.mxu0 0
          %651 = vmatpush1.bf16.msra.mxu0 0
          %652 = vmatprep.subr.bf16.mxu0 0
          %653 = vmatpush1.bf16.msra.mxu0 0
          %654 = vmatprep.subr.bf16.mxu0 0
          %655 = vmatpush1.bf16.msra.mxu0 0
          %656 = vmatprep.subr.bf16.mxu0 0
          %657 = vmatpush1.bf16.msra.mxu0 0
          %658 = vmatprep.subr.bf16.mxu0 0
          %659 = vmatpush1.bf16.msra.mxu0 0
          %660 = vmatprep.subr.bf16.mxu0 0
          %661 = vmatpush1.bf16.msra.mxu0 0
          %662 = vmatprep.subr.bf16.mxu0 0
          %663 = vmatpush1.bf16.msra.mxu0 0
          %664 = vmatprep.subr.bf16.mxu0 0
          %665 = vmatpush1.bf16.msra.mxu0 0
          %666 = vmatprep.subr.bf16.mxu0 0
          %667 = vmatpush1.bf16.msra.mxu0 0
          %668 = vmatprep.subr.bf16.mxu0 0
          %669 = vmatpush1.bf16.msra.mxu0 0
          %670 = vmatprep.mubr.bf16.mxu0 0
          %671 = vmatmul.mubr.bf16.gmra.mrb[0].mxu0 %v480
          %v672 = vpop.f32.mrb[0].mxu0
          %v673 = vadd.f32 %v461, %v672
          %v674 = vpop.f32.mrb[0].mxu0
          %v675 = vpop.f32.mrb[0].mxu0
          %v676 = vpop.f32.mrb[0].mxu0
          %677 = vdwg.mxu0
          %v678 = vpack.c.bf16 %v517, %v517
          %v679 = vpack.c.bf16 %v569, %v569
          %v680 = vpack.c.bf16 %v621, %v621
          %v681 = vpack.c.bf16 %v673, %v673
          %vm682 = vcmask 60416
          %683 = vst.msk [vmem:[#allocation2] sm:$0xf] %vm682, %v678
          %684 = vst.msk [vmem:[#allocation2 + $0x4] sm:$0xf] %vm682, %v679
          %685 = vst.msk [vmem:[#allocation2 + $0x8] sm:$0xf] %vm682, %v680
          %686 = vst.msk [vmem:[#allocation2 + $0xc] sm:$0xf] %vm682, %v681
          %vm687 = vcmask 7168
          %688 = vst.msk [vmem:[#allocation3] sm:$0xff] %vm687, -inf
          %689 = vst.msk [vmem:[#allocation3 + $0x8] sm:$0xff] %vm687, -inf
          %690 = vst.msk [vmem:[#allocation3 + $0x10] sm:$0xff] %vm687, -inf
          %691 = vst.msk [vmem:[#allocation3 + $0x18] sm:$0xff] %vm687, -inf
          %692 = vst.msk [vmem:[#allocation4] sm:$0xff] %vm687, 0.0
          %693 = vst.msk [vmem:[#allocation4 + $0x8] sm:$0xff] %vm687, 0.0
          %694 = vst.msk [vmem:[#allocation4 + $0x10] sm:$0xff] %vm687, 0.0
          %695 = vst.msk [vmem:[#allocation4 + $0x18] sm:$0xff] %vm687, 0.0
          %vm696 = vcmask 64512
          %697 = vst.msk [vmem:[#allocation5] sm:$0xff] %vm696, 0.0
          %698 = vst.msk [vmem:[#allocation5 + $0x8] sm:$0xff] %vm696, 0.0
          %699 = vst.msk [vmem:[#allocation5 + $0x10] sm:$0xff] %vm696, 0.0
          %700 = vst.msk [vmem:[#allocation5 + $0x18] sm:$0xff] %vm696, 0.0
        $region64: #{tpu_custom_call.1} parent=59 // pred_fallthru
          _
        %s701 = smul.u32 %s31, 8
        %s702 = smul.u32 %s30, 8
        %s703 = sadd.s32 %s702, 7
        %p704 = scmp.le.s32.totalorder %s701, %s703
        // Predicated region
        $region65: #{tpu_custom_call.1} parent=59 // pred_check
          %p705 = pneg %p704
        $region66: #{tpu_custom_call.1} parent=59 // pred_check_branch
          %707 = sbr.rel (%p705) target = $region68
        $region67: #{tpu_custom_call.1} parent=59 // pred_region
          %v708 = vld [vmem:[%s414] sm:$0xff]
          %v709 = vpack.c.bf16 %v708, %v708
          %v710 = vld [vmem:[%s4] sm:$0xf]
          %v711 = vld [vmem:[%s4 + $0x4] sm:$0xf]
          %v712 = vld [vmem:[%s4 + $0x8] sm:$0xf]
          %v713 = vld [vmem:[%s4 + $0xc] sm:$0xf]
          %v714 = vld [vmem:[%s5] sm:$0x1]
          %v716 = vlaneseq
          %v717 = vshrl.u32 %v716, 7
          %v718 = vsub.s32 0, %v717
          %v719 = vrot.slane %v714, %v718
          %v725 = vunpack.c.l.b16 %v710
          %v726 = vunpack.c.l.b16 %v711
          %v727 = vunpack.c.l.b16 %v712
          %v728 = vunpack.c.l.b16 %v713
          %v729 = vpack.c.b16 %v726, %v725
          %v730 = vpack.c.b16 %v728, %v727
          %vm733 = vcmask 261120
          %v735 = vsel %vm733, %v709, 0
          %737 = vmatprep.subr.bf16.mxu0 0
          %738 = vmatpush1.bf16.msra.mxu0 %v729
          %739 = vmatprep.subr.bf16.mxu0 0
          %740 = vmatpush1.bf16.msra.mxu0 %v730
          %741 = vmatprep.subr.bf16.mxu0 0
          %742 = vmatpush1.bf16.msra.mxu0 0
          %743 = vmatprep.subr.bf16.mxu0 0
          %744 = vmatpush1.bf16.msra.mxu0 0
          %745 = vmatprep.subr.bf16.mxu0 0
          %746 = vmatpush1.bf16.msra.mxu0 0
          %747 = vmatprep.subr.bf16.mxu0 0
          %748 = vmatpush1.bf16.msra.mxu0 0
          %749 = vmatprep.subr.bf16.mxu0 0
          %750 = vmatpush1.bf16.msra.mxu0 0
          %751 = vmatprep.subr.bf16.mxu0 0
          %752 = vmatpush1.bf16.msra.mxu0 0
          %753 = vmatprep.subr.bf16.mxu0 0
          %754 = vmatpush1.bf16.msra.mxu0 0
          %755 = vmatprep.subr.bf16.mxu0 0
          %756 = vmatpush1.bf16.msra.mxu0 0
          %757 = vmatprep.subr.bf16.mxu0 0
          %758 = vmatpush1.bf16.msra.mxu0 0
          %759 = vmatprep.subr.bf16.mxu0 0
          %760 = vmatpush1.bf16.msra.mxu0 0
          %761 = vmatprep.subr.bf16.mxu0 0
          %762 = vmatpush1.bf16.msra.mxu0 0
          %763 = vmatprep.subr.bf16.mxu0 0
          %764 = vmatpush1.bf16.msra.mxu0 0
          %765 = vmatprep.subr.bf16.mxu0 0
          %766 = vmatpush1.bf16.msra.mxu0 0
          %767 = vmatprep.subr.bf16.mxu0 0
          %768 = vmatpush1.bf16.msra.mxu0 0
          %769 = vmatprep.mubr.bf16.mxu0 0
          %770 = vmatmul.mubr.bf16.gmra.mrb[0].mxu0 %v735
          %v771 = vpop.f32.mrb[0].mxu0
          %v772 = vadd.f32 %v719, %v771
          %v773 = vpop.f32.mrb[0].mxu0
          %v774 = vpop.f32.mrb[0].mxu0
          %v775 = vpop.f32.mrb[0].mxu0
          %776 = vdwg.mxu0
          %v777 = vpack.c.bf16 %v772, %v772
          %v778 = vld [vmem:[%s6] sm:$0xf]
          %v779 = vld [vmem:[%s6 + $0x4] sm:$0xf]
          %v780 = vld [vmem:[%s6 + $0x8] sm:$0xf]
          %v781 = vld [vmem:[%s6 + $0xc] sm:$0xf]
          %v782 = vld [vmem:[%s7] sm:$0x1]
          %v784 = vlaneseq
          %v785 = vshrl.u32 %v784, 7
          %v786 = vsub.s32 0, %v785
          %v787 = vrot.slane %v782, %v786
          %v793 = vunpack.c.l.b16 %v778
          %v794 = vunpack.c.l.b16 %v779
          %v795 = vunpack.c.l.b16 %v780
          %v796 = vunpack.c.l.b16 %v781
          %v797 = vpack.c.b16 %v794, %v793
          %v798 = vpack.c.b16 %v796, %v795
          %801 = vmatprep.subr.bf16.mxu0 0
          %802 = vmatpush1.bf16.msra.mxu0 %v797
          %803 = vmatprep.subr.bf16.mxu0 0
          %804 = vmatpush1.bf16.msra.mxu0 %v798
          %805 = vmatprep.subr.bf16.mxu0 0
          %806 = vmatpush1.bf16.msra.mxu0 0
          %807 = vmatprep.subr.bf16.mxu0 0
          %808 = vmatpush1.bf16.msra.mxu0 0
          %809 = vmatprep.subr.bf16.mxu0 0
          %810 = vmatpush1.bf16.msra.mxu0 0
          %811 = vmatprep.subr.bf16.mxu0 0
          %812 = vmatpush1.bf16.msra.mxu0 0
          %813 = vmatprep.subr.bf16.mxu0 0
          %814 = vmatpush1.bf16.msra.mxu0 0
          %815 = vmatprep.subr.bf16.mxu0 0
          %816 = vmatpush1.bf16.msra.mxu0 0
          %817 = vmatprep.subr.bf16.mxu0 0
          %818 = vmatpush1.bf16.msra.mxu0 0
          %819 = vmatprep.subr.bf16.mxu0 0
          %820 = vmatpush1.bf16.msra.mxu0 0
          %821 = vmatprep.subr.bf16.mxu0 0
          %822 = vmatpush1.bf16.msra.mxu0 0
          %823 = vmatprep.subr.bf16.mxu0 0
          %824 = vmatpush1.bf16.msra.mxu0 0
          %825 = vmatprep.subr.bf16.mxu0 0
          %826 = vmatpush1.bf16.msra.mxu0 0
          %827 = vmatprep.subr.bf16.mxu0 0
          %828 = vmatpush1.bf16.msra.mxu0 0
          %829 = vmatprep.subr.bf16.mxu0 0
          %830 = vmatpush1.bf16.msra.mxu0 0
          %831 = vmatprep.subr.bf16.mxu0 0
          %832 = vmatpush1.bf16.msra.mxu0 0
          %833 = vmatprep.mubr.bf16.mxu0 0
          %834 = vmatmul.mubr.bf16.gmra.mrb[0].mxu0 %v735
          %v835 = vpop.f32.mrb[0].mxu0
          %v836 = vadd.f32 %v787, %v835
          %v837 = vpop.f32.mrb[0].mxu0
          %v838 = vpop.f32.mrb[0].mxu0
          %v839 = vpop.f32.mrb[0].mxu0
          %840 = vdwg.mxu0
          %v841 = vpack.c.bf16 %v836, %v836
          %v842 = vld [vmem:[#allocation2] sm:$0xf]
          %v843 = vld [vmem:[#allocation2 + $0x4] sm:$0xf]
          %v844 = vld [vmem:[#allocation2 + $0x8] sm:$0xf]
          %v845 = vld [vmem:[#allocation2 + $0xc] sm:$0xf]
          %vm846 = vcmask 64512
          %v848 = vsel %vm846, %v842, 0
          %v851 = vsel %vm846, %v777, 0
          %853 = vmatprep.subr.bf16.mxu0 0
          %854 = vmatpush1.bf16.xpose.msra.mxu0 %v851
          %855 = vmatprep.subr.bf16.mxu0 0
          %856 = vmatpush1.bf16.xpose.msra.mxu0 0
          %857 = vmatprep.subr.bf16.mxu0 0
          %858 = vmatpush1.bf16.xpose.msra.mxu0 0
          %859 = vmatprep.subr.bf16.mxu0 0
          %860 = vmatpush1.bf16.xpose.msra.mxu0 0
          %861 = vmatprep.subr.bf16.mxu0 0
          %862 = vmatpush1.bf16.xpose.msra.mxu0 0
          %863 = vmatprep.subr.bf16.mxu0 0
          %864 = vmatpush1.bf16.xpose.msra.mxu0 0
          %865 = vmatprep.subr.bf16.mxu0 0
          %866 = vmatpush1.bf16.xpose.msra.mxu0 0
          %867 = vmatprep.subr.bf16.mxu0 0
          %868 = vmatpush1.bf16.xpose.msra.mxu0 0
          %869 = vmatprep.subr.bf16.mxu0 0
          %870 = vmatpush1.bf16.xpose.msra.mxu0 0
          %871 = vmatprep.subr.bf16.mxu0 0
          %872 = vmatpush1.bf16.xpose.msra.mxu0 0
          %873 = vmatprep.subr.bf16.mxu0 0
          %874 = vmatpush1.bf16.xpose.msra.mxu0 0
          %875 = vmatprep.subr.bf16.mxu0 0
          %876 = vmatpush1.bf16.xpose.msra.mxu0 0
          %877 = vmatprep.subr.bf16.mxu0 0
          %878 = vmatpush1.bf16.xpose.msra.mxu0 0
          %879 = vmatprep.subr.bf16.mxu0 0
          %880 = vmatpush1.bf16.xpose.msra.mxu0 0
          %881 = vmatprep.subr.bf16.mxu0 0
          %882 = vmatpush1.bf16.xpose.msra.mxu0 0
          %883 = vmatprep.subr.bf16.mxu0 0
          %884 = vmatpush1.bf16.xpose.msra.mxu0 0
          %885 = vmatprep.mubr.bf16.mxu0 0
          %886 = vmatmul.mubr.bf16.gmra.mrb[0].mxu0 %v848
          %v887 = vpop.f32.mrb[0].mxu0
          %v888 = vadd.f32 0.0, %v887
          %v889 = vpop.f32.mrb[0].mxu0
          %v890 = vpop.f32.mrb[0].mxu0
          %v891 = vpop.f32.mrb[0].mxu0
          %892 = vdwg.mxu0
          %v894 = vsel %vm846, %v843, 0
          %896 = vmatprep.subr.bf16.mxu0 0
          %897 = vmatpush1.bf16.xpose.msra.mxu0 %v851
          %898 = vmatprep.subr.bf16.mxu0 0
          %899 = vmatpush1.bf16.xpose.msra.mxu0 0
          %900 = vmatprep.subr.bf16.mxu0 0
          %901 = vmatpush1.bf16.xpose.msra.mxu0 0
          %902 = vmatprep.subr.bf16.mxu0 0
          %903 = vmatpush1.bf16.xpose.msra.mxu0 0
          %904 = vmatprep.subr.bf16.mxu0 0
          %905 = vmatpush1.bf16.xpose.msra.mxu0 0
          %906 = vmatprep.subr.bf16.mxu0 0
          %907 = vmatpush1.bf16.xpose.msra.mxu0 0
          %908 = vmatprep.subr.bf16.mxu0 0
          %909 = vmatpush1.bf16.xpose.msra.mxu0 0
          %910 = vmatprep.subr.bf16.mxu0 0
          %911 = vmatpush1.bf16.xpose.msra.mxu0 0
          %912 = vmatprep.subr.bf16.mxu0 0
          %913 = vmatpush1.bf16.xpose.msra.mxu0 0
          %914 = vmatprep.subr.bf16.mxu0 0
          %915 = vmatpush1.bf16.xpose.msra.mxu0 0
          %916 = vmatprep.subr.bf16.mxu0 0
          %917 = vmatpush1.bf16.xpose.msra.mxu0 0
          %918 = vmatprep.subr.bf16.mxu0 0
          %919 = vmatpush1.bf16.xpose.msra.mxu0 0
          %920 = vmatprep.subr.bf16.mxu0 0
          %921 = vmatpush1.bf16.xpose.msra.mxu0 0
          %922 = vmatprep.subr.bf16.mxu0 0
          %923 = vmatpush1.bf16.xpose.msra.mxu0 0
          %924 = vmatprep.subr.bf16.mxu0 0
          %925 = vmatpush1.bf16.xpose.msra.mxu0 0
          %926 = vmatprep.subr.bf16.mxu0 0
          %927 = vmatpush1.bf16.xpose.msra.mxu0 0
          %928 = vmatprep.mubr.bf16.mxu0 0
          %929 = vmatmul.mubr.bf16.gmra.mrb[0].mxu0 %v894
          %v930 = vpop.f32.mrb[0].mxu0
          %v931 = vadd.f32 0.0, %v930
          %v932 = vpop.f32.mrb[0].mxu0
          %v933 = vpop.f32.mrb[0].mxu0
          %v934 = vpop.f32.mrb[0].mxu0
          %935 = vdwg.mxu0
          %v937 = vsel %vm846, %v844, 0
          %939 = vmatprep.subr.bf16.mxu0 0
          %940 = vmatpush1.bf16.xpose.msra.mxu0 %v851
          %941 = vmatprep.subr.bf16.mxu0 0
          %942 = vmatpush1.bf16.xpose.msra.mxu0 0
          %943 = vmatprep.subr.bf16.mxu0 0
          %944 = vmatpush1.bf16.xpose.msra.mxu0 0
          %945 = vmatprep.subr.bf16.mxu0 0
          %946 = vmatpush1.bf16.xpose.msra.mxu0 0
          %947 = vmatprep.subr.bf16.mxu0 0
          %948 = vmatpush1.bf16.xpose.msra.mxu0 0
          %949 = vmatprep.subr.bf16.mxu0 0
          %950 = vmatpush1.bf16.xpose.msra.mxu0 0
          %951 = vmatprep.subr.bf16.mxu0 0
          %952 = vmatpush1.bf16.xpose.msra.mxu0 0
          %953 = vmatprep.subr.bf16.mxu0 0
          %954 = vmatpush1.bf16.xpose.msra.mxu0 0
          %955 = vmatprep.subr.bf16.mxu0 0
          %956 = vmatpush1.bf16.xpose.msra.mxu0 0
          %957 = vmatprep.subr.bf16.mxu0 0
          %958 = vmatpush1.bf16.xpose.msra.mxu0 0
          %959 = vmatprep.subr.bf16.mxu0 0
          %960 = vmatpush1.bf16.xpose.msra.mxu0 0
          %961 = vmatprep.subr.bf16.mxu0 0
          %962 = vmatpush1.bf16.xpose.msra.mxu0 0
          %963 = vmatprep.subr.bf16.mxu0 0
          %964 = vmatpush1.bf16.xpose.msra.mxu0 0
          %965 = vmatprep.subr.bf16.mxu0 0
          %966 = vmatpush1.bf16.xpose.msra.mxu0 0
          %967 = vmatprep.subr.bf16.mxu0 0
          %968 = vmatpush1.bf16.xpose.msra.mxu0 0
          %969 = vmatprep.subr.bf16.mxu0 0
          %970 = vmatpush1.bf16.xpose.msra.mxu0 0
          %971 = vmatprep.mubr.bf16.mxu0 0
          %972 = vmatmul.mubr.bf16.gmra.mrb[0].mxu0 %v937
          %v973 = vpop.f32.mrb[0].mxu0
          %v974 = vadd.f32 0.0, %v973
          %v975 = vpop.f32.mrb[0].mxu0
          %v976 = vpop.f32.mrb[0].mxu0
          %v977 = vpop.f32.mrb[0].mxu0
          %978 = vdwg.mxu0
          %v980 = vsel %vm846, %v845, 0
          %982 = vmatprep.subr.bf16.mxu0 0
          %983 = vmatpush1.bf16.xpose.msra.mxu0 %v851
          %984 = vmatprep.subr.bf16.mxu0 0
          %985 = vmatpush1.bf16.xpose.msra.mxu0 0
          %986 = vmatprep.subr.bf16.mxu0 0
          %987 = vmatpush1.bf16.xpose.msra.mxu0 0
          %988 = vmatprep.subr.bf16.mxu0 0
          %989 = vmatpush1.bf16.xpose.msra.mxu0 0
          %990 = vmatprep.subr.bf16.mxu0 0
          %991 = vmatpush1.bf16.xpose.msra.mxu0 0
          %992 = vmatprep.subr.bf16.mxu0 0
          %993 = vmatpush1.bf16.xpose.msra.mxu0 0
          %994 = vmatprep.subr.bf16.mxu0 0
          %995 = vmatpush1.bf16.xpose.msra.mxu0 0
          %996 = vmatprep.subr.bf16.mxu0 0
          %997 = vmatpush1.bf16.xpose.msra.mxu0 0
          %998 = vmatprep.subr.bf16.mxu0 0
          %999 = vmatpush1.bf16.xpose.msra.mxu0 0
          %1000 = vmatprep.subr.bf16.mxu0 0
          %1001 = vmatpush1.bf16.xpose.msra.mxu0 0
          %1002 = vmatprep.subr.bf16.mxu0 0
          %1003 = vmatpush1.bf16.xpose.msra.mxu0 0
          %1004 = vmatprep.subr.bf16.mxu0 0
          %1005 = vmatpush1.bf16.xpose.msra.mxu0 0
          %1006 = vmatprep.subr.bf16.mxu0 0
          %1007 = vmatpush1.bf16.xpose.msra.mxu0 0
          %1008 = vmatprep.subr.bf16.mxu0 0
          %1009 = vmatpush1.bf16.xpose.msra.mxu0 0
          %1010 = vmatprep.subr.bf16.mxu0 0
          %1011 = vmatpush1.bf16.xpose.msra.mxu0 0
          %1012 = vmatprep.subr.bf16.mxu0 0
          %1013 = vmatpush1.bf16.xpose.msra.mxu0 0
          %1014 = vmatprep.mubr.bf16.mxu0 0
          %1015 = vmatmul.mubr.bf16.gmra.mrb[0].mxu0 %v980
          %v1016 = vpop.f32.mrb[0].mxu0
          %v1017 = vadd.f32 0.0, %v1016
          %v1018 = vpop.f32.mrb[0].mxu0
          %v1019 = vpop.f32.mrb[0].mxu0
          %v1020 = vpop.f32.mrb[0].mxu0
          %1021 = vdwg.mxu0
          %v1022 = vlaneseq
          %v1023 = vshrl.u32 %v1022, 7
          %v1024 = vstv %s702
          %v1025 = vadd.s32 %v1024, %v1023
          %v1026 = vlaneseq
          %v1027 = vand.u32 %v1026, 127
          %v1028 = vstv %s701
          %v1029 = vadd.s32 %v1028, %v1027
          %vm1030 = vcmp.ge.s32.totalorder %v1025, %v1029
          %v1031 = vsel %vm1030, 1, 0
          %vm1032 = vcmp.eq.s32.totalorder %v1031, 1
          %v1033 = vsel %vm1032, %v888, -1e+30
          %v1034 = vsel %vm1032, %v931, -1e+30
          %v1035 = vsel %vm1032, %v974, -1e+30
          %v1036 = vsel %vm1032, %v1017, -1e+30
          %v1037 = vld [vmem:[#allocation3] sm:$0xff]
          %v1038 = vld [vmem:[#allocation3 + $0x8] sm:$0xff]
          %v1039 = vld [vmem:[#allocation3 + $0x10] sm:$0xff]
          %v1040 = vld [vmem:[#allocation3 + $0x18] sm:$0xff]
          %v1041 = vsel %vm846, %v1033, -inf
          %1042 = vmax.xlane.f32.xlu0 %v1041
          %v1043 = vpop.xlane.xlu0 %1042
          %v1044 = vsel %vm846, %v1034, -inf
          %1045 = vmax.xlane.f32.xlu0 %v1044
          %v1046 = vpop.xlane.xlu0 %1045
          %v1047 = vsel %vm846, %v1035, -inf
          %1048 = vmax.xlane.f32.xlu0 %v1047
          %v1049 = vpop.xlane.xlu0 %1048
          %v1050 = vsel %vm846, %v1036, -inf
          %1051 = vmax.xlane.f32.xlu0 %v1050
          %v1052 = vpop.xlane.xlu0 %1051
          %v1053 = vmax.f32 %v1037, %v1043
          %v1054 = vmax.f32 %v1038, %v1046
          %v1055 = vmax.f32 %v1039, %v1049
          %v1056 = vmax.f32 %v1040, %v1052
          %v1057 = vsub.f32 %v1037, %v1053
          %v1058 = vsub.f32 %v1038, %v1054
          %v1059 = vsub.f32 %v1039, %v1055
          %v1060 = vsub.f32 %v1040, %v1056
          %v1061 = vmul.f32 %v1057, 1.442695
          %v1062 = vpow.pop %v1061
          %v1063 = vmul.f32 %v1058, 1.442695
          %v1064 = vpow.pop %v1063
          %v1065 = vmul.f32 %v1059, 1.442695
          %v1066 = vpow.pop %v1065
          %v1067 = vmul.f32 %v1060, 1.442695
          %v1068 = vpow.pop %v1067
          %1070 = vset.pattern.permute.xlu0 0
          %1071 = vperm.xlu0 %1070, %v1053
          %v1072 = vpop.permute.xlu0 %1071
          %1075 = vset.pattern.permute.xlu0 0
          %1076 = vperm.xlu0 %1075, %v1054
          %v1077 = vpop.permute.xlu0 %1076
          %1080 = vset.pattern.permute.xlu0 0
          %1081 = vperm.xlu0 %1080, %v1055
          %v1082 = vpop.permute.xlu0 %1081
          %1085 = vset.pattern.permute.xlu0 0
          %1086 = vperm.xlu0 %1085, %v1056
          %v1087 = vpop.permute.xlu0 %1086
          %v1089 = vsub.f32 %v1033, %v1072
          %v1090 = vsub.f32 %v1034, %v1077
          %v1091 = vsub.f32 %v1035, %v1082
          %v1092 = vsub.f32 %v1036, %v1087
          %v1093 = vmul.f32 %v1089, 1.442695
          %v1094 = vpow.pop %v1093
          %v1095 = vmul.f32 %v1090, 1.442695
          %v1096 = vpow.pop %v1095
          %v1097 = vmul.f32 %v1091, 1.442695
          %v1098 = vpow.pop %v1097
          %v1099 = vmul.f32 %v1092, 1.442695
          %v1100 = vpow.pop %v1099
          %v1101 = vld [vmem:[#allocation4] sm:$0xff]
          %v1102 = vld [vmem:[#allocation4 + $0x8] sm:$0xff]
          %v1103 = vld [vmem:[#allocation4 + $0x10] sm:$0xff]
          %v1104 = vld [vmem:[#allocation4 + $0x18] sm:$0xff]
          %v1105 = vmul.f32 %v1062, %v1101
          %v1106 = vmul.f32 %v1064, %v1102
          %v1107 = vmul.f32 %v1066, %v1103
          %v1108 = vmul.f32 %v1068, %v1104
          %v1109 = vsel %vm846, %v1094, 0.0
          %1110 = vadd.xlane.f32.xlu0 %v1109
          %v1111 = vpop.xlane.xlu0 %1110
          %v1112 = vsel %vm846, %v1096, 0.0
          %1113 = vadd.xlane.f32.xlu0 %v1112
          %v1114 = vpop.xlane.xlu0 %1113
          %v1115 = vsel %vm846, %v1098, 0.0
          %1116 = vadd.xlane.f32.xlu0 %v1115
          %v1117 = vpop.xlane.xlu0 %1116
          %v1118 = vsel %vm846, %v1100, 0.0
          %1119 = vadd.xlane.f32.xlu0 %v1118
          %v1120 = vpop.xlane.xlu0 %1119
          %v1121 = vadd.f32 %v1105, %v1111
          %v1122 = vadd.f32 %v1106, %v1114
          %v1123 = vadd.f32 %v1107, %v1117
          %v1124 = vadd.f32 %v1108, %v1120
          %vm1125 = vcmask 7168
          %1126 = vst.msk [vmem:[#allocation4] sm:$0xff] %vm1125, %v1121
          %1127 = vst.msk [vmem:[#allocation4 + $0x8] sm:$0xff] %vm1125, %v1122
          %1128 = vst.msk [vmem:[#allocation4 + $0x10] sm:$0xff] %vm1125, %v1123
          %1129 = vst.msk [vmem:[#allocation4 + $0x18] sm:$0xff] %vm1125, %v1124
          %v1130 = vld [vmem:[#allocation5] sm:$0xff]
          %v1131 = vld [vmem:[#allocation5 + $0x8] sm:$0xff]
          %v1132 = vld [vmem:[#allocation5 + $0x10] sm:$0xff]
          %v1133 = vld [vmem:[#allocation5 + $0x18] sm:$0xff]
          %1135 = vset.pattern.permute.xlu0 0
          %1136 = vperm.xlu0 %1135, %v1062
          %v1137 = vpop.permute.xlu0 %1136
          %1140 = vset.pattern.permute.xlu0 0
          %1141 = vperm.xlu0 %1140, %v1064
          %v1142 = vpop.permute.xlu0 %1141
          %1145 = vset.pattern.permute.xlu0 0
          %1146 = vperm.xlu0 %1145, %v1066
          %v1147 = vpop.permute.xlu0 %1146
          %1150 = vset.pattern.permute.xlu0 0
          %1151 = vperm.xlu0 %1150, %v1068
          %v1152 = vpop.permute.xlu0 %1151
          %v1154 = vmul.f32 %v1137, %v1130
          %v1155 = vmul.f32 %v1142, %v1131
          %v1156 = vmul.f32 %v1147, %v1132
          %v1157 = vmul.f32 %v1152, %v1133
          %v1158 = vpack.c.bf16 %v1094, %v1094
          %v1159 = vpack.c.bf16 %v1096, %v1096
          %v1160 = vpack.c.bf16 %v1098, %v1098
          %v1161 = vpack.c.bf16 %v1100, %v1100
          %v1163 = vsel %vm846, %v1158, 0
          %vm1165 = vcmask 1043456
          %v1167 = vsel %vm1165, %v841, 0
          %1169 = vmatprep.subr.bf16.mxu0 0
          %1170 = vmatpush1.bf16.msra.mxu0 %v1167
          %1171 = vmatprep.subr.bf16.mxu0 0
          %1172 = vmatpush1.bf16.msra.mxu0 0
          %1173 = vmatprep.subr.bf16.mxu0 0
          %1174 = vmatpush1.bf16.msra.mxu0 0
          %1175 = vmatprep.subr.bf16.mxu0 0
          %1176 = vmatpush1.bf16.msra.mxu0 0
          %1177 = vmatprep.subr.bf16.mxu0 0
          %1178 = vmatpush1.bf16.msra.mxu0 0
          %1179 = vmatprep.subr.bf16.mxu0 0
          %1180 = vmatpush1.bf16.msra.mxu0 0
          %1181 = vmatprep.subr.bf16.mxu0 0
          %1182 = vmatpush1.bf16.msra.mxu0 0
          %1183 = vmatprep.subr.bf16.mxu0 0
          %1184 = vmatpush1.bf16.msra.mxu0 0
          %1185 = vmatprep.subr.bf16.mxu0 0
          %1186 = vmatpush1.bf16.msra.mxu0 0
          %1187 = vmatprep.subr.bf16.mxu0 0
          %1188 = vmatpush1.bf16.msra.mxu0 0
          %1189 = vmatprep.subr.bf16.mxu0 0
          %1190 = vmatpush1.bf16.msra.mxu0 0
          %1191 = vmatprep.subr.bf16.mxu0 0
          %1192 = vmatpush1.bf16.msra.mxu0 0
          %1193 = vmatprep.subr.bf16.mxu0 0
          %1194 = vmatpush1.bf16.msra.mxu0 0
          %1195 = vmatprep.subr.bf16.mxu0 0
          %1196 = vmatpush1.bf16.msra.mxu0 0
          %1197 = vmatprep.subr.bf16.mxu0 0
          %1198 = vmatpush1.bf16.msra.mxu0 0
          %1199 = vmatprep.subr.bf16.mxu0 0
          %1200 = vmatpush1.bf16.msra.mxu0 0
          %1201 = vmatprep.mubr.bf16.mxu0 0
          %1202 = vmatmul.mubr.bf16.gmra.mrb[0].mxu0 %v1163
          %v1203 = vpop.f32.mrb[0].mxu0
          %v1204 = vadd.f32 0.0, %v1203
          %v1205 = vpop.f32.mrb[0].mxu0
          %v1206 = vpop.f32.mrb[0].mxu0
          %v1207 = vpop.f32.mrb[0].mxu0
          %1208 = vdwg.mxu0
          %v1210 = vsel %vm846, %v1159, 0
          %1212 = vmatprep.subr.bf16.mxu0 0
          %1213 = vmatpush1.bf16.msra.mxu0 %v1167
          %1214 = vmatprep.subr.bf16.mxu0 0
          %1215 = vmatpush1.bf16.msra.mxu0 0
          %1216 = vmatprep.subr.bf16.mxu0 0
          %1217 = vmatpush1.bf16.msra.mxu0 0
          %1218 = vmatprep.subr.bf16.mxu0 0
          %1219 = vmatpush1.bf16.msra.mxu0 0
          %1220 = vmatprep.subr.bf16.mxu0 0
          %1221 = vmatpush1.bf16.msra.mxu0 0
          %1222 = vmatprep.subr.bf16.mxu0 0
          %1223 = vmatpush1.bf16.msra.mxu0 0
          %1224 = vmatprep.subr.bf16.mxu0 0
          %1225 = vmatpush1.bf16.msra.mxu0 0
          %1226 = vmatprep.subr.bf16.mxu0 0
          %1227 = vmatpush1.bf16.msra.mxu0 0
          %1228 = vmatprep.subr.bf16.mxu0 0
          %1229 = vmatpush1.bf16.msra.mxu0 0
          %1230 = vmatprep.subr.bf16.mxu0 0
          %1231 = vmatpush1.bf16.msra.mxu0 0
          %1232 = vmatprep.subr.bf16.mxu0 0
          %1233 = vmatpush1.bf16.msra.mxu0 0
          %1234 = vmatprep.subr.bf16.mxu0 0
          %1235 = vmatpush1.bf16.msra.mxu0 0
          %1236 = vmatprep.subr.bf16.mxu0 0
          %1237 = vmatpush1.bf16.msra.mxu0 0
          %1238 = vmatprep.subr.bf16.mxu0 0
          %1239 = vmatpush1.bf16.msra.mxu0 0
          %1240 = vmatprep.subr.bf16.mxu0 0
          %1241 = vmatpush1.bf16.msra.mxu0 0
          %1242 = vmatprep.subr.bf16.mxu0 0
          %1243 = vmatpush1.bf16.msra.mxu0 0
          %1244 = vmatprep.mubr.bf16.mxu0 0
          %1245 = vmatmul.mubr.bf16.gmra.mrb[0].mxu0 %v1210
          %v1246 = vpop.f32.mrb[0].mxu0
          %v1247 = vadd.f32 0.0, %v1246
          %v1248 = vpop.f32.mrb[0].mxu0
          %v1249 = vpop.f32.mrb[0].mxu0
          %v1250 = vpop.f32.mrb[0].mxu0
          %1251 = vdwg.mxu0
          %v1253 = vsel %vm846, %v1160, 0
          %1255 = vmatprep.subr.bf16.mxu0 0
          %1256 = vmatpush1.bf16.msra.mxu0 %v1167
          %1257 = vmatprep.subr.bf16.mxu0 0
          %1258 = vmatpush1.bf16.msra.mxu0 0
          %1259 = vmatprep.subr.bf16.mxu0 0
          %1260 = vmatpush1.bf16.msra.mxu0 0
          %1261 = vmatprep.subr.bf16.mxu0 0
          %1262 = vmatpush1.bf16.msra.mxu0 0
          %1263 = vmatprep.subr.bf16.mxu0 0
          %1264 = vmatpush1.bf16.msra.mxu0 0
          %1265 = vmatprep.subr.bf16.mxu0 0
          %1266 = vmatpush1.bf16.msra.mxu0 0
          %1267 = vmatprep.subr.bf16.mxu0 0
          %1268 = vmatpush1.bf16.msra.mxu0 0
          %1269 = vmatprep.subr.bf16.mxu0 0
          %1270 = vmatpush1.bf16.msra.mxu0 0
          %1271 = vmatprep.subr.bf16.mxu0 0
          %1272 = vmatpush1.bf16.msra.mxu0 0
          %1273 = vmatprep.subr.bf16.mxu0 0
          %1274 = vmatpush1.bf16.msra.mxu0 0
          %1275 = vmatprep.subr.bf16.mxu0 0
          %1276 = vmatpush1.bf16.msra.mxu0 0
          %1277 = vmatprep.subr.bf16.mxu0 0
          %1278 = vmatpush1.bf16.msra.mxu0 0
          %1279 = vmatprep.subr.bf16.mxu0 0
          %1280 = vmatpush1.bf16.msra.mxu0 0
          %1281 = vmatprep.subr.bf16.mxu0 0
          %1282 = vmatpush1.bf16.msra.mxu0 0
          %1283 = vmatprep.subr.bf16.mxu0 0
          %1284 = vmatpush1.bf16.msra.mxu0 0
          %1285 = vmatprep.subr.bf16.mxu0 0
          %1286 = vmatpush1.bf16.msra.mxu0 0
          %1287 = vmatprep.mubr.bf16.mxu0 0
          %1288 = vmatmul.mubr.bf16.gmra.mrb[0].mxu0 %v1253
          %v1289 = vpop.f32.mrb[0].mxu0
          %v1290 = vadd.f32 0.0, %v1289
          %v1291 = vpop.f32.mrb[0].mxu0
          %v1292 = vpop.f32.mrb[0].mxu0
          %v1293 = vpop.f32.mrb[0].mxu0
          %1294 = vdwg.mxu0
          %v1296 = vsel %vm846, %v1161, 0
          %1298 = vmatprep.subr.bf16.mxu0 0
          %1299 = vmatpush1.bf16.msra.mxu0 %v1167
          %1300 = vmatprep.subr.bf16.mxu0 0
          %1301 = vmatpush1.bf16.msra.mxu0 0
          %1302 = vmatprep.subr.bf16.mxu0 0
          %1303 = vmatpush1.bf16.msra.mxu0 0
          %1304 = vmatprep.subr.bf16.mxu0 0
          %1305 = vmatpush1.bf16.msra.mxu0 0
          %1306 = vmatprep.subr.bf16.mxu0 0
          %1307 = vmatpush1.bf16.msra.mxu0 0
          %1308 = vmatprep.subr.bf16.mxu0 0
          %1309 = vmatpush1.bf16.msra.mxu0 0
          %1310 = vmatprep.subr.bf16.mxu0 0
          %1311 = vmatpush1.bf16.msra.mxu0 0
          %1312 = vmatprep.subr.bf16.mxu0 0
          %1313 = vmatpush1.bf16.msra.mxu0 0
          %1314 = vmatprep.subr.bf16.mxu0 0
          %1315 = vmatpush1.bf16.msra.mxu0 0
          %1316 = vmatprep.subr.bf16.mxu0 0
          %1317 = vmatpush1.bf16.msra.mxu0 0
          %1318 = vmatprep.subr.bf16.mxu0 0
          %1319 = vmatpush1.bf16.msra.mxu0 0
          %1320 = vmatprep.subr.bf16.mxu0 0
          %1321 = vmatpush1.bf16.msra.mxu0 0
          %1322 = vmatprep.subr.bf16.mxu0 0
          %1323 = vmatpush1.bf16.msra.mxu0 0
          %1324 = vmatprep.subr.bf16.mxu0 0
          %1325 = vmatpush1.bf16.msra.mxu0 0
          %1326 = vmatprep.subr.bf16.mxu0 0
          %1327 = vmatpush1.bf16.msra.mxu0 0
          %1328 = vmatprep.subr.bf16.mxu0 0
          %1329 = vmatpush1.bf16.msra.mxu0 0
          %1330 = vmatprep.mubr.bf16.mxu0 0
          %1331 = vmatmul.mubr.bf16.gmra.mrb[0].mxu0 %v1296
          %v1332 = vpop.f32.mrb[0].mxu0
          %v1333 = vadd.f32 0.0, %v1332
          %v1334 = vpop.f32.mrb[0].mxu0
          %v1335 = vpop.f32.mrb[0].mxu0
          %v1336 = vpop.f32.mrb[0].mxu0
          %1337 = vdwg.mxu0
          %v1338 = vadd.f32 %v1154, %v1204
          %v1339 = vadd.f32 %v1155, %v1247
          %v1340 = vadd.f32 %v1156, %v1290
          %v1341 = vadd.f32 %v1157, %v1333
          %1342 = vst.msk [vmem:[#allocation5] sm:$0xff] %vm846, %v1338
          %1343 = vst.msk [vmem:[#allocation5 + $0x8] sm:$0xff] %vm846, %v1339
          %1344 = vst.msk [vmem:[#allocation5 + $0x10] sm:$0xff] %vm846, %v1340
          %1345 = vst.msk [vmem:[#allocation5 + $0x18] sm:$0xff] %vm846, %v1341
          %1346 = vst.msk [vmem:[#allocation3] sm:$0xff] %vm1125, %v1053
          %1347 = vst.msk [vmem:[#allocation3 + $0x8] sm:$0xff] %vm1125, %v1054
          %1348 = vst.msk [vmem:[#allocation3 + $0x10] sm:$0xff] %vm1125, %v1055
          %1349 = vst.msk [vmem:[#allocation3 + $0x18] sm:$0xff] %vm1125, %v1056
        $region68: #{tpu_custom_call.1} parent=59 // pred_fallthru
          _
        // Predicated region
        $region69: #{tpu_custom_call.1} parent=59 // pred_check
          %p1350 = pneg %p416
        $region70: #{tpu_custom_call.1} parent=59 // pred_check_branch
          %1352 = sbr.rel (%p1350) target = $region72
        $region71: #{tpu_custom_call.1} parent=59 // pred_region
          %v1353 = vld [vmem:[#allocation5] sm:$0xff]
          %v1354 = vld [vmem:[#allocation5 + $0x8] sm:$0xff]
          %v1355 = vld [vmem:[#allocation5 + $0x10] sm:$0xff]
          %v1356 = vld [vmem:[#allocation5 + $0x18] sm:$0xff]
          %v1357 = vld [vmem:[#allocation4] sm:$0xff]
          %v1358 = vld [vmem:[#allocation4 + $0x8] sm:$0xff]
          %v1359 = vld [vmem:[#allocation4 + $0x10] sm:$0xff]
          %v1360 = vld [vmem:[#allocation4 + $0x18] sm:$0xff]
          %v1361 = vrcp.pop %v1357
          %v1362 = vrcp.pop %v1358
          %v1363 = vrcp.pop %v1359
          %v1364 = vrcp.pop %v1360
          %1366 = vset.pattern.permute.xlu0 0
          %1367 = vperm.xlu0 %1366, %v1361
          %v1368 = vpop.permute.xlu0 %1367
          %1371 = vset.pattern.permute.xlu0 0
          %1372 = vperm.xlu0 %1371, %v1362
          %v1373 = vpop.permute.xlu0 %1372
          %1376 = vset.pattern.permute.xlu0 0
          %1377 = vperm.xlu0 %1376, %v1363
          %v1378 = vpop.permute.xlu0 %1377
          %1381 = vset.pattern.permute.xlu0 0
          %1382 = vperm.xlu0 %1381, %v1364
          %v1383 = vpop.permute.xlu0 %1382
          %v1385 = vmul.f32 %v1353, %v1368
          %v1386 = vmul.f32 %v1354, %v1373
          %v1387 = vmul.f32 %v1355, %v1378
          %v1388 = vmul.f32 %v1356, %v1383
          %v1389 = vpack.c.bf16 %v1385, %v1385
          %v1390 = vpack.c.bf16 %v1386, %v1386
          %v1391 = vpack.c.bf16 %v1387, %v1387
          %v1392 = vpack.c.bf16 %v1388, %v1388
          %v1393 = vld [vmem:[%s8] sm:$0xf]
          %v1394 = vld [vmem:[%s8 + $0x4] sm:$0xf]
          %v1395 = vld [vmem:[%s8 + $0x8] sm:$0xf]
          %v1396 = vld [vmem:[%s8 + $0xc] sm:$0xf]
          %vm1397 = vcmask 64512
          %v1399 = vsel %vm1397, %v1389, 0
          %vm1401 = vcmask 1043456
          %v1403 = vsel %vm1401, %v1393, 0
          %1405 = vmatprep.subr.bf16.mxu0 0
          %1406 = vmatpush1.bf16.msra.mxu0 %v1403
          %1407 = vmatprep.subr.bf16.mxu0 0
          %1408 = vmatpush1.bf16.msra.mxu0 0
          %1409 = vmatprep.subr.bf16.mxu0 0
          %1410 = vmatpush1.bf16.msra.mxu0 0
          %1411 = vmatprep.subr.bf16.mxu0 0
          %1412 = vmatpush1.bf16.msra.mxu0 0
          %1413 = vmatprep.subr.bf16.mxu0 0
          %1414 = vmatpush1.bf16.msra.mxu0 0
          %1415 = vmatprep.subr.bf16.mxu0 0
          %1416 = vmatpush1.bf16.msra.mxu0 0
          %1417 = vmatprep.subr.bf16.mxu0 0
          %1418 = vmatpush1.bf16.msra.mxu0 0
          %1419 = vmatprep.subr.bf16.mxu0 0
          %1420 = vmatpush1.bf16.msra.mxu0 0
          %1421 = vmatprep.subr.bf16.mxu0 0
          %1422 = vmatpush1.bf16.msra.mxu0 0
          %1423 = vmatprep.subr.bf16.mxu0 0
          %1424 = vmatpush1.bf16.msra.mxu0 0
          %1425 = vmatprep.subr.bf16.mxu0 0
          %1426 = vmatpush1.bf16.msra.mxu0 0
          %1427 = vmatprep.subr.bf16.mxu0 0
          %1428 = vmatpush1.bf16.msra.mxu0 0
          %1429 = vmatprep.subr.bf16.mxu0 0
          %1430 = vmatpush1.bf16.msra.mxu0 0
          %1431 = vmatprep.subr.bf16.mxu0 0
          %1432 = vmatpush1.bf16.msra.mxu0 0
          %1433 = vmatprep.subr.bf16.mxu0 0
          %1434 = vmatpush1.bf16.msra.mxu0 0
          %1435 = vmatprep.subr.bf16.mxu0 0
          %1436 = vmatpush1.bf16.msra.mxu0 0
          %1437 = vmatprep.mubr.bf16.mxu0 0
          %1438 = vmatmul.mubr.bf16.gmra.mrb[0].mxu0 %v1399
          %v1439 = vpop.f32.mrb[0].mxu0
          %v1440 = vadd.f32 0.0, %v1439
          %v1441 = vpop.f32.mrb[0].mxu0
          %v1442 = vpop.f32.mrb[0].mxu0
          %v1443 = vpop.f32.mrb[0].mxu0
          %1444 = vdwg.mxu0
          %v1446 = vsel %vm1397, %v1390, 0
          %v1449 = vsel %vm1401, %v1394, 0
          %1451 = vmatprep.subr.bf16.mxu0 0
          %1452 = vmatpush1.bf16.msra.mxu0 %v1449
          %1453 = vmatprep.subr.bf16.mxu0 0
          %1454 = vmatpush1.bf16.msra.mxu0 0
          %1455 = vmatprep.subr.bf16.mxu0 0
          %1456 = vmatpush1.bf16.msra.mxu0 0
          %1457 = vmatprep.subr.bf16.mxu0 0
          %1458 = vmatpush1.bf16.msra.mxu0 0
          %1459 = vmatprep.subr.bf16.mxu0 0
          %1460 = vmatpush1.bf16.msra.mxu0 0
          %1461 = vmatprep.subr.bf16.mxu0 0
          %1462 = vmatpush1.bf16.msra.mxu0 0
          %1463 = vmatprep.subr.bf16.mxu0 0
          %1464 = vmatpush1.bf16.msra.mxu0 0
          %1465 = vmatprep.subr.bf16.mxu0 0
          %1466 = vmatpush1.bf16.msra.mxu0 0
          %1467 = vmatprep.subr.bf16.mxu0 0
          %1468 = vmatpush1.bf16.msra.mxu0 0
          %1469 = vmatprep.subr.bf16.mxu0 0
          %1470 = vmatpush1.bf16.msra.mxu0 0
          %1471 = vmatprep.subr.bf16.mxu0 0
          %1472 = vmatpush1.bf16.msra.mxu0 0
          %1473 = vmatprep.subr.bf16.mxu0 0
          %1474 = vmatpush1.bf16.msra.mxu0 0
          %1475 = vmatprep.subr.bf16.mxu0 0
          %1476 = vmatpush1.bf16.msra.mxu0 0
          %1477 = vmatprep.subr.bf16.mxu0 0
          %1478 = vmatpush1.bf16.msra.mxu0 0
          %1479 = vmatprep.subr.bf16.mxu0 0
          %1480 = vmatpush1.bf16.msra.mxu0 0
          %1481 = vmatprep.subr.bf16.mxu0 0
          %1482 = vmatpush1.bf16.msra.mxu0 0
          %1483 = vmatprep.mubr.bf16.mxu0 0
          %1484 = vmatmul.mubr.bf16.gmra.mrb[0].mxu0 %v1446
          %v1485 = vpop.f32.mrb[0].mxu0
          %v1486 = vadd.f32 0.0, %v1485
          %v1487 = vpop.f32.mrb[0].mxu0
          %v1488 = vpop.f32.mrb[0].mxu0
          %v1489 = vpop.f32.mrb[0].mxu0
          %1490 = vdwg.mxu0
          %v1492 = vsel %vm1397, %v1391, 0
          %v1495 = vsel %vm1401, %v1395, 0
          %1497 = vmatprep.subr.bf16.mxu0 0
          %1498 = vmatpush1.bf16.msra.mxu0 %v1495
          %1499 = vmatprep.subr.bf16.mxu0 0
          %1500 = vmatpush1.bf16.msra.mxu0 0
          %1501 = vmatprep.subr.bf16.mxu0 0
          %1502 = vmatpush1.bf16.msra.mxu0 0
          %1503 = vmatprep.subr.bf16.mxu0 0
          %1504 = vmatpush1.bf16.msra.mxu0 0
          %1505 = vmatprep.subr.bf16.mxu0 0
          %1506 = vmatpush1.bf16.msra.mxu0 0
          %1507 = vmatprep.subr.bf16.mxu0 0
          %1508 = vmatpush1.bf16.msra.mxu0 0
          %1509 = vmatprep.subr.bf16.mxu0 0
          %1510 = vmatpush1.bf16.msra.mxu0 0
          %1511 = vmatprep.subr.bf16.mxu0 0
          %1512 = vmatpush1.bf16.msra.mxu0 0
          %1513 = vmatprep.subr.bf16.mxu0 0
          %1514 = vmatpush1.bf16.msra.mxu0 0
          %1515 = vmatprep.subr.bf16.mxu0 0
          %1516 = vmatpush1.bf16.msra.mxu0 0
          %1517 = vmatprep.subr.bf16.mxu0 0
          %1518 = vmatpush1.bf16.msra.mxu0 0
          %1519 = vmatprep.subr.bf16.mxu0 0
          %1520 = vmatpush1.bf16.msra.mxu0 0
          %1521 = vmatprep.subr.bf16.mxu0 0
          %1522 = vmatpush1.bf16.msra.mxu0 0
          %1523 = vmatprep.subr.bf16.mxu0 0
          %1524 = vmatpush1.bf16.msra.mxu0 0
          %1525 = vmatprep.subr.bf16.mxu0 0
          %1526 = vmatpush1.bf16.msra.mxu0 0
          %1527 = vmatprep.subr.bf16.mxu0 0
          %1528 = vmatpush1.bf16.msra.mxu0 0
          %1529 = vmatprep.mubr.bf16.mxu0 0
          %1530 = vmatmul.mubr.bf16.gmra.mrb[0].mxu0 %v1492
          %v1531 = vpop.f32.mrb[0].mxu0
          %v1532 = vadd.f32 0.0, %v1531
          %v1533 = vpop.f32.mrb[0].mxu0
          %v1534 = vpop.f32.mrb[0].mxu0
          %v1535 = vpop.f32.mrb[0].mxu0
          %1536 = vdwg.mxu0
          %v1538 = vsel %vm1397, %v1392, 0
          %v1541 = vsel %vm1401, %v1396, 0
          %1543 = vmatprep.subr.bf16.mxu0 0
          %1544 = vmatpush1.bf16.msra.mxu0 %v1541
          %1545 = vmatprep.subr.bf16.mxu0 0
          %1546 = vmatpush1.bf16.msra.mxu0 0
          %1547 = vmatprep.subr.bf16.mxu0 0
          %1548 = vmatpush1.bf16.msra.mxu0 0
          %1549 = vmatprep.subr.bf16.mxu0 0
          %1550 = vmatpush1.bf16.msra.mxu0 0
          %1551 = vmatprep.subr.bf16.mxu0 0
          %1552 = vmatpush1.bf16.msra.mxu0 0
          %1553 = vmatprep.subr.bf16.mxu0 0
          %1554 = vmatpush1.bf16.msra.mxu0 0
          %1555 = vmatprep.subr.bf16.mxu0 0
          %1556 = vmatpush1.bf16.msra.mxu0 0
          %1557 = vmatprep.subr.bf16.mxu0 0
          %1558 = vmatpush1.bf16.msra.mxu0 0
          %1559 = vmatprep.subr.bf16.mxu0 0
          %1560 = vmatpush1.bf16.msra.mxu0 0
          %1561 = vmatprep.subr.bf16.mxu0 0
          %1562 = vmatpush1.bf16.msra.mxu0 0
          %1563 = vmatprep.subr.bf16.mxu0 0
          %1564 = vmatpush1.bf16.msra.mxu0 0
          %1565 = vmatprep.subr.bf16.mxu0 0
          %1566 = vmatpush1.bf16.msra.mxu0 0
          %1567 = vmatprep.subr.bf16.mxu0 0
          %1568 = vmatpush1.bf16.msra.mxu0 0
          %1569 = vmatprep.subr.bf16.mxu0 0
          %1570 = vmatpush1.bf16.msra.mxu0 0
          %1571 = vmatprep.subr.bf16.mxu0 0
          %1572 = vmatpush1.bf16.msra.mxu0 0
          %1573 = vmatprep.subr.bf16.mxu0 0
          %1574 = vmatpush1.bf16.msra.mxu0 0
          %1575 = vmatprep.mubr.bf16.mxu0 0
          %1576 = vmatmul.mubr.bf16.gmra.mrb[0].mxu0 %v1538
          %v1577 = vpop.f32.mrb[0].mxu0
          %v1578 = vadd.f32 0.0, %v1577
          %v1579 = vpop.f32.mrb[0].mxu0
          %v1580 = vpop.f32.mrb[0].mxu0
          %v1581 = vpop.f32.mrb[0].mxu0
          %1582 = vdwg.mxu0
          %vm1583 = vcmask 261120
          %v1584 = vsel %vm1583, %v1440, 0.0
          %v1585 = vsel %vm1583, %v1486, 0.0
          %v1586 = vadd.f32 %v1584, %v1585
          %v1587 = vsel %vm1583, %v1532, 0.0
          %v1588 = vadd.f32 %v1586, %v1587
          %v1589 = vsel %vm1583, %v1578, 0.0
          %v1590 = vadd.f32 %v1588, %v1589
          %v1591 = vld [vmem:[%s9] sm:$0x1]
          %v1593 = vlaneseq
          %v1594 = vshrl.u32 %v1593, 7
          %v1595 = vsub.s32 0, %v1594
          %v1596 = vrot.slane %v1591, %v1595
          %v1598 = vadd.f32 %v1590, %v1596
          %1599 = vst.msk [vmem:[%s400] sm:$0xff] %vm1583, %v1598
        $region72: #{tpu_custom_call.1} parent=59 // pred_fallthru
          _
        %s1600 = sand.u32 %s277, 1
        %s1601 = scalar_lea.sflag [#allocation7], %s1600
        %s1602 = sand.u32 %s277, 1
        %s1603 = smul.addr %s1602, 8
        %s1604 = scalar_lea.vmem [#allocation6], %s1603
        // Predicated region
        $region73: #{tpu_custom_call.1} parent=59 // pred_check
          %p1605 = pneg %p287
        $region74: #{tpu_custom_call.1} parent=59 // pred_check_branch
          %1607 = sbr.rel (%p1605) target = $region76
        $region75: #{tpu_custom_call.1} parent=59 // pred_region
          %s1609 = ssub.s32 128, 128
          %1610 = vsyncadd %s1601, %s1609
          %s1611 = sadd.s32 %s30, %s29
          %s1612 = smul.addr %s1611, 128
          %s1613 = scalar_lea.hbm %s10, %s1612
          %s1615 = sshll.u32 %s1604, 4
          %s1616 = int_to_ptr.vmem [resolvable:$true] %s1615
          %1618 = dma.vmem_to_hbm [thread:$0]  %s1616, 128, %s1613, %s1601
        $region76: #{tpu_custom_call.1} parent=59 // pred_fallthru
          _
      $region60: #{tpu_custom_call.1} parent=5 // pred_fallthru
        _
      %p1619 = scmp.le.s32.totalorder 2, %s19
      // Predicated region
      $region77: #{tpu_custom_call.1} parent=5 // pred_check
        %p1620 = pneg %p1619
      $region78: #{tpu_custom_call.1} parent=5 // pred_check_branch
        %1622 = sbr.rel (%p1620) target = $region80
      $region79: #{tpu_custom_call.1} parent=5 // pred_region
        %s1623 = ssub.s32 %s19, 2
        // Predicated region
        $region81: #{tpu_custom_call.1} parent=79 // pred_check
          %p1624 = pneg %p293
        $region82: #{tpu_custom_call.1} parent=79 // pred_check_branch
          %1626 = sbr.rel (%p1624) target = $region84
        $region83: #{tpu_custom_call.1} parent=79 // pred_region
          %s1627 = sand.u32 %s278, 1
          %s1628 = scalar_lea.sflag [#allocation7], %s1627
          %s1629 = sand.u32 %s278, 1
          %s1630 = smul.addr %s1629, 8
          %s1631 = scalar_lea.vmem [#allocation6], %s1630
          %1632 = dma.done %s1628, 128
        $region84: #{tpu_custom_call.1} parent=79 // pred_fallthru
          _
      $region80: #{tpu_custom_call.1} parent=5 // pred_fallthru
        _
    $region6: #{tpu_custom_call.1} parent=1 // loop_footer
      %s23 = sadd.s32 1, %s19
    $region7: #{tpu_custom_call.1} parent=1 // loop_footer_branch
      %18 = sbr.rel target = $region3
    $region8: #{tpu_custom_call.1} parent=1 // loop_exit
      _
    %1633 = vsyncpa [#allocation7], 1
    %s1634 = scalar_lea.sflag [#allocation7], 1
    %1635 = vsyncpa %s1634, 1

// kernel: tpu_custom_call.1
$region0: #{tpu_custom_call.1}
  #allocation0 [shape = 'u32[]', space=smem, size = 0x4, offset = 0x4, fixed_abs, tag = 'smem constant byte address 0x4 - core index']
  #allocation1 [shape = 'u32[144,128]{1,0:T(1,128)}', space=vmem, size = 0x12000, scoped, tag = 'internal scratch']
  #allocation2 [shape = 'bf16[4,8,8]{2,1,0:T(8,128)(2,1)}', space=vmem, size = 0x2000, scoped, tag = 'scratch operand']
  #allocation3 [shape = 'f32[4,8,1]{2,1,0:T(8,128)}', space=vmem, size = 0x4000, scoped, tag = 'scratch operand']
  #allocation4 [shape = 'f32[4,8,1]{2,1,0:T(8,128)}', space=vmem, size = 0x4000, scoped, tag = 'scratch operand']
  #allocation5 [shape = 'f32[4,8,8]{2,1,0:T(8,128)}', space=vmem, size = 0x4000, scoped, tag = 'scratch operand']
  %s0 = inlined_call_operand.vmem [shape: f32[2,8,32], index: 0, kind: input, shape index: {}]
  %s1 = inlined_call_operand.vmem [shape: f32[2,8,32], index: 1, kind: input, shape index: {}]
  %s2 = inlined_call_operand.vmem [shape: bf16[4,32,8], index: 2, kind: input, shape index: {}]
  %s3 = inlined_call_operand.vmem [shape: f32[4,1,8], index: 3, kind: input, shape index: {}]
  %s4 = inlined_call_operand.vmem [shape: bf16[32,8], index: 4, kind: input, shape index: {}]
  %s5 = inlined_call_operand.vmem [shape: f32[1,8], index: 5, kind: input, shape index: {}]
  %s6 = inlined_call_operand.vmem [shape: bf16[32,8], index: 6, kind: input, shape index: {}]
  %s7 = inlined_call_operand.vmem [shape: f32[1,8], index: 7, kind: input, shape index: {}]
  %s8 = inlined_call_operand.vmem [shape: bf16[4,8,32], index: 8, kind: input, shape index: {}]
  %s9 = inlined_call_operand.vmem [shape: f32[1,32], index: 9, kind: input, shape index: {}]
  %s10 = inlined_call_operand.hbm [shape: f32[2,8,32], index: 10, kind: output, shape index: {}]
  %s11 = sld [smem:[#allocation0]]
  $region85: #{tpu_custom_call.1} parent=0
    _
  %s13 = ssub.s32 1, %s11
  %s14 = scalar_select 0, %s13, %s11
  $region1: #{tpu_custom_call.1} parent=0
    #allocation6 [shape = 'u8[8192]{0}', space=vmem, size = 0x2000, scoped, tag = 'output window, operand 0']
    #allocation7 [shape = 's32[2]{0}', space=sflag, size = 0x8, scoped, tag = 'scoped memory for tpu_custom_call.1']
    %15 = vsyncpa [#allocation7], 0
    %s16 = scalar_lea.sflag [#allocation7], 1
    %17 = vsyncpa %s16, 0
    loop: start=0, step=1, limit=4
    $region2: #{tpu_custom_call.1} parent=1 // loop_pre_header
      _
    $region3: #{tpu_custom_call.1} parent=1 // loop_header
      %s19 = sphi 0, %s23
      %p20 = scmp.ge.s32.totalorder %s19, 4
      %s26 = sphi 0, %s45
      %s27 = sphi 0, %s41
      %s28 = sphi 0, %s37
      %s29 = sphi 0, %s26
      %s30 = sphi 0, %s27
      %s31 = sphi 0, %s28
      %s32 = sphi 0, %s29
      %s33 = sphi 0, %s30
      %s34 = sphi 0, %s31
      %s50 = sphi 0, %s52
      %s53 = sphi 0, %s50
      %s54 = sphi 0, %s53
      %s70 = sphi 0, %s54
      %s78 = sphi 0, %s80
      %s81 = sphi 0, %s78
      %s82 = sphi 0, %s81
      %s98 = sphi 0, %s82
      %s102 = sphi 0, %s102
      %s104 = sphi 0, %s102
      %s105 = sphi 0, %s104
      %s119 = sphi 0, %s105
      %s123 = sphi 0, %s123
      %s125 = sphi 0, %s123
      %s126 = sphi 0, %s125
      %s140 = sphi 0, %s126
      %s144 = sphi 0, %s144
      %s146 = sphi 0, %s144
      %s147 = sphi 0, %s146
      %s161 = sphi 0, %s147
      %s165 = sphi 0, %s165
      %s167 = sphi 0, %s165
      %s168 = sphi 0, %s167
      %s182 = sphi 0, %s168
      %s186 = sphi 0, %s186
      %s188 = sphi 0, %s186
      %s189 = sphi 0, %s188
      %s203 = sphi 0, %s189
      %s207 = sphi 0, %s207
      %s209 = sphi 0, %s207
      %s210 = sphi 0, %s209
      %s224 = sphi 0, %s210
      %s228 = sphi 0, %s228
      %s230 = sphi 0, %s228
      %s231 = sphi 0, %s230
      %s245 = sphi 0, %s231
      %s249 = sphi 0, %s249
      %s251 = sphi 0, %s249
      %s252 = sphi 0, %s251
      %s266 = sphi 0, %s252
      %s274 = sphi 0, %s276
      %s277 = sphi 0, %s274
      %s278 = sphi 0, %s277
      %s294 = sphi 0, %s278
    $region4: #{tpu_custom_call.1} parent=1 // loop_header_branch
      %22 = sbr.rel (%p20) target = $region8
    $region5: #{tpu_custom_call.1} parent=1 // loop_body
      %s24 = ssub.s32 %s19, 1
      %s25 = ssub.s32 %s19, 2
      %s35 = sadd.s32 1, %s28
      %p36 = scmp.ge.s32.totalorder %s35, 1
      %s37 = scalar_select %p36, 0, %s35
      %s38 = sadd.s32 1, %s27
      %s39 = scalar_select %p36, %s38, %s27
      %p40 = scmp.ge.s32.totalorder %s39, 1
      %s41 = scalar_select %p40, 0, %s39
      %s42 = sadd.s32 1, %s26
      %s43 = scalar_select %p40, %s42, %s26
      %p44 = scmp.ge.s32.totalorder %s43, 2
      %s45 = scalar_select %p44, 0, %s43
      %s46 = ssub.s32 %s26, %s45
      %s47 = ssub.s32 %s27, %s41
      %s48 = sor.u32 %s46, %s47
      %p49 = scmp.eq.s32.totalorder %s48, 0
      %s51 = sadd.s32 %s50, 1
      %s52 = scalar_select %p49, %s50, %s51
      %p55 = pneg %p49
      %p56 = scmp.eq.s32.totalorder %s19, 1
      %p57 = por %p55, %p56
      %p58 = scmp.ne.s32.totalorder %s50, %s53
      %p59 = scmp.eq.s32.totalorder %s19, 0
      %p60 = por %p58, %p59
      %p61 = scmp.ne.s32.totalorder %s50, %s53
      %p62 = scmp.eq.s32.totalorder %s24, 1
      %p63 = por %p61, %p62
      %p64 = scmp.ne.s32.totalorder %s53, %s54
      %p65 = scmp.eq.s32.totalorder %s24, 0
      %p66 = por %p64, %p65
      %p67 = scmp.ne.s32.totalorder %s53, %s54
      %p68 = scmp.eq.s32.totalorder %s25, 1
      %p69 = por %p67, %p68
      %p71 = scmp.ne.s32.totalorder %s54, %s70
      %p72 = scmp.eq.s32.totalorder %s25, 0
      %p73 = por %p71, %p72
      %s74 = ssub.s32 %s26, %s45
      %s75 = ssub.s32 %s28, %s37
      %s76 = sor.u32 %s74, %s75
      %p77 = scmp.eq.s32.totalorder %s76, 0
      %s79 = sadd.s32 %s78, 1
      %s80 = scalar_select %p77, %s78, %s79
      %p83 = pneg %p77
      %p84 = scmp.eq.s32.totalorder %s19, 1
      %p85 = por %p83, %p84
      %p86 = scmp.ne.s32.totalorder %s78, %s81
      %p87 = scmp.eq.s32.totalorder %s19, 0
      %p88 = por %p86, %p87
      %p89 = scmp.ne.s32.totalorder %s78, %s81
      %p90 = scmp.eq.s32.totalorder %s24, 1
      %p91 = por %p89, %p90
      %p92 = scmp.ne.s32.totalorder %s81, %s82
      %p93 = scmp.eq.s32.totalorder %s24, 0
      %p94 = por %p92, %p93
      %p95 = scmp.ne.s32.totalorder %s81, %s82
      %p96 = scmp.eq.s32.totalorder %s25, 1
      %p97 = por %p95, %p96
      %p99 = scmp.ne.s32.totalorder %s82, %s98
      %p100 = scmp.eq.s32.totalorder %s25, 0
      %p101 = por %p99, %p100
      %s103 = sadd.s32 %s102, 1
      %p106 = scmp.eq.s32.totalorder %s19, 1
      %p107 = scmp.ne.s32.totalorder %s102, %s104
      %p108 = scmp.eq.s32.totalorder %s19, 0
      %p109 = por %p107, %p108
      %p110 = scmp.ne.s32.totalorder %s102, %s104
      %p111 = scmp.eq.s32.totalorder %s24, 1
      %p112 = por %p110, %p111
      %p113 = scmp.ne.s32.totalorder %s104, %s105
      %p114 = scmp.eq.s32.totalorder %s24, 0
      %p115 = por %p113, %p114
      %p116 = scmp.ne.s32.totalorder %s104, %s105
      %p117 = scmp.eq.s32.totalorder %s25, 1
      %p118 = por %p116, %p117
      %p120 = scmp.ne.s32.totalorder %s105, %s119
      %p121 = scmp.eq.s32.totalorder %s25, 0
      %p122 = por %p120, %p121
      %s124 = sadd.s32 %s123, 1
      %p127 = scmp.eq.s32.totalorder %s19, 1
      %p128 = scmp.ne.s32.totalorder %s123, %s125
      %p129 = scmp.eq.s32.totalorder %s19, 0
      %p130 = por %p128, %p129
      %p131 = scmp.ne.s32.totalorder %s123, %s125
      %p132 = scmp.eq.s32.totalorder %s24, 1
      %p133 = por %p131, %p132
      %p134 = scmp.ne.s32.totalorder %s125, %s126
      %p135 = scmp.eq.s32.totalorder %s24, 0
      %p136 = por %p134, %p135
      %p137 = scmp.ne.s32.totalorder %s125, %s126
      %p138 = scmp.eq.s32.totalorder %s25, 1
      %p139 = por %p137, %p138
      %p141 = scmp.ne.s32.totalorder %s126, %s140
      %p142 = scmp.eq.s32.totalorder %s25, 0
      %p143 = por %p141, %p142
      %s145 = sadd.s32 %s144, 1
      %p148 = scmp.eq.s32.totalorder %s19, 1
      %p149 = scmp.ne.s32.totalorder %s144, %s146
      %p150 = scmp.eq.s32.totalorder %s19, 0
      %p151 = por %p149, %p150
      %p152 = scmp.ne.s32.totalorder %s144, %s146
      %p153 = scmp.eq.s32.totalorder %s24, 1
      %p154 = por %p152, %p153
      %p155 = scmp.ne.s32.totalorder %s146, %s147
      %p156 = scmp.eq.s32.totalorder %s24, 0
      %p157 = por %p155, %p156
      %p158 = scmp.ne.s32.totalorder %s146, %s147
      %p159 = scmp.eq.s32.totalorder %s25, 1
      %p160 = por %p158, %p159
      %p162 = scmp.ne.s32.totalorder %s147, %s161
      %p163 = scmp.eq.s32.totalorder %s25, 0
      %p164 = por %p162, %p163
      %s166 = sadd.s32 %s165, 1
      %p169 = scmp.eq.s32.totalorder %s19, 1
      %p170 = scmp.ne.s32.totalorder %s165, %s167
      %p171 = scmp.eq.s32.totalorder %s19, 0
      %p172 = por %p170, %p171
      %p173 = scmp.ne.s32.totalorder %s165, %s167
      %p174 = scmp.eq.s32.totalorder %s24, 1
      %p175 = por %p173, %p174
      %p176 = scmp.ne.s32.totalorder %s167, %s168
      %p177 = scmp.eq.s32.totalorder %s24, 0
      %p178 = por %p176, %p177
      %p179 = scmp.ne.s32.totalorder %s167, %s168
      %p180 = scmp.eq.s32.totalorder %s25, 1
      %p181 = por %p179, %p180
      %p183 = scmp.ne.s32.totalorder %s168, %s182
      %p184 = scmp.eq.s32.totalorder %s25, 0
      %p185 = por %p183, %p184
      %s187 = sadd.s32 %s186, 1
      %p190 = scmp.eq.s32.totalorder %s19, 1
      %p191 = scmp.ne.s32.totalorder %s186, %s188
      %p192 = scmp.eq.s32.totalorder %s19, 0
      %p193 = por %p191, %p192
      %p194 = scmp.ne.s32.totalorder %s186, %s188
      %p195 = scmp.eq.s32.totalorder %s24, 1
      %p196 = por %p194, %p195
      %p197 = scmp.ne.s32.totalorder %s188, %s189
      %p198 = scmp.eq.s32.totalorder %s24, 0
      %p199 = por %p197, %p198
      %p200 = scmp.ne.s32.totalorder %s188, %s189
      %p201 = scmp.eq.s32.totalorder %s25, 1
      %p202 = por %p200, %p201
      %p204 = scmp.ne.s32.totalorder %s189, %s203
      %p205 = scmp.eq.s32.totalorder %s25, 0
      %p206 = por %p204, %p205
      %s208 = sadd.s32 %s207, 1
      %p211 = scmp.eq.s32.totalorder %s19, 1
      %p212 = scmp.ne.s32.totalorder %s207, %s209
      %p213 = scmp.eq.s32.totalorder %s19, 0
      %p214 = por %p212, %p213
      %p215 = scmp.ne.s32.totalorder %s207, %s209
      %p216 = scmp.eq.s32.totalorder %s24, 1
      %p217 = por %p215, %p216
      %p218 = scmp.ne.s32.totalorder %s209, %s210
      %p219 = scmp.eq.s32.totalorder %s24, 0
      %p220 = por %p218, %p219
      %p221 = scmp.ne.s32.totalorder %s209, %s210
      %p222 = scmp.eq.s32.totalorder %s25, 1
      %p223 = por %p221, %p222
      %p225 = scmp.ne.s32.totalorder %s210, %s224
      %p226 = scmp.eq.s32.totalorder %s25, 0
      %p227 = por %p225, %p226
      %s229 = sadd.s32 %s228, 1
      %p232 = scmp.eq.s32.totalorder %s19, 1
      %p233 = scmp.ne.s32.totalorder %s228, %s230
      %p234 = scmp.eq.s32.totalorder %s19, 0
      %p235 = por %p233, %p234
      %p236 = scmp.ne.s32.totalorder %s228, %s230
      %p237 = scmp.eq.s32.totalorder %s24, 1
      %p238 = por %p236, %p237
      %p239 = scmp.ne.s32.totalorder %s230, %s231
      %p240 = scmp.eq.s32.totalorder %s24, 0
      %p241 = por %p239, %p240
      %p242 = scmp.ne.s32.totalorder %s230, %s231
      %p243 = scmp.eq.s32.totalorder %s25, 1
      %p244 = por %p242, %p243
      %p246 = scmp.ne.s32.totalorder %s231, %s245
      %p247 = scmp.eq.s32.totalorder %s25, 0
      %p248 = por %p246, %p247
      %s250 = sadd.s32 %s249, 1
      %p253 = scmp.eq.s32.totalorder %s19, 1
      %p254 = scmp.ne.s32.totalorder %s249, %s251
      %p255 = scmp.eq.s32.totalorder %s19, 0
      %p256 = por %p254, %p255
      %p257 = scmp.ne.s32.totalorder %s249, %s251
      %p258 = scmp.eq.s32.totalorder %s24, 1
      %p259 = por %p257, %p258
      %p260 = scmp.ne.s32.totalorder %s251, %s252
      %p261 = scmp.eq.s32.totalorder %s24, 0
      %p262 = por %p260, %p261
      %p263 = scmp.ne.s32.totalorder %s251, %s252
      %p264 = scmp.eq.s32.totalorder %s25, 1
      %p265 = por %p263, %p264
      %p267 = scmp.ne.s32.totalorder %s252, %s266
      %p268 = scmp.eq.s32.totalorder %s25, 0
      %p269 = por %p267, %p268
      %s270 = ssub.s32 %s26, %s45
      %s271 = ssub.s32 %s27, %s41
      %s272 = sor.u32 %s270, %s271
      %p273 = scmp.eq.s32.totalorder %s272, 0
      %s275 = sadd.s32 %s274, 1
      %s276 = scalar_select %p273, %s274, %s275
      %p279 = pneg %p273
      %p280 = scmp.eq.s32.totalorder %s19, 1
      %p281 = por %p279, %p280
      %p282 = scmp.ne.s32.totalorder %s274, %s277
      %p283 = scmp.eq.s32.totalorder %s19, 0
      %p284 = por %p282, %p283
      %p285 = scmp.ne.s32.totalorder %s274, %s277
      %p286 = scmp.eq.s32.totalorder %s24, 1
      %p287 = por %p285, %p286
      %p288 = scmp.ne.s32.totalorder %s277, %s278
      %p289 = scmp.eq.s32.totalorder %s24, 0
      %p290 = por %p288, %p289
      %p291 = scmp.ne.s32.totalorder %s277, %s278
      %p292 = scmp.eq.s32.totalorder %s25, 1
      %p293 = por %p291, %p292
      %p295 = scmp.ne.s32.totalorder %s278, %s294
      %p296 = scmp.eq.s32.totalorder %s25, 0
      %p297 = por %p295, %p296
      %p298 = scmp.le.s32.totalorder 1, %s19
      %p299 = scmp.lt.s32.totalorder %s19, 3
      %p300 = pnand %p298, %p299
      %p301 = pneg %p300
      // Predicated region
      $region9: #{tpu_custom_call.1} parent=5 // pred_check
        _
      $region10: #{tpu_custom_call.1} parent=5 // pred_check_branch
        %303 = sbr.rel (%p300) target = $region12
      $region11: #{tpu_custom_call.1} parent=5 // pred_region
        %s304 = ssub.s32 %s19, 1
        // Predicated region
        $region13: #{tpu_custom_call.1} parent=11 // pred_check
          %p305 = pneg %p115
        $region14: #{tpu_custom_call.1} parent=11 // pred_check_branch
          %307 = sbr.rel (%p305) target = $region16
        $region15: #{tpu_custom_call.1} parent=11 // pred_region
          _
        $region16: #{tpu_custom_call.1} parent=11 // pred_fallthru
          _
        // Predicated region
        $region17: #{tpu_custom_call.1} parent=11 // pred_check
          %p308 = pneg %p136
        $region18: #{tpu_custom_call.1} parent=11 // pred_check_branch
          %310 = sbr.rel (%p308) target = $region20
        $region19: #{tpu_custom_call.1} parent=11 // pred_region
          _
        $region20: #{tpu_custom_call.1} parent=11 // pred_fallthru
          _
        // Predicated region
        $region21: #{tpu_custom_call.1} parent=11 // pred_check
          %p311 = pneg %p157
        $region22: #{tpu_custom_call.1} parent=11 // pred_check_branch
          %313 = sbr.rel (%p311) target = $region24
        $region23: #{tpu_custom_call.1} parent=11 // pred_region
          _
        $region24: #{tpu_custom_call.1} parent=11 // pred_fallthru
          _
        // Predicated region
        $region25: #{tpu_custom_call.1} parent=11 // pred_check
          %p314 = pneg %p178
        $region26: #{tpu_custom_call.1} parent=11 // pred_check_branch
          %316 = sbr.rel (%p314) target = $region28
        $region27: #{tpu_custom_call.1} parent=11 // pred_region
          _
        $region28: #{tpu_custom_call.1} parent=11 // pred_fallthru
          _
        // Predicated region
        $region29: #{tpu_custom_call.1} parent=11 // pred_check
          %p317 = pneg %p199
        $region30: #{tpu_custom_call.1} parent=11 // pred_check_branch
          %319 = sbr.rel (%p317) target = $region32
        $region31: #{tpu_custom_call.1} parent=11 // pred_region
          _
        $region32: #{tpu_custom_call.1} parent=11 // pred_fallthru
          _
        // Predicated region
        $region33: #{tpu_custom_call.1} parent=11 // pred_check
          %p320 = pneg %p220
        $region34: #{tpu_custom_call.1} parent=11 // pred_check_branch
          %322 = sbr.rel (%p320) target = $region36
        $region35: #{tpu_custom_call.1} parent=11 // pred_region
          _
        $region36: #{tpu_custom_call.1} parent=11 // pred_fallthru
          _
        // Predicated region
        $region37: #{tpu_custom_call.1} parent=11 // pred_check
          %p323 = pneg %p241
        $region38: #{tpu_custom_call.1} parent=11 // pred_check_branch
          %325 = sbr.rel (%p323) target = $region40
        $region39: #{tpu_custom_call.1} parent=11 // pred_region
          _
        $region40: #{tpu_custom_call.1} parent=11 // pred_fallthru
          _
        // Predicated region
        $region41: #{tpu_custom_call.1} parent=11 // pred_check
          %p326 = pneg %p262
        $region42: #{tpu_custom_call.1} parent=11 // pred_check_branch
          %328 = sbr.rel (%p326) target = $region44
        $region43: #{tpu_custom_call.1} parent=11 // pred_region
          _
        $region44: #{tpu_custom_call.1} parent=11 // pred_fallthru
          _
      $region12: #{tpu_custom_call.1} parent=5 // pred_fallthru
        _
      %p329 = scmp.lt.s32.totalorder %s19, 2
      // Predicated region
      $region45: #{tpu_custom_call.1} parent=5 // pred_check
        %p330 = pneg %p329
      $region46: #{tpu_custom_call.1} parent=5 // pred_check_branch
        %332 = sbr.rel (%p330) target = $region48
      $region47: #{tpu_custom_call.1} parent=5 // pred_region
        // Predicated region
        $region49: #{tpu_custom_call.1} parent=47 // pred_check
          %p333 = pneg %p60
        $region50: #{tpu_custom_call.1} parent=47 // pred_check_branch
          %335 = sbr.rel (%p333) target = $region52
        $region51: #{tpu_custom_call.1} parent=47 // pred_region
          %p336 = scmp.lt.s32.totalorder %s26, 1
          %s337 = scalar_select %p336, %s26, 1
          %p338 = scmp.lt.s32.totalorder %s27, 0
          %s339 = scalar_select %p338, %s27, 0
          %s340 = sadd.s32 %s339, %s337
          %s341 = smul.addr %s340, 8
          %s342 = scalar_lea.vmem %s0, %s341
        $region52: #{tpu_custom_call.1} parent=47 // pred_fallthru
          _
        // Predicated region
        $region53: #{tpu_custom_call.1} parent=47 // pred_check
          %p343 = pneg %p88
        $region54: #{tpu_custom_call.1} parent=47 // pred_check_branch
          %345 = sbr.rel (%p343) target = $region56
        $region55: #{tpu_custom_call.1} parent=47 // pred_region
          %p346 = scmp.lt.s32.totalorder %s26, 1
          %s347 = scalar_select %p346, %s26, 1
          %p348 = scmp.lt.s32.totalorder %s28, 0
          %s349 = scalar_select %p348, %s28, 0
          %s350 = sadd.s32 %s349, %s347
          %s351 = smul.addr %s350, 8
          %s352 = scalar_lea.vmem %s1, %s351
        $region56: #{tpu_custom_call.1} parent=47 // pred_fallthru
          _
      $region48: #{tpu_custom_call.1} parent=5 // pred_fallthru
        _
      %p353 = scmp.le.s32.totalorder 1, %s19
      %p354 = scmp.lt.s32.totalorder %s19, 3
      %p355 = pnand %p353, %p354
      %p356 = pneg %p355
      // Predicated region
      $region57: #{tpu_custom_call.1} parent=5 // pred_check
        _
      $region58: #{tpu_custom_call.1} parent=5 // pred_check_branch
        %358 = sbr.rel (%p355) target = $region60
      $region59: #{tpu_custom_call.1} parent=5 // pred_region
        %s359 = ssub.s32 %s19, 1
        %p360 = scmp.lt.s32.totalorder %s29, 1
        %s361 = scalar_select %p360, %s29, 1
        %p362 = scmp.lt.s32.totalorder %s30, 0
        %s363 = scalar_select %p362, %s30, 0
        %s364 = sadd.s32 %s363, %s361
        %s365 = smul.addr %s364, 8
        %s366 = scalar_lea.vmem %s0, %s365
        %p367 = pneg %p66
        %p368 = pneg %p63
        %p369 = scmp.lt.s32.totalorder %s29, 1
        %s370 = scalar_select %p369, %s29, 1
        %p371 = scmp.lt.s32.totalorder %s31, 0
        %s372 = scalar_select %p371, %s31, 0
        %s373 = sadd.s32 %s372, %s370
        %s374 = smul.addr %s373, 8
        %s375 = scalar_lea.vmem %s1, %s374
        %p376 = pneg %p94
        %p377 = pneg %p91
        %p378 = pneg %p115
        %p379 = pneg %p112
        %p380 = pneg %p136
        %p381 = pneg %p133
        %p382 = pneg %p157
        %p383 = pneg %p154
        %p384 = pneg %p178
        %p385 = pneg %p175
        %p386 = pneg %p199
        %p387 = pneg %p196
        %p388 = pneg %p220
        %p389 = pneg %p217
        %p390 = pneg %p241
        %p391 = pneg %p238
        %p392 = pneg %p262
        %p393 = pneg %p259
        %p394 = pneg %p290
        %p395 = pneg %p287
        %s396 = sand.u32 %s277, 1
        %s397 = scalar_lea.sflag [#allocation7], %s396
        %s398 = sand.u32 %s277, 1
        %s399 = smul.addr %s398, 8
        %s400 = scalar_lea.vmem [#allocation6], %s399
        %p401 = scmp.lt.s32.totalorder %s29, 1
        %s402 = scalar_select %p401, %s29, 1
        %p403 = scmp.lt.s32.totalorder %s30, 0
        %s404 = scalar_select %p403, %s30, 0
        %s405 = sadd.s32 %s404, %s402
        %s406 = smul.addr %s405, 8
        %s407 = scalar_lea.vmem %s0, %s406
        %p408 = scmp.lt.s32.totalorder %s29, 1
        %s409 = scalar_select %p408, %s29, 1
        %p410 = scmp.lt.s32.totalorder %s31, 0
        %s411 = scalar_select %p410, %s31, 0
        %s412 = sadd.s32 %s411, %s409
        %s413 = smul.addr %s412, 8
        %s414 = scalar_lea.vmem %s1, %s413
        %p416 = scmp.eq.s32.totalorder %s31, 0
        // Predicated region
        $region61: #{tpu_custom_call.1} parent=59 // pred_check
          %p417 = pneg %p416
        $region62: #{tpu_custom_call.1} parent=59 // pred_check_branch
          %419 = sbr.rel (%p417) target = $region64
        $region63: #{tpu_custom_call.1} parent=59 // pred_region
          %v420 = vld [vmem:[%s407] sm:$0xff]
          %v421 = vpack.c.bf16 %v420, %v420
          %v422 = vld [vmem:[%s2] sm:$0xf]
          %v423 = vld [vmem:[%s2 + $0x4] sm:$0xf]
          %v424 = vld [vmem:[%s2 + $0x8] sm:$0xf]
          %v425 = vld [vmem:[%s2 + $0xc] sm:$0xf]
          %v426 = vld [vmem:[%s2 + $0x10] sm:$0xf]
          %v427 = vld [vmem:[%s2 + $0x14] sm:$0xf]
          %v428 = vld [vmem:[%s2 + $0x18] sm:$0xf]
          %v429 = vld [vmem:[%s2 + $0x1c] sm:$0xf]
          %v430 = vld [vmem:[%s2 + $0x20] sm:$0xf]
          %v431 = vld [vmem:[%s2 + $0x24] sm:$0xf]
          %v432 = vld [vmem:[%s2 + $0x28] sm:$0xf]
          %v433 = vld [vmem:[%s2 + $0x2c] sm:$0xf]
          %v434 = vld [vmem:[%s2 + $0x30] sm:$0xf]
          %v435 = vld [vmem:[%s2 + $0x34] sm:$0xf]
          %v436 = vld [vmem:[%s2 + $0x38] sm:$0xf]
          %v437 = vld [vmem:[%s2 + $0x3c] sm:$0xf]
          %v438 = vld [vmem:[%s3] sm:$0x1]
          %v439 = vld [vmem:[%s3 + $0x1] sm:$0x1]
          %v440 = vld [vmem:[%s3 + $0x2] sm:$0x1]
          %v441 = vld [vmem:[%s3 + $0x3] sm:$0x1]
          %v446 = vlaneseq
          %v447 = vshrl.u32 %v446, 7
          %v448 = vsub.s32 0, %v447
          %v449 = vrot.slane %v438, %v448
          %v450 = vlaneseq
          %v451 = vshrl.u32 %v450, 7
          %v452 = vsub.s32 0, %v451
          %v453 = vrot.slane %v439, %v452
          %v454 = vlaneseq
          %v455 = vshrl.u32 %v454, 7
          %v456 = vsub.s32 0, %v455
          %v457 = vrot.slane %v440, %v456
          %v458 = vlaneseq
          %v459 = vshrl.u32 %v458, 7
          %v460 = vsub.s32 0, %v459
          %v461 = vrot.slane %v441, %v460
          %v470 = vunpack.c.l.b16 %v422
          %v471 = vunpack.c.l.b16 %v423
          %v472 = vunpack.c.l.b16 %v424
          %v473 = vunpack.c.l.b16 %v425
          %v474 = vpack.c.b16 %v471, %v470
          %v475 = vpack.c.b16 %v473, %v472
          %vm478 = vcmask 261120
          %v480 = vsel %vm478, %v421, 0
          %482 = vmatprep.subr.bf16.mxu0 0
          %483 = vmatpush1.bf16.msra.mxu0 %v474
          %484 = vmatprep.subr.bf16.mxu0 0
          %485 = vmatpush1.bf16.msra.mxu0 %v475
          %486 = vmatprep.subr.bf16.mxu0 0
          %487 = vmatpush1.bf16.msra.mxu0 0
          %488 = vmatprep.subr.bf16.mxu0 0
          %489 = vmatpush1.bf16.msra.mxu0 0
          %490 = vmatprep.subr.bf16.mxu0 0
          %491 = vmatpush1.bf16.msra.mxu0 0
          %492 = vmatprep.subr.bf16.mxu0 0
          %493 = vmatpush1.bf16.msra.mxu0 0
          %494 = vmatprep.subr.bf16.mxu0 0
          %495 = vmatpush1.bf16.msra.mxu0 0
          %496 = vmatprep.subr.bf16.mxu0 0
          %497 = vmatpush1.bf16.msra.mxu0 0
          %498 = vmatprep.subr.bf16.mxu0 0
          %499 = vmatpush1.bf16.msra.mxu0 0
          %500 = vmatprep.subr.bf16.mxu0 0
          %501 = vmatpush1.bf16.msra.mxu0 0
          %502 = vmatprep.subr.bf16.mxu0 0
          %503 = vmatpush1.bf16.msra.mxu0 0
          %504 = vmatprep.subr.bf16.mxu0 0
          %505 = vmatpush1.bf16.msra.mxu0 0
          %506 = vmatprep.subr.bf16.mxu0 0
          %507 = vmatpush1.bf16.msra.mxu0 0
          %508 = vmatprep.subr.bf16.mxu0 0
          %509 = vmatpush1.bf16.msra.mxu0 0
          %510 = vmatprep.subr.bf16.mxu0 0
          %511 = vmatpush1.bf16.msra.mxu0 0
          %512 = vmatprep.subr.bf16.mxu0 0
          %513 = vmatpush1.bf16.msra.mxu0 0
          %514 = vmatprep.mubr.bf16.mxu0 0
          %515 = vmatmul.mubr.bf16.gmra.mrb[0].mxu0 %v480
          %v516 = vpop.f32.mrb[0].mxu0
          %v517 = vadd.f32 %v449, %v516
          %v518 = vpop.f32.mrb[0].mxu0
          %v519 = vpop.f32.mrb[0].mxu0
          %v520 = vpop.f32.mrb[0].mxu0
          %521 = vdwg.mxu0
          %v526 = vunpack.c.l.b16 %v426
          %v527 = vunpack.c.l.b16 %v427
          %v528 = vunpack.c.l.b16 %v428
          %v529 = vunpack.c.l.b16 %v429
          %v530 = vpack.c.b16 %v527, %v526
          %v531 = vpack.c.b16 %v529, %v528
          %534 = vmatprep.subr.bf16.mxu0 0
          %535 = vmatpush1.bf16.msra.mxu0 %v530
          %536 = vmatprep.subr.bf16.mxu0 0
          %537 = vmatpush1.bf16.msra.mxu0 %v531
          %538 = vmatprep.subr.bf16.mxu0 0
          %539 = vmatpush1.bf16.msra.mxu0 0
          %540 = vmatprep.subr.bf16.mxu0 0
          %541 = vmatpush1.bf16.msra.mxu0 0
          %542 = vmatprep.subr.bf16.mxu0 0
          %543 = vmatpush1.bf16.msra.mxu0 0
          %544 = vmatprep.subr.bf16.mxu0 0
          %545 = vmatpush1.bf16.msra.mxu0 0
          %546 = vmatprep.subr.bf16.mxu0 0
          %547 = vmatpush1.bf16.msra.mxu0 0
          %548 = vmatprep.subr.bf16.mxu0 0
          %549 = vmatpush1.bf16.msra.mxu0 0
          %550 = vmatprep.subr.bf16.mxu0 0
          %551 = vmatpush1.bf16.msra.mxu0 0
          %552 = vmatprep.subr.bf16.mxu0 0
          %553 = vmatpush1.bf16.msra.mxu0 0
          %554 = vmatprep.subr.bf16.mxu0 0
          %555 = vmatpush1.bf16.msra.mxu0 0
          %556 = vmatprep.subr.bf16.mxu0 0
          %557 = vmatpush1.bf16.msra.mxu0 0
          %558 = vmatprep.subr.bf16.mxu0 0
          %559 = vmatpush1.bf16.msra.mxu0 0
          %560 = vmatprep.subr.bf16.mxu0 0
          %561 = vmatpush1.bf16.msra.mxu0 0
          %562 = vmatprep.subr.bf16.mxu0 0
          %563 = vmatpush1.bf16.msra.mxu0 0
          %564 = vmatprep.subr.bf16.mxu0 0
          %565 = vmatpush1.bf16.msra.mxu0 0
          %566 = vmatprep.mubr.bf16.mxu0 0
          %567 = vmatmul.mubr.bf16.gmra.mrb[0].mxu0 %v480
          %v568 = vpop.f32.mrb[0].mxu0
          %v569 = vadd.f32 %v453, %v568
          %v570 = vpop.f32.mrb[0].mxu0
          %v571 = vpop.f32.mrb[0].mxu0
          %v572 = vpop.f32.mrb[0].mxu0
          %573 = vdwg.mxu0
          %v578 = vunpack.c.l.b16 %v430
          %v579 = vunpack.c.l.b16 %v431
          %v580 = vunpack.c.l.b16 %v432
          %v581 = vunpack.c.l.b16 %v433
          %v582 = vpack.c.b16 %v579, %v578
          %v583 = vpack.c.b16 %v581, %v580
          %586 = vmatprep.subr.bf16.mxu0 0
          %587 = vmatpush1.bf16.msra.mxu0 %v582
          %588 = vmatprep.subr.bf16.mxu0 0
          %589 = vmatpush1.bf16.msra.mxu0 %v583
          %590 = vmatprep.subr.bf16.mxu0 0
          %591 = vmatpush1.bf16.msra.mxu0 0
          %592 = vmatprep.subr.bf16.mxu0 0
          %593 = vmatpush1.bf16.msra.mxu0 0
          %594 = vmatprep.subr.bf16.mxu0 0
          %595 = vmatpush1.bf16.msra.mxu0 0
          %596 = vmatprep.subr.bf16.mxu0 0
          %597 = vmatpush1.bf16.msra.mxu0 0
          %598 = vmatprep.subr.bf16.mxu0 0
          %599 = vmatpush1.bf16.msra.mxu0 0
          %600 = vmatprep.subr.bf16.mxu0 0
          %601 = vmatpush1.bf16.msra.mxu0 0
          %602 = vmatprep.subr.bf16.mxu0 0
          %603 = vmatpush1.bf16.msra.mxu0 0
          %604 = vmatprep.subr.bf16.mxu0 0
          %605 = vmatpush1.bf16.msra.mxu0 0
          %606 = vmatprep.subr.bf16.mxu0 0
          %607 = vmatpush1.bf16.msra.mxu0 0
          %608 = vmatprep.subr.bf16.mxu0 0
          %609 = vmatpush1.bf16.msra.mxu0 0
          %610 = vmatprep.subr.bf16.mxu0 0
          %611 = vmatpush1.bf16.msra.mxu0 0
          %612 = vmatprep.subr.bf16.mxu0 0
          %613 = vmatpush1.bf16.msra.mxu0 0
          %614 = vmatprep.subr.bf16.mxu0 0
          %615 = vmatpush1.bf16.msra.mxu0 0
          %616 = vmatprep.subr.bf16.mxu0 0
          %617 = vmatpush1.bf16.msra.mxu0 0
          %618 = vmatprep.mubr.bf16.mxu0 0
          %619 = vmatmul.mubr.bf16.gmra.mrb[0].mxu0 %v480
          %v620 = vpop.f32.mrb[0].mxu0
          %v621 = vadd.f32 %v457, %v620
          %v622 = vpop.f32.mrb[0].mxu0
          %v623 = vpop.f32.mrb[0].mxu0
          %v624 = vpop.f32.mrb[0].mxu0
          %625 = vdwg.mxu0
          %v630 = vunpack.c.l.b16 %v434
          %v631 = vunpack.c.l.b16 %v435
          %v632 = vunpack.c.l.b16 %v436
          %v633 = vunpack.c.l.b16 %v437
          %v634 = vpack.c.b16 %v631, %v630
          %v635 = vpack.c.b16 %v633, %v632
          %638 = vmatprep.subr.bf16.mxu0 0
          %639 = vmatpush1.bf16.msra.mxu0 %v634
          %640 = vmatprep.subr.bf16.mxu0 0
          %641 = vmatpush1.bf16.msra.mxu0 %v635
          %642 = vmatprep.subr.bf16.mxu0 0
          %643 = vmatpush1.bf16.msra.mxu0 0
          %644 = vmatprep.subr.bf16.mxu0 0
          %645 = vmatpush1.bf16.msra.mxu0 0
          %646 = vmatprep.subr.bf16.mxu0 0
          %647 = vmatpush1.bf16.msra.mxu0 0
          %648 = vmatprep.subr.bf16.mxu0 0
          %649 = vmatpush1.bf16.msra.mxu0 0
          %650 = vmatprep.subr.bf16.mxu0 0
          %651 = vmatpush1.bf16.msra.mxu0 0
          %652 = vmatprep.subr.bf16.mxu0 0
          %653 = vmatpush1.bf16.msra.mxu0 0
          %654 = vmatprep.subr.bf16.mxu0 0
          %655 = vmatpush1.bf16.msra.mxu0 0
          %656 = vmatprep.subr.bf16.mxu0 0
          %657 = vmatpush1.bf16.msra.mxu0 0
          %658 = vmatprep.subr.bf16.mxu0 0
          %659 = vmatpush1.bf16.msra.mxu0 0
          %660 = vmatprep.subr.bf16.mxu0 0
          %661 = vmatpush1.bf16.msra.mxu0 0
          %662 = vmatprep.subr.bf16.mxu0 0
          %663 = vmatpush1.bf16.msra.mxu0 0
          %664 = vmatprep.subr.bf16.mxu0 0
          %665 = vmatpush1.bf16.msra.mxu0 0
          %666 = vmatprep.subr.bf16.mxu0 0
          %667 = vmatpush1.bf16.msra.mxu0 0
          %668 = vmatprep.subr.bf16.mxu0 0
          %669 = vmatpush1.bf16.msra.mxu0 0
          %670 = vmatprep.mubr.bf16.mxu0 0
          %671 = vmatmul.mubr.bf16.gmra.mrb[0].mxu0 %v480
          %v672 = vpop.f32.mrb[0].mxu0
          %v673 = vadd.f32 %v461, %v672
          %v674 = vpop.f32.mrb[0].mxu0
          %v675 = vpop.f32.mrb[0].mxu0
          %v676 = vpop.f32.mrb[0].mxu0
          %677 = vdwg.mxu0
          %v678 = vpack.c.bf16 %v517, %v517
          %v679 = vpack.c.bf16 %v569, %v569
          %v680 = vpack.c.bf16 %v621, %v621
          %v681 = vpack.c.bf16 %v673, %v673
          %vm682 = vcmask 60416
          %683 = vst.msk [vmem:[#allocation2] sm:$0xf] %vm682, %v678
          %684 = vst.msk [vmem:[#allocation2 + $0x4] sm:$0xf] %vm682, %v679
          %685 = vst.msk [vmem:[#allocation2 + $0x8] sm:$0xf] %vm682, %v680
          %686 = vst.msk [vmem:[#allocation2 + $0xc] sm:$0xf] %vm682, %v681
          %vm687 = vcmask 7168
          %688 = vst.msk [vmem:[#allocation3] sm:$0xff] %vm687, -inf
          %689 = vst.msk [vmem:[#allocation3 + $0x8] sm:$0xff] %vm687, -inf
          %690 = vst.msk [vmem:[#allocation3 + $0x10] sm:$0xff] %vm687, -inf
          %691 = vst.msk [vmem:[#allocation3 + $0x18] sm:$0xff] %vm687, -inf
          %692 = vst.msk [vmem:[#allocation4] sm:$0xff] %vm687, 0.0
          %693 = vst.msk [vmem:[#allocation4 + $0x8] sm:$0xff] %vm687, 0.0
          %694 = vst.msk [vmem:[#allocation4 + $0x10] sm:$0xff] %vm687, 0.0
          %695 = vst.msk [vmem:[#allocation4 + $0x18] sm:$0xff] %vm687, 0.0
          %vm696 = vcmask 64512
          %697 = vst.msk [vmem:[#allocation5] sm:$0xff] %vm696, 0.0
          %698 = vst.msk [vmem:[#allocation5 + $0x8] sm:$0xff] %vm696, 0.0
          %699 = vst.msk [vmem:[#allocation5 + $0x10] sm:$0xff] %vm696, 0.0
          %700 = vst.msk [vmem:[#allocation5 + $0x18] sm:$0xff] %vm696, 0.0
        $region64: #{tpu_custom_call.1} parent=59 // pred_fallthru
          _
        %s701 = smul.u32 %s31, 8
        %s702 = smul.u32 %s30, 8
        %s703 = sadd.s32 %s702, 7
        %p704 = scmp.le.s32.totalorder %s701, %s703
        // Predicated region
        $region65: #{tpu_custom_call.1} parent=59 // pred_check
          %p705 = pneg %p704
        $region66: #{tpu_custom_call.1} parent=59 // pred_check_branch
          %707 = sbr.rel (%p705) target = $region68
        $region67: #{tpu_custom_call.1} parent=59 // pred_region
          %v708 = vld [vmem:[%s414] sm:$0xff]
          %v709 = vpack.c.bf16 %v708, %v708
          %v710 = vld [vmem:[%s4] sm:$0xf]
          %v711 = vld [vmem:[%s4 + $0x4] sm:$0xf]
          %v712 = vld [vmem:[%s4 + $0x8] sm:$0xf]
          %v713 = vld [vmem:[%s4 + $0xc] sm:$0xf]
          %v714 = vld [vmem:[%s5] sm:$0x1]
          %v716 = vlaneseq
          %v717 = vshrl.u32 %v716, 7
          %v718 = vsub.s32 0, %v717
          %v719 = vrot.slane %v714, %v718
          %v725 = vunpack.c.l.b16 %v710
          %v726 = vunpack.c.l.b16 %v711
          %v727 = vunpack.c.l.b16 %v712
          %v728 = vunpack.c.l.b16 %v713
          %v729 = vpack.c.b16 %v726, %v725
          %v730 = vpack.c.b16 %v728, %v727
          %vm733 = vcmask 261120
          %v735 = vsel %vm733, %v709, 0
          %737 = vmatprep.subr.bf16.mxu0 0
          %738 = vmatpush1.bf16.msra.mxu0 %v729
          %739 = vmatprep.subr.bf16.mxu0 0
          %740 = vmatpush1.bf16.msra.mxu0 %v730
          %741 = vmatprep.subr.bf16.mxu0 0
          %742 = vmatpush1.bf16.msra.mxu0 0
          %743 = vmatprep.subr.bf16.mxu0 0
          %744 = vmatpush1.bf16.msra.mxu0 0
          %745 = vmatprep.subr.bf16.mxu0 0
          %746 = vmatpush1.bf16.msra.mxu0 0
          %747 = vmatprep.subr.bf16.mxu0 0
          %748 = vmatpush1.bf16.msra.mxu0 0
          %749 = vmatprep.subr.bf16.mxu0 0
          %750 = vmatpush1.bf16.msra.mxu0 0
          %751 = vmatprep.subr.bf16.mxu0 0
          %752 = vmatpush1.bf16.msra.mxu0 0
          %753 = vmatprep.subr.bf16.mxu0 0
          %754 = vmatpush1.bf16.msra.mxu0 0
          %755 = vmatprep.subr.bf16.mxu0 0
          %756 = vmatpush1.bf16.msra.mxu0 0
          %757 = vmatprep.subr.bf16.mxu0 0
          %758 = vmatpush1.bf16.msra.mxu0 0
          %759 = vmatprep.subr.bf16.mxu0 0
          %760 = vmatpush1.bf16.msra.mxu0 0
          %761 = vmatprep.subr.bf16.mxu0 0
          %762 = vmatpush1.bf16.msra.mxu0 0
          %763 = vmatprep.subr.bf16.mxu0 0
          %764 = vmatpush1.bf16.msra.mxu0 0
          %765 = vmatprep.subr.bf16.mxu0 0
          %766 = vmatpush1.bf16.msra.mxu0 0
          %767 = vmatprep.subr.bf16.mxu0 0
          %768 = vmatpush1.bf16.msra.mxu0 0
          %769 = vmatprep.mubr.bf16.mxu0 0
          %770 = vmatmul.mubr.bf16.gmra.mrb[0].mxu0 %v735
          %v771 = vpop.f32.mrb[0].mxu0
          %v772 = vadd.f32 %v719, %v771
          %v773 = vpop.f32.mrb[0].mxu0
          %v774 = vpop.f32.mrb[0].mxu0
          %v775 = vpop.f32.mrb[0].mxu0
          %776 = vdwg.mxu0
          %v777 = vpack.c.bf16 %v772, %v772
          %v778 = vld [vmem:[%s6] sm:$0xf]
          %v779 = vld [vmem:[%s6 + $0x4] sm:$0xf]
          %v780 = vld [vmem:[%s6 + $0x8] sm:$0xf]
          %v781 = vld [vmem:[%s6 + $0xc] sm:$0xf]
          %v782 = vld [vmem:[%s7] sm:$0x1]
          %v784 = vlaneseq
          %v785 = vshrl.u32 %v784, 7
          %v786 = vsub.s32 0, %v785
          %v787 = vrot.slane %v782, %v786
          %v793 = vunpack.c.l.b16 %v778
          %v794 = vunpack.c.l.b16 %v779
          %v795 = vunpack.c.l.b16 %v780
          %v796 = vunpack.c.l.b16 %v781
          %v797 = vpack.c.b16 %v794, %v793
          %v798 = vpack.c.b16 %v796, %v795
          %801 = vmatprep.subr.bf16.mxu0 0
          %802 = vmatpush1.bf16.msra.mxu0 %v797
          %803 = vmatprep.subr.bf16.mxu0 0
          %804 = vmatpush1.bf16.msra.mxu0 %v798
          %805 = vmatprep.subr.bf16.mxu0 0
          %806 = vmatpush1.bf16.msra.mxu0 0
          %807 = vmatprep.subr.bf16.mxu0 0
          %808 = vmatpush1.bf16.msra.mxu0 0
          %809 = vmatprep.subr.bf16.mxu0 0
          %810 = vmatpush1.bf16.msra.mxu0 0
          %811 = vmatprep.subr.bf16.mxu0 0
          %812 = vmatpush1.bf16.msra.mxu0 0
          %813 = vmatprep.subr.bf16.mxu0 0
          %814 = vmatpush1.bf16.msra.mxu0 0
          %815 = vmatprep.subr.bf16.mxu0 0
          %816 = vmatpush1.bf16.msra.mxu0 0
          %817 = vmatprep.subr.bf16.mxu0 0
          %818 = vmatpush1.bf16.msra.mxu0 0
          %819 = vmatprep.subr.bf16.mxu0 0
          %820 = vmatpush1.bf16.msra.mxu0 0
          %821 = vmatprep.subr.bf16.mxu0 0
          %822 = vmatpush1.bf16.msra.mxu0 0
          %823 = vmatprep.subr.bf16.mxu0 0
          %824 = vmatpush1.bf16.msra.mxu0 0
          %825 = vmatprep.subr.bf16.mxu0 0
          %826 = vmatpush1.bf16.msra.mxu0 0
          %827 = vmatprep.subr.bf16.mxu0 0
          %828 = vmatpush1.bf16.msra.mxu0 0
          %829 = vmatprep.subr.bf16.mxu0 0
          %830 = vmatpush1.bf16.msra.mxu0 0
          %831 = vmatprep.subr.bf16.mxu0 0
          %832 = vmatpush1.bf16.msra.mxu0 0
          %833 = vmatprep.mubr.bf16.mxu0 0
          %834 = vmatmul.mubr.bf16.gmra.mrb[0].mxu0 %v735
          %v835 = vpop.f32.mrb[0].mxu0
          %v836 = vadd.f32 %v787, %v835
          %v837 = vpop.f32.mrb[0].mxu0
          %v838 = vpop.f32.mrb[0].mxu0
          %v839 = vpop.f32.mrb[0].mxu0
          %840 = vdwg.mxu0
          %v841 = vpack.c.bf16 %v836, %v836
          %v842 = vld [vmem:[#allocation2] sm:$0xf]
          %v843 = vld [vmem:[#allocation2 + $0x4] sm:$0xf]
          %v844 = vld [vmem:[#allocation2 + $0x8] sm:$0xf]
          %v845 = vld [vmem:[#allocation2 + $0xc] sm:$0xf]
          %vm846 = vcmask 64512
          %v848 = vsel %vm846, %v842, 0
          %v851 = vsel %vm846, %v777, 0
          %853 = vmatprep.subr.bf16.mxu0 0
          %854 = vmatpush1.bf16.xpose.msra.mxu0 %v851
          %855 = vmatprep.subr.bf16.mxu0 0
          %856 = vmatpush1.bf16.xpose.msra.mxu0 0
          %857 = vmatprep.subr.bf16.mxu0 0
          %858 = vmatpush1.bf16.xpose.msra.mxu0 0
          %859 = vmatprep.subr.bf16.mxu0 0
          %860 = vmatpush1.bf16.xpose.msra.mxu0 0
          %861 = vmatprep.subr.bf16.mxu0 0
          %862 = vmatpush1.bf16.xpose.msra.mxu0 0
          %863 = vmatprep.subr.bf16.mxu0 0
          %864 = vmatpush1.bf16.xpose.msra.mxu0 0
          %865 = vmatprep.subr.bf16.mxu0 0
          %866 = vmatpush1.bf16.xpose.msra.mxu0 0
          %867 = vmatprep.subr.bf16.mxu0 0
          %868 = vmatpush1.bf16.xpose.msra.mxu0 0
          %869 = vmatprep.subr.bf16.mxu0 0
          %870 = vmatpush1.bf16.xpose.msra.mxu0 0
          %871 = vmatprep.subr.bf16.mxu0 0
          %872 = vmatpush1.bf16.xpose.msra.mxu0 0
          %873 = vmatprep.subr.bf16.mxu0 0
          %874 = vmatpush1.bf16.xpose.msra.mxu0 0
          %875 = vmatprep.subr.bf16.mxu0 0
          %876 = vmatpush1.bf16.xpose.msra.mxu0 0
          %877 = vmatprep.subr.bf16.mxu0 0
          %878 = vmatpush1.bf16.xpose.msra.mxu0 0
          %879 = vmatprep.subr.bf16.mxu0 0
          %880 = vmatpush1.bf16.xpose.msra.mxu0 0
          %881 = vmatprep.subr.bf16.mxu0 0
          %882 = vmatpush1.bf16.xpose.msra.mxu0 0
          %883 = vmatprep.subr.bf16.mxu0 0
          %884 = vmatpush1.bf16.xpose.msra.mxu0 0
          %885 = vmatprep.mubr.bf16.mxu0 0
          %886 = vmatmul.mubr.bf16.gmra.mrb[0].mxu0 %v848
          %v887 = vpop.f32.mrb[0].mxu0
          %v888 = vadd.f32 0.0, %v887
          %v889 = vpop.f32.mrb[0].mxu0
          %v890 = vpop.f32.mrb[0].mxu0
          %v891 = vpop.f32.mrb[0].mxu0
          %892 = vdwg.mxu0
          %v894 = vsel %vm846, %v843, 0
          %896 = vmatprep.subr.bf16.mxu0 0
          %897 = vmatpush1.bf16.xpose.msra.mxu0 %v851
          %898 = vmatprep.subr.bf16.mxu0 0
          %899 = vmatpush1.bf16.xpose.msra.mxu0 0
          %900 = vmatprep.subr.bf16.mxu0 0
          %901 = vmatpush1.bf16.xpose.msra.mxu0 0
          %902 = vmatprep.subr.bf16.mxu0 0
          %903 = vmatpush1.bf16.xpose.msra.mxu0 0
          %904 = vmatprep.subr.bf16.mxu0 0
          %905 = vmatpush1.bf16.xpose.msra.mxu0 0
          %906 = vmatprep.subr.bf16.mxu0 0
          %907 = vmatpush1.bf16.xpose.msra.mxu0 0
          %908 = vmatprep.subr.bf16.mxu0 0
          %909 = vmatpush1.bf16.xpose.msra.mxu0 0
          %910 = vmatprep.subr.bf16.mxu0 0
          %911 = vmatpush1.bf16.xpose.msra.mxu0 0
          %912 = vmatprep.subr.bf16.mxu0 0
          %913 = vmatpush1.bf16.xpose.msra.mxu0 0
          %914 = vmatprep.subr.bf16.mxu0 0
          %915 = vmatpush1.bf16.xpose.msra.mxu0 0
          %916 = vmatprep.subr.bf16.mxu0 0
          %917 = vmatpush1.bf16.xpose.msra.mxu0 0
          %918 = vmatprep.subr.bf16.mxu0 0
          %919 = vmatpush1.bf16.xpose.msra.mxu0 0
          %920 = vmatprep.subr.bf16.mxu0 0
          %921 = vmatpush1.bf16.xpose.msra.mxu0 0
          %922 = vmatprep.subr.bf16.mxu0 0
          %923 = vmatpush1.bf16.xpose.msra.mxu0 0
          %924 = vmatprep.subr.bf16.mxu0 0
          %925 = vmatpush1.bf16.xpose.msra.mxu0 0
          %926 = vmatprep.subr.bf16.mxu0 0
          %927 = vmatpush1.bf16.xpose.msra.mxu0 0
          %928 = vmatprep.mubr.bf16.mxu0 0
          %929 = vmatmul.mubr.bf16.gmra.mrb[0].mxu0 %v894
          %v930 = vpop.f32.mrb[0].mxu0
          %v931 = vadd.f32 0.0, %v930
          %v932 = vpop.f32.mrb[0].mxu0
          %v933 = vpop.f32.mrb[0].mxu0
          %v934 = vpop.f32.mrb[0].mxu0
          %935 = vdwg.mxu0
          %v937 = vsel %vm846, %v844, 0
          %939 = vmatprep.subr.bf16.mxu0 0
          %940 = vmatpush1.bf16.xpose.msra.mxu0 %v851
          %941 = vmatprep.subr.bf16.mxu0 0
          %942 = vmatpush1.bf16.xpose.msra.mxu0 0
          %943 = vmatprep.subr.bf16.mxu0 0
          %944 = vmatpush1.bf16.xpose.msra.mxu0 0
          %945 = vmatprep.subr.bf16.mxu0 0
          %946 = vmatpush1.bf16.xpose.msra.mxu0 0
          %947 = vmatprep.subr.bf16.mxu0 0
          %948 = vmatpush1.bf16.xpose.msra.mxu0 0
          %949 = vmatprep.subr.bf16.mxu0 0
          %950 = vmatpush1.bf16.xpose.msra.mxu0 0
          %951 = vmatprep.subr.bf16.mxu0 0
          %952 = vmatpush1.bf16.xpose.msra.mxu0 0
          %953 = vmatprep.subr.bf16.mxu0 0
          %954 = vmatpush1.bf16.xpose.msra.mxu0 0
          %955 = vmatprep.subr.bf16.mxu0 0
          %956 = vmatpush1.bf16.xpose.msra.mxu0 0
          %957 = vmatprep.subr.bf16.mxu0 0
          %958 = vmatpush1.bf16.xpose.msra.mxu0 0
          %959 = vmatprep.subr.bf16.mxu0 0
          %960 = vmatpush1.bf16.xpose.msra.mxu0 0
          %961 = vmatprep.subr.bf16.mxu0 0
          %962 = vmatpush1.bf16.xpose.msra.mxu0 0
          %963 = vmatprep.subr.bf16.mxu0 0
          %964 = vmatpush1.bf16.xpose.msra.mxu0 0
          %965 = vmatprep.subr.bf16.mxu0 0
          %966 = vmatpush1.bf16.xpose.msra.mxu0 0
          %967 = vmatprep.subr.bf16.mxu0 0
          %968 = vmatpush1.bf16.xpose.msra.mxu0 0
          %969 = vmatprep.subr.bf16.mxu0 0
          %970 = vmatpush1.bf16.xpose.msra.mxu0 0
          %971 = vmatprep.mubr.bf16.mxu0 0
          %972 = vmatmul.mubr.bf16.gmra.mrb[0].mxu0 %v937
          %v973 = vpop.f32.mrb[0].mxu0
          %v974 = vadd.f32 0.0, %v973
          %v975 = vpop.f32.mrb[0].mxu0
          %v976 = vpop.f32.mrb[0].mxu0
          %v977 = vpop.f32.mrb[0].mxu0
          %978 = vdwg.mxu0
          %v980 = vsel %vm846, %v845, 0
          %982 = vmatprep.subr.bf16.mxu0 0
          %983 = vmatpush1.bf16.xpose.msra.mxu0 %v851
          %984 = vmatprep.subr.bf16.mxu0 0
          %985 = vmatpush1.bf16.xpose.msra.mxu0 0
          %986 = vmatprep.subr.bf16.mxu0 0
          %987 = vmatpush1.bf16.xpose.msra.mxu0 0
          %988 = vmatprep.subr.bf16.mxu0 0
          %989 = vmatpush1.bf16.xpose.msra.mxu0 0
          %990 = vmatprep.subr.bf16.mxu0 0
          %991 = vmatpush1.bf16.xpose.msra.mxu0 0
          %992 = vmatprep.subr.bf16.mxu0 0
          %993 = vmatpush1.bf16.xpose.msra.mxu0 0
          %994 = vmatprep.subr.bf16.mxu0 0
          %995 = vmatpush1.bf16.xpose.msra.mxu0 0
          %996 = vmatprep.subr.bf16.mxu0 0
          %997 = vmatpush1.bf16.xpose.msra.mxu0 0
          %998 = vmatprep.subr.bf16.mxu0 0
          %999 = vmatpush1.bf16.xpose.msra.mxu0 0
          %1000 = vmatprep.subr.bf16.mxu0 0
          %1001 = vmatpush1.bf16.xpose.msra.mxu0 0
          %1002 = vmatprep.subr.bf16.mxu0 0
          %1003 = vmatpush1.bf16.xpose.msra.mxu0 0
          %1004 = vmatprep.subr.bf16.mxu0 0
          %1005 = vmatpush1.bf16.xpose.msra.mxu0 0
          %1006 = vmatprep.subr.bf16.mxu0 0
          %1007 = vmatpush1.bf16.xpose.msra.mxu0 0
          %1008 = vmatprep.subr.bf16.mxu0 0
          %1009 = vmatpush1.bf16.xpose.msra.mxu0 0
          %1010 = vmatprep.subr.bf16.mxu0 0
          %1011 = vmatpush1.bf16.xpose.msra.mxu0 0
          %1012 = vmatprep.subr.bf16.mxu0 0
          %1013 = vmatpush1.bf16.xpose.msra.mxu0 0
          %1014 = vmatprep.mubr.bf16.mxu0 0
          %1015 = vmatmul.mubr.bf16.gmra.mrb[0].mxu0 %v980
          %v1016 = vpop.f32.mrb[0].mxu0
          %v1017 = vadd.f32 0.0, %v1016
          %v1018 = vpop.f32.mrb[0].mxu0
          %v1019 = vpop.f32.mrb[0].mxu0
          %v1020 = vpop.f32.mrb[0].mxu0
          %1021 = vdwg.mxu0
          %v1022 = vlaneseq
          %v1023 = vshrl.u32 %v1022, 7
          %v1024 = vstv %s702
          %v1025 = vadd.s32 %v1024, %v1023
          %v1026 = vlaneseq
          %v1027 = vand.u32 %v1026, 127
          %v1028 = vstv %s701
          %v1029 = vadd.s32 %v1028, %v1027
          %vm1030 = vcmp.ge.s32.totalorder %v1025, %v1029
          %v1031 = vsel %vm1030, 1, 0
          %vm1032 = vcmp.eq.s32.totalorder %v1031, 1
          %v1033 = vsel %vm1032, %v888, -1e+30
          %v1034 = vsel %vm1032, %v931, -1e+30
          %v1035 = vsel %vm1032, %v974, -1e+30
          %v1036 = vsel %vm1032, %v1017, -1e+30
          %v1037 = vld [vmem:[#allocation3] sm:$0xff]
          %v1038 = vld [vmem:[#allocation3 + $0x8] sm:$0xff]
          %v1039 = vld [vmem:[#allocation3 + $0x10] sm:$0xff]
          %v1040 = vld [vmem:[#allocation3 + $0x18] sm:$0xff]
          %v1041 = vsel %vm846, %v1033, -inf
          %1042 = vmax.xlane.f32.xlu0 %v1041
          %v1043 = vpop.xlane.xlu0 %1042
          %v1044 = vsel %vm846, %v1034, -inf
          %1045 = vmax.xlane.f32.xlu0 %v1044
          %v1046 = vpop.xlane.xlu0 %1045
          %v1047 = vsel %vm846, %v1035, -inf
          %1048 = vmax.xlane.f32.xlu0 %v1047
          %v1049 = vpop.xlane.xlu0 %1048
          %v1050 = vsel %vm846, %v1036, -inf
          %1051 = vmax.xlane.f32.xlu0 %v1050
          %v1052 = vpop.xlane.xlu0 %1051
          %v1053 = vmax.f32 %v1037, %v1043
          %v1054 = vmax.f32 %v1038, %v1046
          %v1055 = vmax.f32 %v1039, %v1049
          %v1056 = vmax.f32 %v1040, %v1052
          %v1057 = vsub.f32 %v1037, %v1053
          %v1058 = vsub.f32 %v1038, %v1054
          %v1059 = vsub.f32 %v1039, %v1055
          %v1060 = vsub.f32 %v1040, %v1056
          %v1061 = vmul.f32 %v1057, 1.442695
          %v1062 = vpow.pop %v1061
          %v1063 = vmul.f32 %v1058, 1.442695
          %v1064 = vpow.pop %v1063
          %v1065 = vmul.f32 %v1059, 1.442695
          %v1066 = vpow.pop %v1065
          %v1067 = vmul.f32 %v1060, 1.442695
          %v1068 = vpow.pop %v1067
          %1070 = vset.pattern.permute.xlu0 0
          %1071 = vperm.xlu0 %1070, %v1053
          %v1072 = vpop.permute.xlu0 %1071
          %1075 = vset.pattern.permute.xlu0 0
          %1076 = vperm.xlu0 %1075, %v1054
          %v1077 = vpop.permute.xlu0 %1076
          %1080 = vset.pattern.permute.xlu0 0
          %1081 = vperm.xlu0 %1080, %v1055
          %v1082 = vpop.permute.xlu0 %1081
          %1085 = vset.pattern.permute.xlu0 0
          %1086 = vperm.xlu0 %1085, %v1056
          %v1087 = vpop.permute.xlu0 %1086
          %v1089 = vsub.f32 %v1033, %v1072
          %v1090 = vsub.f32 %v1034, %v1077
          %v1091 = vsub.f32 %v1035, %v1082
          %v1092 = vsub.f32 %v1036, %v1087
          %v1093 = vmul.f32 %v1089, 1.442695
          %v1094 = vpow.pop %v1093
          %v1095 = vmul.f32 %v1090, 1.442695
          %v1096 = vpow.pop %v1095
          %v1097 = vmul.f32 %v1091, 1.442695
          %v1098 = vpow.pop %v1097
          %v1099 = vmul.f32 %v1092, 1.442695
          %v1100 = vpow.pop %v1099
          %v1101 = vld [vmem:[#allocation4] sm:$0xff]
          %v1102 = vld [vmem:[#allocation4 + $0x8] sm:$0xff]
          %v1103 = vld [vmem:[#allocation4 + $0x10] sm:$0xff]
          %v1104 = vld [vmem:[#allocation4 + $0x18] sm:$0xff]
          %v1105 = vmul.f32 %v1062, %v1101
          %v1106 = vmul.f32 %v1064, %v1102
          %v1107 = vmul.f32 %v1066, %v1103
          %v1108 = vmul.f32 %v1068, %v1104
          %v1109 = vsel %vm846, %v1094, 0.0
          %1110 = vadd.xlane.f32.xlu0 %v1109
          %v1111 = vpop.xlane.xlu0 %1110
          %v1112 = vsel %vm846, %v1096, 0.0
          %1113 = vadd.xlane.f32.xlu0 %v1112
          %v1114 = vpop.xlane.xlu0 %1113
          %v1115 = vsel %vm846, %v1098, 0.0
          %1116 = vadd.xlane.f32.xlu0 %v1115
          %v1117 = vpop.xlane.xlu0 %1116
          %v1118 = vsel %vm846, %v1100, 0.0
          %1119 = vadd.xlane.f32.xlu0 %v1118
          %v1120 = vpop.xlane.xlu0 %1119
          %v1121 = vadd.f32 %v1105, %v1111
          %v1122 = vadd.f32 %v1106, %v1114
          %v1123 = vadd.f32 %v1107, %v1117
          %v1124 = vadd.f32 %v1108, %v1120
          %vm1125 = vcmask 7168
          %1126 = vst.msk [vmem:[#allocation4] sm:$0xff] %vm1125, %v1121
          %1127 = vst.msk [vmem:[#allocation4 + $0x8] sm:$0xff] %vm1125, %v1122
          %1128 = vst.msk [vmem:[#allocation4 + $0x10] sm:$0xff] %vm1125, %v1123
          %1129 = vst.msk [vmem:[#allocation4 + $0x18] sm:$0xff] %vm1125, %v1124
          %v1130 = vld [vmem:[#allocation5] sm:$0xff]
          %v1131 = vld [vmem:[#allocation5 + $0x8] sm:$0xff]
          %v1132 = vld [vmem:[#allocation5 + $0x10] sm:$0xff]
          %v1133 = vld [vmem:[#allocation5 + $0x18] sm:$0xff]
          %1135 = vset.pattern.permute.xlu0 0
          %1136 = vperm.xlu0 %1135, %v1062
          %v1137 = vpop.permute.xlu0 %1136
          %1140 = vset.pattern.permute.xlu0 0
          %1141 = vperm.xlu0 %1140, %v1064
          %v1142 = vpop.permute.xlu0 %1141
          %1145 = vset.pattern.permute.xlu0 0
          %1146 = vperm.xlu0 %1145, %v1066
          %v1147 = vpop.permute.xlu0 %1146
          %1150 = vset.pattern.permute.xlu0 0
          %1151 = vperm.xlu0 %1150, %v1068
          %v1152 = vpop.permute.xlu0 %1151
          %v1154 = vmul.f32 %v1137, %v1130
          %v1155 = vmul.f32 %v1142, %v1131
          %v1156 = vmul.f32 %v1147, %v1132
          %v1157 = vmul.f32 %v1152, %v1133
          %v1158 = vpack.c.bf16 %v1094, %v1094
          %v1159 = vpack.c.bf16 %v1096, %v1096
          %v1160 = vpack.c.bf16 %v1098, %v1098
          %v1161 = vpack.c.bf16 %v1100, %v1100
          %v1163 = vsel %vm846, %v1158, 0
          %vm1165 = vcmask 1043456
          %v1167 = vsel %vm1165, %v841, 0
          %1169 = vmatprep.subr.bf16.mxu0 0
          %1170 = vmatpush1.bf16.msra.mxu0 %v1167
          %1171 = vmatprep.subr.bf16.mxu0 0
          %1172 = vmatpush1.bf16.msra.mxu0 0
          %1173 = vmatprep.subr.bf16.mxu0 0
          %1174 = vmatpush1.bf16.msra.mxu0 0
          %1175 = vmatprep.subr.bf16.mxu0 0
          %1176 = vmatpush1.bf16.msra.mxu0 0
          %1177 = vmatprep.subr.bf16.mxu0 0
          %1178 = vmatpush1.bf16.msra.mxu0 0
          %1179 = vmatprep.subr.bf16.mxu0 0
          %1180 = vmatpush1.bf16.msra.mxu0 0
          %1181 = vmatprep.subr.bf16.mxu0 0
          %1182 = vmatpush1.bf16.msra.mxu0 0
          %1183 = vmatprep.subr.bf16.mxu0 0
          %1184 = vmatpush1.bf16.msra.mxu0 0
          %1185 = vmatprep.subr.bf16.mxu0 0
          %1186 = vmatpush1.bf16.msra.mxu0 0
          %1187 = vmatprep.subr.bf16.mxu0 0
          %1188 = vmatpush1.bf16.msra.mxu0 0
          %1189 = vmatprep.subr.bf16.mxu0 0
          %1190 = vmatpush1.bf16.msra.mxu0 0
          %1191 = vmatprep.subr.bf16.mxu0 0
          %1192 = vmatpush1.bf16.msra.mxu0 0
          %1193 = vmatprep.subr.bf16.mxu0 0
          %1194 = vmatpush1.bf16.msra.mxu0 0
          %1195 = vmatprep.subr.bf16.mxu0 0
          %1196 = vmatpush1.bf16.msra.mxu0 0
          %1197 = vmatprep.subr.bf16.mxu0 0
          %1198 = vmatpush1.bf16.msra.mxu0 0
          %1199 = vmatprep.subr.bf16.mxu0 0
          %1200 = vmatpush1.bf16.msra.mxu0 0
          %1201 = vmatprep.mubr.bf16.mxu0 0
          %1202 = vmatmul.mubr.bf16.gmra.mrb[0].mxu0 %v1163
          %v1203 = vpop.f32.mrb[0].mxu0
          %v1204 = vadd.f32 0.0, %v1203
          %v1205 = vpop.f32.mrb[0].mxu0
          %v1206 = vpop.f32.mrb[0].mxu0
          %v1207 = vpop.f32.mrb[0].mxu0
          %1208 = vdwg.mxu0
          %v1210 = vsel %vm846, %v1159, 0
          %1212 = vmatprep.subr.bf16.mxu0 0
          %1213 = vmatpush1.bf16.msra.mxu0 %v1167
          %1214 = vmatprep.subr.bf16.mxu0 0
          %1215 = vmatpush1.bf16.msra.mxu0 0
          %1216 = vmatprep.subr.bf16.mxu0 0
          %1217 = vmatpush1.bf16.msra.mxu0 0
          %1218 = vmatprep.subr.bf16.mxu0 0
          %1219 = vmatpush1.bf16.msra.mxu0 0
          %1220 = vmatprep.subr.bf16.mxu0 0
          %1221 = vmatpush1.bf16.msra.mxu0 0
          %1222 = vmatprep.subr.bf16.mxu0 0
          %1223 = vmatpush1.bf16.msra.mxu0 0
          %1224 = vmatprep.subr.bf16.mxu0 0
          %1225 = vmatpush1.bf16.msra.mxu0 0
          %1226 = vmatprep.subr.bf16.mxu0 0
          %1227 = vmatpush1.bf16.msra.mxu0 0
          %1228 = vmatprep.subr.bf16.mxu0 0
          %1229 = vmatpush1.bf16.msra.mxu0 0
          %1230 = vmatprep.subr.bf16.mxu0 0
          %1231 = vmatpush1.bf16.msra.mxu0 0
          %1232 = vmatprep.subr.bf16.mxu0 0
          %1233 = vmatpush1.bf16.msra.mxu0 0
          %1234 = vmatprep.subr.bf16.mxu0 0
          %1235 = vmatpush1.bf16.msra.mxu0 0
          %1236 = vmatprep.subr.bf16.mxu0 0
          %1237 = vmatpush1.bf16.msra.mxu0 0
          %1238 = vmatprep.subr.bf16.mxu0 0
          %1239 = vmatpush1.bf16.msra.mxu0 0
          %1240 = vmatprep.subr.bf16.mxu0 0
          %1241 = vmatpush1.bf16.msra.mxu0 0
          %1242 = vmatprep.subr.bf16.mxu0 0
          %1243 = vmatpush1.bf16.msra.mxu0 0
          %1244 = vmatprep.mubr.bf16.mxu0 0
          %1245 = vmatmul.mubr.bf16.gmra.mrb[0].mxu0 %v1210
          %v1246 = vpop.f32.mrb[0].mxu0
          %v1247 = vadd.f32 0.0, %v1246
          %v1248 = vpop.f32.mrb[0].mxu0
          %v1249 = vpop.f32.mrb[0].mxu0
          %v1250 = vpop.f32.mrb[0].mxu0
          %1251 = vdwg.mxu0
          %v1253 = vsel %vm846, %v1160, 0
          %1255 = vmatprep.subr.bf16.mxu0 0
          %1256 = vmatpush1.bf16.msra.mxu0 %v1167
          %1257 = vmatprep.subr.bf16.mxu0 0
          %1258 = vmatpush1.bf16.msra.mxu0 0
          %1259 = vmatprep.subr.bf16.mxu0 0
          %1260 = vmatpush1.bf16.msra.mxu0 0
          %1261 = vmatprep.subr.bf16.mxu0 0
          %1262 = vmatpush1.bf16.msra.mxu0 0
          %1263 = vmatprep.subr.bf16.mxu0 0
          %1264 = vmatpush1.bf16.msra.mxu0 0
          %1265 = vmatprep.subr.bf16.mxu0 0
          %1266 = vmatpush1.bf16.msra.mxu0 0
          %1267 = vmatprep.subr.bf16.mxu0 0
          %1268 = vmatpush1.bf16.msra.mxu0 0
          %1269 = vmatprep.subr.bf16.mxu0 0
          %1270 = vmatpush1.bf16.msra.mxu0 0
          %1271 = vmatprep.subr.bf16.mxu0 0
          %1272 = vmatpush1.bf16.msra.mxu0 0
          %1273 = vmatprep.subr.bf16.mxu0 0
          %1274 = vmatpush1.bf16.msra.mxu0 0
          %1275 = vmatprep.subr.bf16.mxu0 0
          %1276 = vmatpush1.bf16.msra.mxu0 0
          %1277 = vmatprep.subr.bf16.mxu0 0
          %1278 = vmatpush1.bf16.msra.mxu0 0
          %1279 = vmatprep.subr.bf16.mxu0 0
          %1280 = vmatpush1.bf16.msra.mxu0 0
          %1281 = vmatprep.subr.bf16.mxu0 0
          %1282 = vmatpush1.bf16.msra.mxu0 0
          %1283 = vmatprep.subr.bf16.mxu0 0
          %1284 = vmatpush1.bf16.msra.mxu0 0
          %1285 = vmatprep.subr.bf16.mxu0 0
          %1286 = vmatpush1.bf16.msra.mxu0 0
          %1287 = vmatprep.mubr.bf16.mxu0 0
          %1288 = vmatmul.mubr.bf16.gmra.mrb[0].mxu0 %v1253
          %v1289 = vpop.f32.mrb[0].mxu0
          %v1290 = vadd.f32 0.0, %v1289
          %v1291 = vpop.f32.mrb[0].mxu0
          %v1292 = vpop.f32.mrb[0].mxu0
          %v1293 = vpop.f32.mrb[0].mxu0
          %1294 = vdwg.mxu0
          %v1296 = vsel %vm846, %v1161, 0
          %1298 = vmatprep.subr.bf16.mxu0 0
          %1299 = vmatpush1.bf16.msra.mxu0 %v1167
          %1300 = vmatprep.subr.bf16.mxu0 0
          %1301 = vmatpush1.bf16.msra.mxu0 0
          %1302 = vmatprep.subr.bf16.mxu0 0
          %1303 = vmatpush1.bf16.msra.mxu0 0
          %1304 = vmatprep.subr.bf16.mxu0 0
          %1305 = vmatpush1.bf16.msra.mxu0 0
          %1306 = vmatprep.subr.bf16.mxu0 0
          %1307 = vmatpush1.bf16.msra.mxu0 0
          %1308 = vmatprep.subr.bf16.mxu0 0
          %1309 = vmatpush1.bf16.msra.mxu0 0
          %1310 = vmatprep.subr.bf16.mxu0 0
          %1311 = vmatpush1.bf16.msra.mxu0 0
          %1312 = vmatprep.subr.bf16.mxu0 0
          %1313 = vmatpush1.bf16.msra.mxu0 0
          %1314 = vmatprep.subr.bf16.mxu0 0
          %1315 = vmatpush1.bf16.msra.mxu0 0
          %1316 = vmatprep.subr.bf16.mxu0 0
          %1317 = vmatpush1.bf16.msra.mxu0 0
          %1318 = vmatprep.subr.bf16.mxu0 0
          %1319 = vmatpush1.bf16.msra.mxu0 0
          %1320 = vmatprep.subr.bf16.mxu0 0
          %1321 = vmatpush1.bf16.msra.mxu0 0
          %1322 = vmatprep.subr.bf16.mxu0 0
          %1323 = vmatpush1.bf16.msra.mxu0 0
          %1324 = vmatprep.subr.bf16.mxu0 0
          %1325 = vmatpush1.bf16.msra.mxu0 0
          %1326 = vmatprep.subr.bf16.mxu0 0
          %1327 = vmatpush1.bf16.msra.mxu0 0
          %1328 = vmatprep.subr.bf16.mxu0 0
          %1329 = vmatpush1.bf16.msra.mxu0 0
          %1330 = vmatprep.mubr.bf16.mxu0 0
          %1331 = vmatmul.mubr.bf16.gmra.mrb[0].mxu0 %v1296
          %v1332 = vpop.f32.mrb[0].mxu0
          %v1333 = vadd.f32 0.0, %v1332
          %v1334 = vpop.f32.mrb[0].mxu0
          %v1335 = vpop.f32.mrb[0].mxu0
          %v1336 = vpop.f32.mrb[0].mxu0
          %1337 = vdwg.mxu0
          %v1338 = vadd.f32 %v1154, %v1204
          %v1339 = vadd.f32 %v1155, %v1247
          %v1340 = vadd.f32 %v1156, %v1290
          %v1341 = vadd.f32 %v1157, %v1333
          %1342 = vst.msk [vmem:[#allocation5] sm:$0xff] %vm846, %v1338
          %1343 = vst.msk [vmem:[#allocation5 + $0x8] sm:$0xff] %vm846, %v1339
          %1344 = vst.msk [vmem:[#allocation5 + $0x10] sm:$0xff] %vm846, %v1340
          %1345 = vst.msk [vmem:[#allocation5 + $0x18] sm:$0xff] %vm846, %v1341
          %1346 = vst.msk [vmem:[#allocation3] sm:$0xff] %vm1125, %v1053
          %1347 = vst.msk [vmem:[#allocation3 + $0x8] sm:$0xff] %vm1125, %v1054
          %1348 = vst.msk [vmem:[#allocation3 + $0x10] sm:$0xff] %vm1125, %v1055
          %1349 = vst.msk [vmem:[#allocation3 + $0x18] sm:$0xff] %vm1125, %v1056
        $region68: #{tpu_custom_call.1} parent=59 // pred_fallthru
          _
        // Predicated region
        $region69: #{tpu_custom_call.1} parent=59 // pred_check
          %p1350 = pneg %p416
        $region70: #{tpu_custom_call.1} parent=59 // pred_check_branch
          %1352 = sbr.rel (%p1350) target = $region72
        $region71: #{tpu_custom_call.1} parent=59 // pred_region
          %v1353 = vld [vmem:[#allocation5] sm:$0xff]
          %v1354 = vld [vmem:[#allocation5 + $0x8] sm:$0xff]
          %v1355 = vld [vmem:[#allocation5 + $0x10] sm:$0xff]
          %v1356 = vld [vmem:[#allocation5 + $0x18] sm:$0xff]
          %v1357 = vld [vmem:[#allocation4] sm:$0xff]
          %v1358 = vld [vmem:[#allocation4 + $0x8] sm:$0xff]
          %v1359 = vld [vmem:[#allocation4 + $0x10] sm:$0xff]
          %v1360 = vld [vmem:[#allocation4 + $0x18] sm:$0xff]
          %v1361 = vrcp.pop %v1357
          %v1362 = vrcp.pop %v1358
          %v1363 = vrcp.pop %v1359
          %v1364 = vrcp.pop %v1360
          %1366 = vset.pattern.permute.xlu0 0
          %1367 = vperm.xlu0 %1366, %v1361
          %v1368 = vpop.permute.xlu0 %1367
          %1371 = vset.pattern.permute.xlu0 0
          %1372 = vperm.xlu0 %1371, %v1362
          %v1373 = vpop.permute.xlu0 %1372
          %1376 = vset.pattern.permute.xlu0 0
          %1377 = vperm.xlu0 %1376, %v1363
          %v1378 = vpop.permute.xlu0 %1377
          %1381 = vset.pattern.permute.xlu0 0
          %1382 = vperm.xlu0 %1381, %v1364
          %v1383 = vpop.permute.xlu0 %1382
          %v1385 = vmul.f32 %v1353, %v1368
          %v1386 = vmul.f32 %v1354, %v1373
          %v1387 = vmul.f32 %v1355, %v1378
          %v1388 = vmul.f32 %v1356, %v1383
          %v1389 = vpack.c.bf16 %v1385, %v1385
          %v1390 = vpack.c.bf16 %v1386, %v1386
          %v1391 = vpack.c.bf16 %v1387, %v1387
          %v1392 = vpack.c.bf16 %v1388, %v1388
          %v1393 = vld [vmem:[%s8] sm:$0xf]
          %v1394 = vld [vmem:[%s8 + $0x4] sm:$0xf]
          %v1395 = vld [vmem:[%s8 + $0x8] sm:$0xf]
          %v1396 = vld [vmem:[%s8 + $0xc] sm:$0xf]
          %vm1397 = vcmask 64512
          %v1399 = vsel %vm1397, %v1389, 0
          %vm1401 = vcmask 1043456
          %v1403 = vsel %vm1401, %v1393, 0
          %1405 = vmatprep.subr.bf16.mxu0 0
          %1406 = vmatpush1.bf16.msra.mxu0 %v1403
          %1407 = vmatprep.subr.bf16.mxu0 0
          %1408 = vmatpush1.bf16.msra.mxu0 0
          %1409 = vmatprep.subr.bf16.mxu0 0
          %1410 = vmatpush1.bf16.msra.mxu0 0
          %1411 = vmatprep.subr.bf16.mxu0 0
          %1412 = vmatpush1.bf16.msra.mxu0 0
          %1413 = vmatprep.subr.bf16.mxu0 0
          %1414 = vmatpush1.bf16.msra.mxu0 0
          %1415 = vmatprep.subr.bf16.mxu0 0
          %1416 = vmatpush1.bf16.msra.mxu0 0
          %1417 = vmatprep.subr.bf16.mxu0 0
          %1418 = vmatpush1.bf16.msra.mxu0 0
          %1419 = vmatprep.subr.bf16.mxu0 0
          %1420 = vmatpush1.bf16.msra.mxu0 0
          %1421 = vmatprep.subr.bf16.mxu0 0
          %1422 = vmatpush1.bf16.msra.mxu0 0
          %1423 = vmatprep.subr.bf16.mxu0 0
          %1424 = vmatpush1.bf16.msra.mxu0 0
          %1425 = vmatprep.subr.bf16.mxu0 0
          %1426 = vmatpush1.bf16.msra.mxu0 0
          %1427 = vmatprep.subr.bf16.mxu0 0
          %1428 = vmatpush1.bf16.msra.mxu0 0
          %1429 = vmatprep.subr.bf16.mxu0 0
          %1430 = vmatpush1.bf16.msra.mxu0 0
          %1431 = vmatprep.subr.bf16.mxu0 0
          %1432 = vmatpush1.bf16.msra.mxu0 0
          %1433 = vmatprep.subr.bf16.mxu0 0
          %1434 = vmatpush1.bf16.msra.mxu0 0
          %1435 = vmatprep.subr.bf16.mxu0 0
          %1436 = vmatpush1.bf16.msra.mxu0 0
          %1437 = vmatprep.mubr.bf16.mxu0 0
          %1438 = vmatmul.mubr.bf16.gmra.mrb[0].mxu0 %v1399
          %v1439 = vpop.f32.mrb[0].mxu0
          %v1440 = vadd.f32 0.0, %v1439
          %v1441 = vpop.f32.mrb[0].mxu0
          %v1442 = vpop.f32.mrb[0].mxu0
          %v1443 = vpop.f32.mrb[0].mxu0
          %1444 = vdwg.mxu0
          %v1446 = vsel %vm1397, %v1390, 0
          %v1449 = vsel %vm1401, %v1394, 0
          %1451 = vmatprep.subr.bf16.mxu0 0
          %1452 = vmatpush1.bf16.msra.mxu0 %v1449
          %1453 = vmatprep.subr.bf16.mxu0 0
          %1454 = vmatpush1.bf16.msra.mxu0 0
          %1455 = vmatprep.subr.bf16.mxu0 0
          %1456 = vmatpush1.bf16.msra.mxu0 0
          %1457 = vmatprep.subr.bf16.mxu0 0
          %1458 = vmatpush1.bf16.msra.mxu0 0
          %1459 = vmatprep.subr.bf16.mxu0 0
          %1460 = vmatpush1.bf16.msra.mxu0 0
          %1461 = vmatprep.subr.bf16.mxu0 0
          %1462 = vmatpush1.bf16.msra.mxu0 0
          %1463 = vmatprep.subr.bf16.mxu0 0
          %1464 = vmatpush1.bf16.msra.mxu0 0
          %1465 = vmatprep.subr.bf16.mxu0 0
          %1466 = vmatpush1.bf16.msra.mxu0 0
          %1467 = vmatprep.subr.bf16.mxu0 0
          %1468 = vmatpush1.bf16.msra.mxu0 0
          %1469 = vmatprep.subr.bf16.mxu0 0
          %1470 = vmatpush1.bf16.msra.mxu0 0
          %1471 = vmatprep.subr.bf16.mxu0 0
          %1472 = vmatpush1.bf16.msra.mxu0 0
          %1473 = vmatprep.subr.bf16.mxu0 0
          %1474 = vmatpush1.bf16.msra.mxu0 0
          %1475 = vmatprep.subr.bf16.mxu0 0
          %1476 = vmatpush1.bf16.msra.mxu0 0
          %1477 = vmatprep.subr.bf16.mxu0 0
          %1478 = vmatpush1.bf16.msra.mxu0 0
          %1479 = vmatprep.subr.bf16.mxu0 0
          %1480 = vmatpush1.bf16.msra.mxu0 0
          %1481 = vmatprep.subr.bf16.mxu0 0
          %1482 = vmatpush1.bf16.msra.mxu0 0
          %1483 = vmatprep.mubr.bf16.mxu0 0
          %1484 = vmatmul.mubr.bf16.gmra.mrb[0].mxu0 %v1446
          %v1485 = vpop.f32.mrb[0].mxu0
          %v1486 = vadd.f32 0.0, %v1485
          %v1487 = vpop.f32.mrb[0].mxu0
          %v1488 = vpop.f32.mrb[0].mxu0
          %v1489 = vpop.f32.mrb[0].mxu0
          %1490 = vdwg.mxu0
          %v1492 = vsel %vm1397, %v1391, 0
          %v1495 = vsel %vm1401, %v1395, 0
          %1497 = vmatprep.subr.bf16.mxu0 0
          %1498 = vmatpush1.bf16.msra.mxu0 %v1495
          %1499 = vmatprep.subr.bf16.mxu0 0
          %1500 = vmatpush1.bf16.msra.mxu0 0
          %1501 = vmatprep.subr.bf16.mxu0 0
          %1502 = vmatpush1.bf16.msra.mxu0 0
          %1503 = vmatprep.subr.bf16.mxu0 0
          %1504 = vmatpush1.bf16.msra.mxu0 0
          %1505 = vmatprep.subr.bf16.mxu0 0
          %1506 = vmatpush1.bf16.msra.mxu0 0
          %1507 = vmatprep.subr.bf16.mxu0 0
          %1508 = vmatpush1.bf16.msra.mxu0 0
          %1509 = vmatprep.subr.bf16.mxu0 0
          %1510 = vmatpush1.bf16.msra.mxu0 0
          %1511 = vmatprep.subr.bf16.mxu0 0
          %1512 = vmatpush1.bf16.msra.mxu0 0
          %1513 = vmatprep.subr.bf16.mxu0 0
          %1514 = vmatpush1.bf16.msra.mxu0 0
          %1515 = vmatprep.subr.bf16.mxu0 0
          %1516 = vmatpush1.bf16.msra.mxu0 0
          %1517 = vmatprep.subr.bf16.mxu0 0
          %1518 = vmatpush1.bf16.msra.mxu0 0
          %1519 = vmatprep.subr.bf16.mxu0 0
          %1520 = vmatpush1.bf16.msra.mxu0 0
          %1521 = vmatprep.subr.bf16.mxu0 0
          %1522 = vmatpush1.bf16.msra.mxu0 0
          %1523 = vmatprep.subr.bf16.mxu0 0
          %1524 = vmatpush1.bf16.msra.mxu0 0
          %1525 = vmatprep.subr.bf16.mxu0 0
          %1526 = vmatpush1.bf16.msra.mxu0 0
          %1527 = vmatprep.subr.bf16.mxu0 0
          %1528 = vmatpush1.bf16.msra.mxu0 0
          %1529 = vmatprep.mubr.bf16.mxu0 0
          %1530 = vmatmul.mubr.bf16.gmra.mrb[0].mxu0 %v1492
          %v1531 = vpop.f32.mrb[0].mxu0
          %v1532 = vadd.f32 0.0, %v1531
          %v1533 = vpop.f32.mrb[0].mxu0
          %v1534 = vpop.f32.mrb[0].mxu0
          %v1535 = vpop.f32.mrb[0].mxu0
          %1536 = vdwg.mxu0
          %v1538 = vsel %vm1397, %v1392, 0
          %v1541 = vsel %vm1401, %v1396, 0
          %1543 = vmatprep.subr.bf16.mxu0 0
          %1544 = vmatpush1.bf16.msra.mxu0 %v1541
          %1545 = vmatprep.subr.bf16.mxu0 0
          %1546 = vmatpush1.bf16.msra.mxu0 0
          %1547 = vmatprep.subr.bf16.mxu0 0
          %1548 = vmatpush1.bf16.msra.mxu0 0
          %1549 = vmatprep.subr.bf16.mxu0 0
          %1550 = vmatpush1.bf16.msra.mxu0 0
          %1551 = vmatprep.subr.bf16.mxu0 0
          %1552 = vmatpush1.bf16.msra.mxu0 0
          %1553 = vmatprep.subr.bf16.mxu0 0
          %1554 = vmatpush1.bf16.msra.mxu0 0
          %1555 = vmatprep.subr.bf16.mxu0 0
          %1556 = vmatpush1.bf16.msra.mxu0 0
          %1557 = vmatprep.subr.bf16.mxu0 0
          %1558 = vmatpush1.bf16.msra.mxu0 0
          %1559 = vmatprep.subr.bf16.mxu0 0
          %1560 = vmatpush1.bf16.msra.mxu0 0
          %1561 = vmatprep.subr.bf16.mxu0 0
          %1562 = vmatpush1.bf16.msra.mxu0 0
          %1563 = vmatprep.subr.bf16.mxu0 0
          %1564 = vmatpush1.bf16.msra.mxu0 0
          %1565 = vmatprep.subr.bf16.mxu0 0
          %1566 = vmatpush1.bf16.msra.mxu0 0
          %1567 = vmatprep.subr.bf16.mxu0 0
          %1568 = vmatpush1.bf16.msra.mxu0 0
          %1569 = vmatprep.subr.bf16.mxu0 0
          %1570 = vmatpush1.bf16.msra.mxu0 0
          %1571 = vmatprep.subr.bf16.mxu0 0
          %1572 = vmatpush1.bf16.msra.mxu0 0
          %1573 = vmatprep.subr.bf16.mxu0 0
          %1574 = vmatpush1.bf16.msra.mxu0 0
          %1575 = vmatprep.mubr.bf16.mxu0 0
          %1576 = vmatmul.mubr.bf16.gmra.mrb[0].mxu0 %v1538
          %v1577 = vpop.f32.mrb[0].mxu0
          %v1578 = vadd.f32 0.0, %v1577
          %v1579 = vpop.f32.mrb[0].mxu0
          %v1580 = vpop.f32.mrb[0].mxu0
          %v1581 = vpop.f32.mrb[0].mxu0
          %1582 = vdwg.mxu0
          %vm1583 = vcmask 261120
          %v1584 = vsel %vm1583, %v1440, 0.0
          %v1585 = vsel %vm1583, %v1486, 0.0
          %v1586 = vadd.f32 %v1584, %v1585
          %v1587 = vsel %vm1583, %v1532, 0.0
          %v1588 = vadd.f32 %v1586, %v1587
          %v1589 = vsel %vm1583, %v1578, 0.0
          %v1590 = vadd.f32 %v1588, %v1589
          %v1591 = vld [vmem:[%s9] sm:$0x1]
          %v1593 = vlaneseq
          %v1594 = vshrl.u32 %v1593, 7
          %v1595 = vsub.s32 0, %v1594
          %v1596 = vrot.slane %v1591, %v1595
          %v1598 = vadd.f32 %v1590, %v1596
          %1599 = vst.msk [vmem:[%s400] sm:$0xff] %vm1583, %v1598
        $region72: #{tpu_custom_call.1} parent=59 // pred_fallthru
          _
        %s1600 = sand.u32 %s277, 1
        %s1601 = scalar_lea.sflag [#allocation7], %s1600
        %s1602 = sand.u32 %s277, 1
        %s1603 = smul.addr %s1602, 8
        %s1604 = scalar_lea.vmem [#allocation6], %s1603
        // Predicated region
        $region73: #{tpu_custom_call.1} parent=59 // pred_check
          %p1605 = pneg %p287
        $region74: #{tpu_custom_call.1} parent=59 // pred_check_branch
          %1607 = sbr.rel (%p1605) target = $region76
        $region75: #{tpu_custom_call.1} parent=59 // pred_region
          %s1609 = ssub.s32 128, 128
          %1610 = vsyncadd %s1601, %s1609
          %s1611 = sadd.s32 %s30, %s29
          %s1612 = smul.addr %s1611, 128
          %s1613 = scalar_lea.hbm %s10, %s1612
          %s1615 = sshll.u32 %s1604, 4
          %s1616 = int_to_ptr.vmem [resolvable:$true] %s1615
          %1618 = dma.vmem_to_hbm [thread:$0]  %s1616, 128, %s1613, %s1601
        $region76: #{tpu_custom_call.1} parent=59 // pred_fallthru
          _
      $region60: #{tpu_custom_call.1} parent=5 // pred_fallthru
        _
      %p1619 = scmp.le.s32.totalorder 2, %s19
      // Predicated region
      $region77: #{tpu_custom_call.1} parent=5 // pred_check
        %p1620 = pneg %p1619
      $region78: #{tpu_custom_call.1} parent=5 // pred_check_branch
        %1622 = sbr.rel (%p1620) target = $region80
      $region79: #{tpu_custom_call.1} parent=5 // pred_region
        %s1623 = ssub.s32 %s19, 2
        // Predicated region
        $region81: #{tpu_custom_call.1} parent=79 // pred_check
          %p1624 = pneg %p293
        $region82: #{tpu_custom_call.1} parent=79 // pred_check_branch
          %1626 = sbr.rel (%p1624) target = $region84
        $region83: #{tpu_custom_call.1} parent=79 // pred_region
          %s1627 = sand.u32 %s278, 1
          %s1628 = scalar_lea.sflag [#allocation7], %s1627
          %s1629 = sand.u32 %s278, 1
          %s1630 = smul.addr %s1629, 8
          %s1631 = scalar_lea.vmem [#allocation6], %s1630
          %1632 = dma.done %s1628, 128
        $region84: #{tpu_custom_call.1} parent=79 // pred_fallthru
          _
      $region80: #{tpu_custom_call.1} parent=5 // pred_fallthru
        _
    $region6: #{tpu_custom_call.1} parent=1 // loop_footer
      %s23 = sadd.s32 1, %s19
    $region7: #{tpu_custom_call.1} parent=1 // loop_footer_branch
      %18 = sbr.rel target = $region3
    $region8: #{tpu_custom_call.1} parent=1 // loop_exit
      _
    %1633 = vsyncpa [#allocation7], 1
    %s1634 = scalar_lea.sflag [#allocation7], 1
    %1635 = vsyncpa %s1634, 1

</llo_original>
